<compile_context>
chip_gen: v7x
topology: tpu7x:2x2x1
jax: 0.10.0
libtpu: 0.0.40
codegen_flags: <defaults>
</compile_context>

<pallas_src>
import functools
import math

import jax
import jax.numpy as jnp
import numpy as np
from jax.experimental import pallas as pl
from jax.experimental.pallas import tpu as pltpu


# ----------------------------- in-kernel helpers ----------------------------

def _layernorm(x, g, b, eps=1e-6):
    # torch nn.LayerNorm(emb, eps=1e-06)
    mean = jnp.mean(x, axis=-1, keepdims=True)
    xc = x - mean
    var = jnp.mean(xc * xc, axis=-1, keepdims=True)
    return xc * jax.lax.rsqrt(var + eps) * g + b


_ERF_A = (0.254829592, -0.284496736, 1.421413741, -1.453152027, 1.061405429)
_ERF_P = 0.3275911


def _erf_approx(x):
    # TODO(synk): lax.erf Mosaic lowering not guaranteed; use Abramowitz&Stegun
    # 7.1.26 rational approximation (max abs err 1.5e-7, ~f32 noise for GELU).
    ax = jnp.abs(x)
    t = 1.0 / (1.0 + _ERF_P * ax)
    a1, a2, a3, a4, a5 = _ERF_A
    poly = ((((a5 * t + a4) * t + a3) * t + a2) * t + a1) * t
    y = 1.0 - poly * jnp.exp(-(ax * ax))
    return jnp.where(x >= 0.0, y, -y)


def _gelu_erf(x):
    # torch nn.GELU() default (exact erf form)
    return 0.5 * x * (1.0 + _erf_approx(x * 0.7071067811865476))


# ------------------------------- Pallas kernels ------------------------------

def _patch_linear_kernel(x_ref, w_ref, b_ref, o_ref):
    # (1, T, K) @ (K, N) + (1, N)
    o_ref[0] = (jnp.dot(x_ref[0], w_ref[...], preferred_element_type=jnp.float32)
                + b_ref[...])


def patch_merging(x, p, df):
    """PatchMerging: nn.Unfold(df, df) + Linear; NCHW in, NHWC out."""
    B, C, H, W = x.shape
    H_, W_ = H // df, W // df
    K = C * df * df
    emb = p["w"].shape[1]
    # nn.Unfold feature ordering: index = c*df*df + kh*df + kw.  This NCHW
    # shuffle is XLA glue (once per stage, not expressible as a BlockSpec).
    xp = (x.reshape(B, C, H_, df, W_, df)
            .transpose(0, 2, 4, 1, 3, 5)
            .reshape(B, H_ * W_, K))
    y = pl.pallas_call(
        _patch_linear_kernel,
        out_shape=jax.ShapeDtypeStruct((B, H_ * W_, emb), jnp.float32),
        grid=(B,),
        in_specs=[pl.BlockSpec((1, H_ * W_, K), lambda b: (b, 0, 0)),
                  pl.BlockSpec((K, emb), lambda b: (0, 0)),
                  pl.BlockSpec((1, emb), lambda b: (0, 0))],
        out_specs=pl.BlockSpec((1, H_ * W_, emb), lambda b: (b, 0, 0)),
        compiler_params=pltpu.CompilerParams(
            dimension_semantics=("parallel",)),
    )(xp, p["w"], p["b"])
    return y.reshape(B, H_, W_, emb)


def _encoder_block_kernel(x_ref, qkvw_ref, qkvb_ref, bias_ref, lng_ref, lnb_ref,
                          w1_ref, b1_ref, w2_ref, b2_ref, o_ref,
                          *, num_heads, window_size):
    """Whole SwinEncoderBlock for one batch element, fully VMEM-resident.

    x_ref: (1, nwin*L, C) tokens in window-major order (wh, ww, ws1, ws2).
    """
    L = window_size * window_size
    T, C = x_ref.shape[1], x_ref.shape[2]
    nwin = T // L
    hd = C // num_heads
    scale = 1.0 / math.sqrt(hd)

    x = x_ref[0]                                               # (T, C)

    # ---------------- windowed multi-head self-attention -------------------
    # qkv as three C-wide matmuls: the 3C-wide intermediate never exists, so
    # nothing sub-128-lane is ever stored to HBM and weights stay in VMEM.
    q = jnp.dot(x, qkvw_ref[0], preferred_element_type=jnp.float32) + qkvb_ref[0]
    k = jnp.dot(x, qkvw_ref[1], preferred_element_type=jnp.float32) + qkvb_ref[1]
    v = jnp.dot(x, qkvw_ref[2], preferred_element_type=jnp.float32) + qkvb_ref[2]
    qw = q.reshape(nwin, L, C)     # tile-aligned split of the token axis
    kw = k.reshape(nwin, L, C)
    vw = v.reshape(nwin, L, C)
    bias = bias_ref[...]           # (nwin, L, L): rel-pos bias (+ shift masks)

    head_outs = []
    for h in range(num_heads):     # static unroll; all windows batched per einsum
        sl = slice(h * hd, (h + 1) * hd)
        qh, kh, vh = qw[:, :, sl], kw[:, :, sl], vw[:, :, sl]
        s = jnp.einsum("wld,wmd->wlm", qh, kh,
                       preferred_element_type=jnp.float32) * scale + bias
        m = jnp.max(s, axis=-1, keepdims=True)
        p = jnp.exp(s - m)
        denom = jnp.sum(p, axis=-1, keepdims=True)
        p = p * pl.reciprocal(denom, approx=True)     # softmax (EUP reciprocal)
        # attention-prob dropout (p=0.5) is identity at inference time
        head_outs.append(jnp.einsum("wlm,wmd->wld", p, vh,
                                    preferred_element_type=jnp.float32))
    attn = jnp.concatenate(head_outs, axis=-1).reshape(T, C)   # (n H) channels

    # --------- residual + post-norm (same LN params reused, per module) ----
    g, b = lng_ref[...], lnb_ref[...]
    x1 = x + _layernorm(attn, g, b)

    # --------- MLP: Linear -> GELU(erf) -> Linear, hidden stays in VMEM ----
    hdn = jnp.dot(x1, w1_ref[...], preferred_element_type=jnp.float32) + b1_ref[...]
    hdn = _gelu_erf(hdn)
    y = jnp.dot(hdn, w2_ref[...], preferred_element_type=jnp.float32) + b2_ref[...]

    o_ref[0] = x1 + _layernorm(y, g, b)


def _fused_block_call(xw, p, *, num_heads, window_size):
    B, T, C = xw.shape
    L = window_size * window_size
    nwin = T // L
    kern = functools.partial(_encoder_block_kernel,
                             num_heads=num_heads, window_size=window_size)
    return pl.pallas_call(
        kern,
        out_shape=jax.ShapeDtypeStruct((B, T, C), jnp.float32),
        grid=(B,),
        in_specs=[
            pl.BlockSpec((1, T, C), lambda b: (b, 0, 0)),       # tokens
            pl.BlockSpec((3, C, C), lambda b: (0, 0, 0)),       # Wq/Wk/Wv
            pl.BlockSpec((3, 1, C), lambda b: (0, 0, 0)),       # bq/bk/bv
            pl.BlockSpec((nwin, L, L), lambda b: (0, 0, 0)),    # attn bias (shared)
            pl.BlockSpec((1, C), lambda b: (0, 0)),             # ln gamma
            pl.BlockSpec((1, C), lambda b: (0, 0)),             # ln beta
            pl.BlockSpec((C, 4 * C), lambda b: (0, 0)),         # mlp w1
            pl.BlockSpec((1, 4 * C), lambda b: (0, 0)),         # mlp b1
            pl.BlockSpec((4 * C, C), lambda b: (0, 0)),         # mlp w2
            pl.BlockSpec((1, C), lambda b: (0, 0)),             # mlp b2
        ],
        out_specs=pl.BlockSpec((1, T, C), lambda b: (b, 0, 0)),
        compiler_params=pltpu.CompilerParams(
            dimension_semantics=("parallel",),     # v7x: one batch elem per TC
            vmem_limit_bytes=32 * 1024 * 1024,
        ),
    )(xw, p["qkv_w"], p["qkv_b"], p["bias"], p["ln_g"], p["ln_b"],
      p["mlp_w1"], p["mlp_b1"], p["mlp_w2"], p["mlp_b2"])


# -------------------------- window / shift glue (XLA) ------------------------

def _window_partition(x, ws):
    # (B, H, W, C) -> (B, nwin*ws*ws, C), token order (wh, ww, ws1, ws2)
    B, H, W, C = x.shape
    wh, ww = H // ws, W // ws
    x = x.reshape(B, wh, ws, ww, ws, C).transpose(0, 1, 3, 2, 4, 5)
    return x.reshape(B, wh * ww * ws * ws, C)


def _window_unpartition(x, ws, H, W):
    B, _, C = x.shape
    wh, ww = H // ws, W // ws
    x = x.reshape(B, wh, ww, ws, ws, C).transpose(0, 1, 3, 2, 4, 5)
    return x.reshape(B, H, W, C)


def encoder_block(x, p, *, num_heads, window_size, shifted):
    """(B, H, W, C) NHWC -> (B, H, W, C). One fused Pallas call per block."""
    B, H, W, C = x.shape
    ws = window_size
    sh = ws // 2
    # Cyclic shift commutes with all per-token ops (LN/MLP/residual), so the
    # whole block runs on the rolled tensor and is un-rolled afterwards —
    # mathematically identical to rolling only around the attention.
    xi = jnp.roll(x, shift=(-sh, -sh), axis=(1, 2)) if shifted else x
    xw = _window_partition(xi, ws)
    yw = _fused_block_call(xw, p, num_heads=num_heads, window_size=ws)
    y = _window_unpartition(yw, ws, H, W)
    return jnp.roll(y, shift=(sh, sh), axis=(1, 2)) if shifted else y


def swin_stage_forward(x, params, cfg):
    x = patch_merging(x, params["patch"], cfg["downscaling_factor"])  # NHWC
    for blk in params["blocks"]:
        x = encoder_block(x, blk["wmsa"], num_heads=cfg["num_heads"],
                          window_size=cfg["window_size"], shifted=False)
        x = encoder_block(x, blk["swmsa"], num_heads=cfg["num_heads"],
                          window_size=cfg["window_size"], shifted=True)
    return x.transpose(0, 3, 1, 2)   # -> NCHW, like out.permute(0, 3, 1, 2)


# ------------------------- bias / mask construction --------------------------

def _get_mask(ws, shift, up_down, left_right):
    mask = np.zeros((ws * ws, ws * ws), dtype=np.float32)
    if up_down:
        mask[-(shift * ws):, :-(shift * ws)] = -np.inf
        mask[:-(shift * ws), -(shift * ws):] = -np.inf
    if left_right:
        m = mask.reshape(ws, ws, ws, ws)
        m[:, -shift:, :, :-shift] = -np.inf
        m[:, :-shift, :, -shift:] = -np.inf
        mask = m.reshape(ws * ws, ws * ws)
    return mask


def _relative_pos_bias(pos_emb, ws):
    idx = np.array([[x, y] for x in range(ws) for y in range(ws)])
    rel = idx[None, :, :] - idx[:, None, :] + ws - 1  # (L, L, 2)
    pe = np.asarray(pos_emb)
    return pe[rel[:, :, 0], rel[:, :, 1]].astype(np.float32)


def make_attn_bias(pos_emb, ws, shifted, H, W):
    """Per-window additive bias (num_windows, L, L): relative-position bias,
    plus (for shifted blocks) the shift masks, replicating the exact PyTorch
    slicing semantics:
        attention_scores[:, :, -W:]    += updown_mask
        attention_scores[:, :, W-1::W] += leftright_mask
    """
    n_win = (H // ws) * (W // ws)
    bias = np.broadcast_to(
        _relative_pos_bias(pos_emb, ws), (n_win, ws * ws, ws * ws)).copy()
    if shifted:
        shift = ws // 2
        bias[-W:] += _get_mask(ws, shift, True, False)
        bias[W - 1::W] += _get_mask(ws, shift, False, True)
    return jnp.asarray(bias, dtype=jnp.float32)


# --------------------------------- parameters --------------------------------

def init_params(key, cfg, H_, W_):
    emb = cfg["embedding_dims"]
    in_dims = cfg["in_dims"]
    df = cfg["downscaling_factor"]
    ws = cfg["window_size"]
    n_pairs = cfg["num_block"] // 2

    keys = iter(jax.random.split(key, 256))

    def dense(k_in, k_out, scale=0.05):
        return (scale * jax.random.normal(next(keys), (k_in, k_out), jnp.float32),
                jnp.zeros((1, k_out), jnp.float32))

    pw, pb = dense(in_dims * df * df, emb)
    params = {"patch": {"w": pw, "b": pb}, "blocks": []}
    for _ in range(n_pairs):
        blk = {}
        for name, shifted in (("wmsa", False), ("swmsa", True)):
            qkv_w = 0.05 * jax.random.normal(next(keys), (3, emb, emb), jnp.float32)
            w1, b1 = dense(emb, 4 * emb)
            w2, b2 = dense(4 * emb, emb)
            pos = jax.random.normal(next(keys), (2 * ws - 1, 2 * ws - 1), jnp.float32)
            blk[name] = {
                "qkv_w": qkv_w,
                "qkv_b": jnp.zeros((3, 1, emb), jnp.float32),
                "mlp_w1": w1, "mlp_b1": b1,
                "mlp_w2": w2, "mlp_b2": b2,
                "ln_g": jnp.ones((1, emb), jnp.float32),
                "ln_b": jnp.zeros((1, emb), jnp.float32),
                "bias": make_attn_bias(pos, ws, shifted, H_, W_),
            }
        params["blocks"].append(blk)
    return params


# ------------------------------------ main ------------------------------------

if __name__ == "__main__":
    cfg = dict(in_dims=4, downscaling_factor=2, num_block=2,
               embedding_dims=32, num_heads=4, window_size=4, p_dropout=0.5)
    B, H, W = 2, 16, 16

    key = jax.random.PRNGKey(0)
    kx, kp = jax.random.split(key)
    x = jax.random.normal(kx, (B, cfg["in_dims"], H, W), jnp.float32)

    H_, W_ = H // cfg["downscaling_factor"], W // cfg["downscaling_factor"]
    params = init_params(kp, cfg, H_, W_)

    fwd = jax.jit(lambda xx, pp: swin_stage_forward(xx, pp, cfg))
    out = jax.block_until_ready(fwd(x, params))

    assert out.shape == (B, cfg["embedding_dims"], H_, W_), out.shape
    assert bool(jnp.all(jnp.isfinite(out)))
    print("KERNEL_OK")
</pallas_src>

<mosaic_0001>
module attributes {stable_mosaic.version = 11 : i64} {
  func.func @_patch_linear_kernel(%arg0: i32, %arg1: memref<1x64x16xf32, #tpu.memory_space<vmem>>, %arg2: memref<16x32xf32, #tpu.memory_space<vmem>>, %arg3: memref<1x32xf32, #tpu.memory_space<vmem>>, %arg4: memref<1x64x32xf32, #tpu.memory_space<vmem>>) attributes {dimension_semantics = [#tpu.dimension_semantics<parallel>], iteration_bounds = array<i64: 2>, scalar_prefetch = 0 : i64, scratch_operands = 0 : i64, tpu.core_type = #tpu.core_type<tc>, window_params = [{transform_indices = @transform_0, window_bounds = array<i64: 1, 64, 16>}, {pipeline_mode = #tpu.pipeline_mode<synchronous>, transform_indices = @transform_1, window_bounds = array<i64: 16, 32>}, {pipeline_mode = #tpu.pipeline_mode<synchronous>, transform_indices = @transform_2, window_bounds = array<i64: 1, 32>}, {transform_indices = @transform_3, window_bounds = array<i64: 1, 64, 32>}]} {
    %c0 = arith.constant 0 : index
    %c0_0 = arith.constant 0 : index
    %c0_1 = arith.constant 0 : index
    %0 = vector.load %arg1[%c0, %c0_0, %c0_1] : memref<1x64x16xf32, #tpu.memory_space<vmem>>, vector<1x64x16xf32>
    %1 = vector.shape_cast %0 : vector<1x64x16xf32> to vector<64x16xf32>
    %c0_2 = arith.constant 0 : index
    %c0_3 = arith.constant 0 : index
    %2 = vector.load %arg2[%c0_2, %c0_3] : memref<16x32xf32, #tpu.memory_space<vmem>>, vector<16x32xf32>
    %cst = arith.constant dense<0.000000e+00> : vector<64x32xf32>
    %3 = tpu.matmul %1, %2, %cst {dimension_numbers = #tpu.dot_dimension_numbers<[1], [0], [0], [1], [0, 0, 1, 1], [], []>} : vector<64x16xf32>, vector<16x32xf32>, vector<64x32xf32> -> vector<64x32xf32>
    %c0_4 = arith.constant 0 : index
    %c0_5 = arith.constant 0 : index
    %4 = vector.load %arg3[%c0_4, %c0_5] : memref<1x32xf32, #tpu.memory_space<vmem>>, vector<1x32xf32>
    %5 = vector.broadcast %4 : vector<1x32xf32> to vector<64x32xf32>
    %6 = arith.addf %3, %5 : vector<64x32xf32>
    %c0_6 = arith.constant 0 : index
    %c0_7 = arith.constant 0 : index
    %c0_8 = arith.constant 0 : index
    %7 = vector.load %arg4[%c0_6, %c0_7, %c0_8] : memref<1x64x32xf32, #tpu.memory_space<vmem>>, vector<1x64x32xf32>
    %8 = vector.shape_cast %7 : vector<1x64x32xf32> to vector<64x32xf32>
    %9 = vector.shape_cast %6 : vector<64x32xf32> to vector<1x64x32xf32>
    tpu.vector_store %arg4[%c0_6, %c0_7, %c0_8], %9 {strides = array<i32>} : memref<1x64x32xf32, #tpu.memory_space<vmem>>, vector<1x64x32xf32>,
    return
  }
  func.func @transform_0(%arg0: i32) -> (i32, i32, i32) {
    %c0_i32 = arith.constant 0 : i32
    %c0_i32_0 = arith.constant 0 : i32
    %c0_i32_1 = arith.constant 0 : i32
    return %arg0, %c0_i32, %c0_i32_0 : i32, i32, i32
  }
  func.func @transform_1(%arg0: i32) -> (i32, i32) {
    %c0_i32 = arith.constant 0 : i32
    %c0_i32_0 = arith.constant 0 : i32
    %c0_i32_1 = arith.constant 0 : i32
    return %c0_i32, %c0_i32_0 : i32, i32
  }
  func.func @transform_2(%arg0: i32) -> (i32, i32) {
    %c0_i32 = arith.constant 0 : i32
    %c0_i32_0 = arith.constant 0 : i32
    %c0_i32_1 = arith.constant 0 : i32
    return %c0_i32, %c0_i32_0 : i32, i32
  }
  func.func @transform_3(%arg0: i32) -> (i32, i32, i32) {
    %c0_i32 = arith.constant 0 : i32
    %c0_i32_0 = arith.constant 0 : i32
    %c0_i32_1 = arith.constant 0 : i32
    return %arg0, %c0_i32, %c0_i32_0 : i32, i32, i32
  }
}

module attributes {stable_mosaic.version = 11 : i64} {
  func.func @_encoder_block_kernel(%arg0: i32, %arg1: memref<1x64x32xf32, #tpu.memory_space<vmem>>, %arg2: memref<3x32x32xf32, #tpu.memory_space<vmem>>, %arg3: memref<3x1x32xf32, #tpu.memory_space<vmem>>, %arg4: memref<4x16x16xf32, #tpu.memory_space<vmem>>, %arg5: memref<1x32xf32, #tpu.memory_space<vmem>>, %arg6: memref<1x32xf32, #tpu.memory_space<vmem>>, %arg7: memref<32x128xf32, #tpu.memory_space<vmem>>, %arg8: memref<1x128xf32, #tpu.memory_space<vmem>>, %arg9: memref<128x32xf32, #tpu.memory_space<vmem>>, %arg10: memref<1x32xf32, #tpu.memory_space<vmem>>, %arg11: memref<1x64x32xf32, #tpu.memory_space<vmem>>) attributes {dimension_semantics = [#tpu.dimension_semantics<parallel>], iteration_bounds = array<i64: 2>, scalar_prefetch = 0 : i64, scratch_operands = 0 : i64, tpu.core_type = #tpu.core_type<tc>, window_params = [{transform_indices = @transform_0, window_bounds = array<i64: 1, 64, 32>}, {pipeline_mode = #tpu.pipeline_mode<synchronous>, transform_indices = @transform_1, window_bounds = array<i64: 3, 32, 32>}, {pipeline_mode = #tpu.pipeline_mode<synchronous>, transform_indices = @transform_2, window_bounds = array<i64: 3, 1, 32>}, {pipeline_mode = #tpu.pipeline_mode<synchronous>, transform_indices = @transform_3, window_bounds = array<i64: 4, 16, 16>}, {pipeline_mode = #tpu.pipeline_mode<synchronous>, transform_indices = @transform_4, window_bounds = array<i64: 1, 32>}, {pipeline_mode = #tpu.pipeline_mode<synchronous>, transform_indices = @transform_5, window_bounds = array<i64: 1, 32>}, {pipeline_mode = #tpu.pipeline_mode<synchronous>, transform_indices = @transform_6, window_bounds = array<i64: 32, 128>}, {pipeline_mode = #tpu.pipeline_mode<synchronous>, transform_indices = @transform_7, window_bounds = array<i64: 1, 128>}, {pipeline_mode = #tpu.pipeline_mode<synchronous>, transform_indices = @transform_8, window_bounds = array<i64: 128, 32>}, {pipeline_mode = #tpu.pipeline_mode<synchronous>, transform_indices = @transform_9, window_bounds = array<i64: 1, 32>}, {transform_indices = @transform_10, window_bounds = array<i64: 1, 64, 32>}]} {
    %c0 = arith.constant 0 : index
    %c0_0 = arith.constant 0 : index
    %c0_1 = arith.constant 0 : index
    %0 = vector.load %arg1[%c0, %c0_0, %c0_1] : memref<1x64x32xf32, #tpu.memory_space<vmem>>, vector<1x64x32xf32>
    %1 = vector.shape_cast %0 : vector<1x64x32xf32> to vector<64x32xf32>
    %c0_2 = arith.constant 0 : index
    %c0_3 = arith.constant 0 : index
    %c0_4 = arith.constant 0 : index
    %2 = vector.load %arg2[%c0_2, %c0_3, %c0_4] : memref<3x32x32xf32, #tpu.memory_space<vmem>>, vector<1x32x32xf32>
    %3 = vector.shape_cast %2 : vector<1x32x32xf32> to vector<32x32xf32>
    %cst = arith.constant dense<0.000000e+00> : vector<64x32xf32>
    %4 = tpu.matmul %1, %3, %cst {dimension_numbers = #tpu.dot_dimension_numbers<[1], [0], [0], [1], [0, 0, 1, 1], [], []>} : vector<64x32xf32>, vector<32x32xf32>, vector<64x32xf32> -> vector<64x32xf32>
    %c0_5 = arith.constant 0 : index
    %c0_6 = arith.constant 0 : index
    %c0_7 = arith.constant 0 : index
    %5 = vector.load %arg3[%c0_5, %c0_6, %c0_7] : memref<3x1x32xf32, #tpu.memory_space<vmem>>, vector<1x1x32xf32>
    %6 = vector.shape_cast %5 : vector<1x1x32xf32> to vector<1x32xf32>
    %7 = vector.broadcast %6 : vector<1x32xf32> to vector<64x32xf32>
    %8 = arith.addf %4, %7 : vector<64x32xf32>
    %c1 = arith.constant 1 : index
    %c0_8 = arith.constant 0 : index
    %c0_9 = arith.constant 0 : index
    %9 = vector.load %arg2[%c1, %c0_8, %c0_9] : memref<3x32x32xf32, #tpu.memory_space<vmem>>, vector<1x32x32xf32>
    %10 = vector.shape_cast %9 : vector<1x32x32xf32> to vector<32x32xf32>
    %cst_10 = arith.constant dense<0.000000e+00> : vector<64x32xf32>
    %11 = tpu.matmul %1, %10, %cst_10 {dimension_numbers = #tpu.dot_dimension_numbers<[1], [0], [0], [1], [0, 0, 1, 1], [], []>} : vector<64x32xf32>, vector<32x32xf32>, vector<64x32xf32> -> vector<64x32xf32>
    %c1_11 = arith.constant 1 : index
    %c0_12 = arith.constant 0 : index
    %c0_13 = arith.constant 0 : index
    %12 = vector.load %arg3[%c1_11, %c0_12, %c0_13] : memref<3x1x32xf32, #tpu.memory_space<vmem>>, vector<1x1x32xf32>
    %13 = vector.shape_cast %12 : vector<1x1x32xf32> to vector<1x32xf32>
    %14 = vector.broadcast %13 : vector<1x32xf32> to vector<64x32xf32>
    %15 = arith.addf %11, %14 : vector<64x32xf32>
    %c2 = arith.constant 2 : index
    %c0_14 = arith.constant 0 : index
    %c0_15 = arith.constant 0 : index
    %16 = vector.load %arg2[%c2, %c0_14, %c0_15] : memref<3x32x32xf32, #tpu.memory_space<vmem>>, vector<1x32x32xf32>
    %17 = vector.shape_cast %16 : vector<1x32x32xf32> to vector<32x32xf32>
    %cst_16 = arith.constant dense<0.000000e+00> : vector<64x32xf32>
    %18 = tpu.matmul %1, %17, %cst_16 {dimension_numbers = #tpu.dot_dimension_numbers<[1], [0], [0], [1], [0, 0, 1, 1], [], []>} : vector<64x32xf32>, vector<32x32xf32>, vector<64x32xf32> -> vector<64x32xf32>
    %c2_17 = arith.constant 2 : index
    %c0_18 = arith.constant 0 : index
    %c0_19 = arith.constant 0 : index
    %19 = vector.load %arg3[%c2_17, %c0_18, %c0_19] : memref<3x1x32xf32, #tpu.memory_space<vmem>>, vector<1x1x32xf32>
    %20 = vector.shape_cast %19 : vector<1x1x32xf32> to vector<1x32xf32>
    %21 = vector.broadcast %20 : vector<1x32xf32> to vector<64x32xf32>
    %22 = arith.addf %18, %21 : vector<64x32xf32>
    %23 = vector.shape_cast %8 : vector<64x32xf32> to vector<4x16x32xf32>
    %24 = vector.shape_cast %15 : vector<64x32xf32> to vector<4x16x32xf32>
    %25 = vector.shape_cast %22 : vector<64x32xf32> to vector<4x16x32xf32>
    %c0_20 = arith.constant 0 : index
    %c0_21 = arith.constant 0 : index
    %c0_22 = arith.constant 0 : index
    %26 = vector.load %arg4[%c0_20, %c0_21, %c0_22] : memref<4x16x16xf32, #tpu.memory_space<vmem>>, vector<4x16x16xf32>
    %27 = vector.extract_strided_slice %23 {offsets = [0, 0, 0], sizes = [4, 16, 8], strides = [1, 1, 1]} : vector<4x16x32xf32> to vector<4x16x8xf32>
    %28 = vector.extract_strided_slice %24 {offsets = [0, 0, 0], sizes = [4, 16, 8], strides = [1, 1, 1]} : vector<4x16x32xf32> to vector<4x16x8xf32>
    %29 = vector.extract_strided_slice %25 {offsets = [0, 0, 0], sizes = [4, 16, 8], strides = [1, 1, 1]} : vector<4x16x32xf32> to vector<4x16x8xf32>
    "tpu.trace_start"() <{level = 10 : i32, message = "wld,wmd->wlm"}> : () -> ()
    %cst_23 = arith.constant dense<0.000000e+00> : vector<4x16x16xf32>
    %30 = tpu.matmul %27, %28, %cst_23 {dimension_numbers = #tpu.dot_dimension_numbers<[2], [2], [1], [1], [0, 0, 0, 1, 1, 1], [0], [0]>} : vector<4x16x8xf32>, vector<4x16x8xf32>, vector<4x16x16xf32> -> vector<4x16x16xf32>
    "tpu.trace_stop"() : () -> ()
    %cst_24 = arith.constant 0.353553385 : f32
    %31 = vector.broadcast %cst_24 : f32 to vector<4x16x16xf32>
    %32 = arith.mulf %30, %31 : vector<4x16x16xf32>
    %33 = arith.addf %32, %26 : vector<4x16x16xf32>
    %cst_25 = arith.constant dense<0xFF800000> : vector<4x16xf32>
    %34 = vector.multi_reduction <maximumf>, %33, %cst_25 [2] : vector<4x16x16xf32> to vector<4x16xf32>
    %35 = vector.shape_cast %34 : vector<4x16xf32> to vector<4x16x1xf32>
    %36 = vector.broadcast %35 : vector<4x16x1xf32> to vector<4x16x16xf32>
    %37 = arith.subf %33, %36 : vector<4x16x16xf32>
    %38 = math.exp %37 : vector<4x16x16xf32>
    %cst_26 = arith.constant dense<0.000000e+00> : vector<4x16xf32>
    %39 = vector.multi_reduction <add>, %38, %cst_26 [2] : vector<4x16x16xf32> to vector<4x16xf32>
    %40 = vector.shape_cast %39 : vector<4x16xf32> to vector<4x16x1xf32>
    %41 = tpu.reciprocal %40 {approx = true} : vector<4x16x1xf32> -> vector<4x16x1xf32>
    %42 = vector.broadcast %41 : vector<4x16x1xf32> to vector<4x16x16xf32>
    %43 = arith.mulf %38, %42 : vector<4x16x16xf32>
    "tpu.trace_start"() <{level = 10 : i32, message = "wlm,wmd->wld"}> : () -> ()
    %cst_27 = arith.constant dense<0.000000e+00> : vector<4x16x8xf32>
    %44 = tpu.matmul %43, %29, %cst_27 {dimension_numbers = #tpu.dot_dimension_numbers<[2], [1], [1], [2], [0, 0, 0, 1, 1, 2], [0], [0]>} : vector<4x16x16xf32>, vector<4x16x8xf32>, vector<4x16x8xf32> -> vector<4x16x8xf32>
    "tpu.trace_stop"() : () -> ()
    %45 = vector.extract_strided_slice %23 {offsets = [0, 0, 8], sizes = [4, 16, 8], strides = [1, 1, 1]} : vector<4x16x32xf32> to vector<4x16x8xf32>
    %46 = vector.extract_strided_slice %24 {offsets = [0, 0, 8], sizes = [4, 16, 8], strides = [1, 1, 1]} : vector<4x16x32xf32> to vector<4x16x8xf32>
    %47 = vector.extract_strided_slice %25 {offsets = [0, 0, 8], sizes = [4, 16, 8], strides = [1, 1, 1]} : vector<4x16x32xf32> to vector<4x16x8xf32>
    "tpu.trace_start"() <{level = 10 : i32, message = "wld,wmd->wlm"}> : () -> ()
    %cst_28 = arith.constant dense<0.000000e+00> : vector<4x16x16xf32>
    %48 = tpu.matmul %45, %46, %cst_28 {dimension_numbers = #tpu.dot_dimension_numbers<[2], [2], [1], [1], [0, 0, 0, 1, 1, 1], [0], [0]>} : vector<4x16x8xf32>, vector<4x16x8xf32>, vector<4x16x16xf32> -> vector<4x16x16xf32>
    "tpu.trace_stop"() : () -> ()
    %cst_29 = arith.constant 0.353553385 : f32
    %49 = vector.broadcast %cst_29 : f32 to vector<4x16x16xf32>
    %50 = arith.mulf %48, %49 : vector<4x16x16xf32>
    %51 = arith.addf %50, %26 : vector<4x16x16xf32>
    %cst_30 = arith.constant dense<0xFF800000> : vector<4x16xf32>
    %52 = vector.multi_reduction <maximumf>, %51, %cst_30 [2] : vector<4x16x16xf32> to vector<4x16xf32>
    %53 = vector.shape_cast %52 : vector<4x16xf32> to vector<4x16x1xf32>
    %54 = vector.broadcast %53 : vector<4x16x1xf32> to vector<4x16x16xf32>
    %55 = arith.subf %51, %54 : vector<4x16x16xf32>
    %56 = math.exp %55 : vector<4x16x16xf32>
    %cst_31 = arith.constant dense<0.000000e+00> : vector<4x16xf32>
    %57 = vector.multi_reduction <add>, %56, %cst_31 [2] : vector<4x16x16xf32> to vector<4x16xf32>
    %58 = vector.shape_cast %57 : vector<4x16xf32> to vector<4x16x1xf32>
    %59 = tpu.reciprocal %58 {approx = true} : vector<4x16x1xf32> -> vector<4x16x1xf32>
    %60 = vector.broadcast %59 : vector<4x16x1xf32> to vector<4x16x16xf32>
    %61 = arith.mulf %56, %60 : vector<4x16x16xf32>
    "tpu.trace_start"() <{level = 10 : i32, message = "wlm,wmd->wld"}> : () -> ()
    %cst_32 = arith.constant dense<0.000000e+00> : vector<4x16x8xf32>
    %62 = tpu.matmul %61, %47, %cst_32 {dimension_numbers = #tpu.dot_dimension_numbers<[2], [1], [1], [2], [0, 0, 0, 1, 1, 2], [0], [0]>} : vector<4x16x16xf32>, vector<4x16x8xf32>, vector<4x16x8xf32> -> vector<4x16x8xf32>
    "tpu.trace_stop"() : () -> ()
    %63 = vector.extract_strided_slice %23 {offsets = [0, 0, 16], sizes = [4, 16, 8], strides = [1, 1, 1]} : vector<4x16x32xf32> to vector<4x16x8xf32>
    %64 = vector.extract_strided_slice %24 {offsets = [0, 0, 16], sizes = [4, 16, 8], strides = [1, 1, 1]} : vector<4x16x32xf32> to vector<4x16x8xf32>
    %65 = vector.extract_strided_slice %25 {offsets = [0, 0, 16], sizes = [4, 16, 8], strides = [1, 1, 1]} : vector<4x16x32xf32> to vector<4x16x8xf32>
    "tpu.trace_start"() <{level = 10 : i32, message = "wld,wmd->wlm"}> : () -> ()
    %cst_33 = arith.constant dense<0.000000e+00> : vector<4x16x16xf32>
    %66 = tpu.matmul %63, %64, %cst_33 {dimension_numbers = #tpu.dot_dimension_numbers<[2], [2], [1], [1], [0, 0, 0, 1, 1, 1], [0], [0]>} : vector<4x16x8xf32>, vector<4x16x8xf32>, vector<4x16x16xf32> -> vector<4x16x16xf32>
    "tpu.trace_stop"() : () -> ()
    %cst_34 = arith.constant 0.353553385 : f32
    %67 = vector.broadcast %cst_34 : f32 to vector<4x16x16xf32>
    %68 = arith.mulf %66, %67 : vector<4x16x16xf32>
    %69 = arith.addf %68, %26 : vector<4x16x16xf32>
    %cst_35 = arith.constant dense<0xFF800000> : vector<4x16xf32>
    %70 = vector.multi_reduction <maximumf>, %69, %cst_35 [2] : vector<4x16x16xf32> to vector<4x16xf32>
    %71 = vector.shape_cast %70 : vector<4x16xf32> to vector<4x16x1xf32>
    %72 = vector.broadcast %71 : vector<4x16x1xf32> to vector<4x16x16xf32>
    %73 = arith.subf %69, %72 : vector<4x16x16xf32>
    %74 = math.exp %73 : vector<4x16x16xf32>
    %cst_36 = arith.constant dense<0.000000e+00> : vector<4x16xf32>
    %75 = vector.multi_reduction <add>, %74, %cst_36 [2] : vector<4x16x16xf32> to vector<4x16xf32>
    %76 = vector.shape_cast %75 : vector<4x16xf32> to vector<4x16x1xf32>
    %77 = tpu.reciprocal %76 {approx = true} : vector<4x16x1xf32> -> vector<4x16x1xf32>
    %78 = vector.broadcast %77 : vector<4x16x1xf32> to vector<4x16x16xf32>
    %79 = arith.mulf %74, %78 : vector<4x16x16xf32>
    "tpu.trace_start"() <{level = 10 : i32, message = "wlm,wmd->wld"}> : () -> ()
    %cst_37 = arith.constant dense<0.000000e+00> : vector<4x16x8xf32>
    %80 = tpu.matmul %79, %65, %cst_37 {dimension_numbers = #tpu.dot_dimension_numbers<[2], [1], [1], [2], [0, 0, 0, 1, 1, 2], [0], [0]>} : vector<4x16x16xf32>, vector<4x16x8xf32>, vector<4x16x8xf32> -> vector<4x16x8xf32>
    "tpu.trace_stop"() : () -> ()
    %81 = vector.extract_strided_slice %23 {offsets = [0, 0, 24], sizes = [4, 16, 8], strides = [1, 1, 1]} : vector<4x16x32xf32> to vector<4x16x8xf32>
    %82 = vector.extract_strided_slice %24 {offsets = [0, 0, 24], sizes = [4, 16, 8], strides = [1, 1, 1]} : vector<4x16x32xf32> to vector<4x16x8xf32>
    %83 = vector.extract_strided_slice %25 {offsets = [0, 0, 24], sizes = [4, 16, 8], strides = [1, 1, 1]} : vector<4x16x32xf32> to vector<4x16x8xf32>
    "tpu.trace_start"() <{level = 10 : i32, message = "wld,wmd->wlm"}> : () -> ()
    %cst_38 = arith.constant dense<0.000000e+00> : vector<4x16x16xf32>
    %84 = tpu.matmul %81, %82, %cst_38 {dimension_numbers = #tpu.dot_dimension_numbers<[2], [2], [1], [1], [0, 0, 0, 1, 1, 1], [0], [0]>} : vector<4x16x8xf32>, vector<4x16x8xf32>, vector<4x16x16xf32> -> vector<4x16x16xf32>
    "tpu.trace_stop"() : () -> ()
    %cst_39 = arith.constant 0.353553385 : f32
    %85 = vector.broadcast %cst_39 : f32 to vector<4x16x16xf32>
    %86 = arith.mulf %84, %85 : vector<4x16x16xf32>
    %87 = arith.addf %86, %26 : vector<4x16x16xf32>
    %cst_40 = arith.constant dense<0xFF800000> : vector<4x16xf32>
    %88 = vector.multi_reduction <maximumf>, %87, %cst_40 [2] : vector<4x16x16xf32> to vector<4x16xf32>
    %89 = vector.shape_cast %88 : vector<4x16xf32> to vector<4x16x1xf32>
    %90 = vector.broadcast %89 : vector<4x16x1xf32> to vector<4x16x16xf32>
    %91 = arith.subf %87, %90 : vector<4x16x16xf32>
    %92 = math.exp %91 : vector<4x16x16xf32>
    %cst_41 = arith.constant dense<0.000000e+00> : vector<4x16xf32>
    %93 = vector.multi_reduction <add>, %92, %cst_41 [2] : vector<4x16x16xf32> to vector<4x16xf32>
    %94 = vector.shape_cast %93 : vector<4x16xf32> to vector<4x16x1xf32>
    %95 = tpu.reciprocal %94 {approx = true} : vector<4x16x1xf32> -> vector<4x16x1xf32>
    %96 = vector.broadcast %95 : vector<4x16x1xf32> to vector<4x16x16xf32>
    %97 = arith.mulf %92, %96 : vector<4x16x16xf32>
    "tpu.trace_start"() <{level = 10 : i32, message = "wlm,wmd->wld"}> : () -> ()
    %cst_42 = arith.constant dense<0.000000e+00> : vector<4x16x8xf32>
    %98 = tpu.matmul %97, %83, %cst_42 {dimension_numbers = #tpu.dot_dimension_numbers<[2], [1], [1], [2], [0, 0, 0, 1, 1, 2], [0], [0]>} : vector<4x16x16xf32>, vector<4x16x8xf32>, vector<4x16x8xf32> -> vector<4x16x8xf32>
    "tpu.trace_stop"() : () -> ()
    %99 = tpu.concatenate %44, %62, %80, %98 in 2 : vector<4x16x8xf32>, vector<4x16x8xf32>, vector<4x16x8xf32>, vector<4x16x8xf32> -> vector<4x16x32xf32>
    %100 = vector.shape_cast %99 : vector<4x16x32xf32> to vector<64x32xf32>
    %c0_43 = arith.constant 0 : index
    %c0_44 = arith.constant 0 : index
    %101 = vector.load %arg5[%c0_43, %c0_44] : memref<1x32xf32, #tpu.memory_space<vmem>>, vector<1x32xf32>
    %c0_45 = arith.constant 0 : index
    %c0_46 = arith.constant 0 : index
    %102 = vector.load %arg6[%c0_45, %c0_46] : memref<1x32xf32, #tpu.memory_space<vmem>>, vector<1x32xf32>
    %cst_47 = arith.constant dense<0.000000e+00> : vector<64xf32>
    %103 = vector.multi_reduction <add>, %100, %cst_47 [1] : vector<64x32xf32> to vector<64xf32>
    %104 = vector.shape_cast %103 : vector<64xf32> to vector<64x1xf32>
    %cst_48 = arith.constant 3.200000e+01 : f32
    %105 = vector.broadcast %cst_48 : f32 to vector<64x1xf32>
    %106 = arith.divf %104, %105 : vector<64x1xf32>
    %107 = vector.broadcast %106 : vector<64x1xf32> to vector<64x32xf32>
    %108 = arith.subf %100, %107 : vector<64x32xf32>
    %109 = arith.mulf %108, %108 : vector<64x32xf32>
    %cst_49 = arith.constant dense<0.000000e+00> : vector<64xf32>
    %110 = vector.multi_reduction <add>, %109, %cst_49 [1] : vector<64x32xf32> to vector<64xf32>
    %111 = vector.shape_cast %110 : vector<64xf32> to vector<64x1xf32>
    %cst_50 = arith.constant 3.200000e+01 : f32
    %112 = vector.broadcast %cst_50 : f32 to vector<64x1xf32>
    %113 = arith.divf %111, %112 : vector<64x1xf32>
    %cst_51 = arith.constant 9.99999997E-7 : f32
    %114 = vector.broadcast %cst_51 : f32 to vector<64x1xf32>
    %115 = arith.addf %113, %114 : vector<64x1xf32>
    %116 = math.rsqrt %115 : vector<64x1xf32>
    %117 = vector.broadcast %116 : vector<64x1xf32> to vector<64x32xf32>
    %118 = arith.mulf %108, %117 : vector<64x32xf32>
    %119 = vector.broadcast %101 : vector<1x32xf32> to vector<64x32xf32>
    %120 = arith.mulf %118, %119 : vector<64x32xf32>
    %121 = vector.broadcast %102 : vector<1x32xf32> to vector<64x32xf32>
    %122 = arith.addf %120, %121 : vector<64x32xf32>
    %123 = arith.addf %1, %122 : vector<64x32xf32>
    %c0_52 = arith.constant 0 : index
    %c0_53 = arith.constant 0 : index
    %124 = vector.load %arg7[%c0_52, %c0_53] : memref<32x128xf32, #tpu.memory_space<vmem>>, vector<32x128xf32>
    %cst_54 = arith.constant dense<0.000000e+00> : vector<64x128xf32>
    %125 = tpu.matmul %123, %124, %cst_54 {dimension_numbers = #tpu.dot_dimension_numbers<[1], [0], [0], [1], [0, 0, 1, 1], [], []>} : vector<64x32xf32>, vector<32x128xf32>, vector<64x128xf32> -> vector<64x128xf32>
    %c0_55 = arith.constant 0 : index
    %c0_56 = arith.constant 0 : index
    %126 = vector.load %arg8[%c0_55, %c0_56] : memref<1x128xf32, #tpu.memory_space<vmem>>, vector<1x128xf32>
    %127 = vector.broadcast %126 : vector<1x128xf32> to vector<64x128xf32>
    %128 = arith.addf %125, %127 : vector<64x128xf32>
    %cst_57 = arith.constant 5.000000e-01 : f32
    %129 = vector.broadcast %cst_57 : f32 to vector<64x128xf32>
    %130 = arith.mulf %129, %128 : vector<64x128xf32>
    %cst_58 = arith.constant 0.707106769 : f32
    %131 = vector.broadcast %cst_58 : f32 to vector<64x128xf32>
    %132 = arith.mulf %128, %131 : vector<64x128xf32>
    %133 = math.absf %132 : vector<64x128xf32>
    %cst_59 = arith.constant 0.327591091 : f32
    %134 = vector.broadcast %cst_59 : f32 to vector<64x128xf32>
    %135 = arith.mulf %134, %133 : vector<64x128xf32>
    %cst_60 = arith.constant 1.000000e+00 : f32
    %136 = vector.broadcast %cst_60 : f32 to vector<64x128xf32>
    %137 = arith.addf %136, %135 : vector<64x128xf32>
    %cst_61 = arith.constant 1.000000e+00 : f32
    %138 = vector.broadcast %cst_61 : f32 to vector<64x128xf32>
    %139 = arith.divf %138, %137 : vector<64x128xf32>
    %cst_62 = arith.constant 1.06140542 : f32
    %140 = vector.broadcast %cst_62 : f32 to vector<64x128xf32>
    %141 = arith.mulf %140, %139 : vector<64x128xf32>
    %cst_63 = arith.constant -1.45315206 : f32
    %142 = vector.broadcast %cst_63 : f32 to vector<64x128xf32>
    %143 = arith.addf %141, %142 : vector<64x128xf32>
    %144 = arith.mulf %143, %139 : vector<64x128xf32>
    %cst_64 = arith.constant 1.42141378 : f32
    %145 = vector.broadcast %cst_64 : f32 to vector<64x128xf32>
    %146 = arith.addf %144, %145 : vector<64x128xf32>
    %147 = arith.mulf %146, %139 : vector<64x128xf32>
    %cst_65 = arith.constant -0.284496725 : f32
    %148 = vector.broadcast %cst_65 : f32 to vector<64x128xf32>
    %149 = arith.addf %147, %148 : vector<64x128xf32>
    %150 = arith.mulf %149, %139 : vector<64x128xf32>
    %cst_66 = arith.constant 0.254829586 : f32
    %151 = vector.broadcast %cst_66 : f32 to vector<64x128xf32>
    %152 = arith.addf %150, %151 : vector<64x128xf32>
    %153 = arith.mulf %152, %139 : vector<64x128xf32>
    %154 = arith.mulf %133, %133 : vector<64x128xf32>
    %cst_67 = arith.constant 0.000000e+00 : f32
    %155 = vector.broadcast %cst_67 : f32 to vector<64x128xf32>
    %156 = arith.subf %155, %154 : vector<64x128xf32>
    %157 = math.exp %156 : vector<64x128xf32>
    %158 = arith.mulf %153, %157 : vector<64x128xf32>
    %cst_68 = arith.constant 1.000000e+00 : f32
    %159 = vector.broadcast %cst_68 : f32 to vector<64x128xf32>
    %160 = arith.subf %159, %158 : vector<64x128xf32>
    %cst_69 = arith.constant 0.000000e+00 : f32
    %161 = vector.broadcast %cst_69 : f32 to vector<64x128xf32>
    %162 = arith.cmpf oge, %132, %161 : vector<64x128xf32>
    %cst_70 = arith.constant 0.000000e+00 : f32
    %163 = vector.broadcast %cst_70 : f32 to vector<64x128xf32>
    %164 = arith.subf %163, %160 : vector<64x128xf32>
    %165 = arith.select %162, %160, %164 : vector<64x128xi1>, vector<64x128xf32>
    %cst_71 = arith.constant 1.000000e+00 : f32
    %166 = vector.broadcast %cst_71 : f32 to vector<64x128xf32>
    %167 = arith.addf %166, %165 : vector<64x128xf32>
    %168 = arith.mulf %130, %167 : vector<64x128xf32>
    %c0_72 = arith.constant 0 : index
    %c0_73 = arith.constant 0 : index
    %169 = vector.load %arg9[%c0_72, %c0_73] : memref<128x32xf32, #tpu.memory_space<vmem>>, vector<128x32xf32>
    %cst_74 = arith.constant dense<0.000000e+00> : vector<64x32xf32>
    %170 = tpu.matmul %168, %169, %cst_74 {dimension_numbers = #tpu.dot_dimension_numbers<[1], [0], [0], [1], [0, 0, 1, 1], [], []>} : vector<64x128xf32>, vector<128x32xf32>, vector<64x32xf32> -> vector<64x32xf32>
    %c0_75 = arith.constant 0 : index
    %c0_76 = arith.constant 0 : index
    %171 = vector.load %arg10[%c0_75, %c0_76] : memref<1x32xf32, #tpu.memory_space<vmem>>, vector<1x32xf32>
    %172 = vector.broadcast %171 : vector<1x32xf32> to vector<64x32xf32>
    %173 = arith.addf %170, %172 : vector<64x32xf32>
    %cst_77 = arith.constant dense<0.000000e+00> : vector<64xf32>
    %174 = vector.multi_reduction <add>, %173, %cst_77 [1] : vector<64x32xf32> to vector<64xf32>
    %175 = vector.shape_cast %174 : vector<64xf32> to vector<64x1xf32>
    %cst_78 = arith.constant 3.200000e+01 : f32
    %176 = vector.broadcast %cst_78 : f32 to vector<64x1xf32>
    %177 = arith.divf %175, %176 : vector<64x1xf32>
    %178 = vector.broadcast %177 : vector<64x1xf32> to vector<64x32xf32>
    %179 = arith.subf %173, %178 : vector<64x32xf32>
    %180 = arith.mulf %179, %179 : vector<64x32xf32>
    %cst_79 = arith.constant dense<0.000000e+00> : vector<64xf32>
    %181 = vector.multi_reduction <add>, %180, %cst_79 [1] : vector<64x32xf32> to vector<64xf32>
    %182 = vector.shape_cast %181 : vector<64xf32> to vector<64x1xf32>
    %cst_80 = arith.constant 3.200000e+01 : f32
    %183 = vector.broadcast %cst_80 : f32 to vector<64x1xf32>
    %184 = arith.divf %182, %183 : vector<64x1xf32>
    %cst_81 = arith.constant 9.99999997E-7 : f32
    %185 = vector.broadcast %cst_81 : f32 to vector<64x1xf32>
    %186 = arith.addf %184, %185 : vector<64x1xf32>
    %187 = math.rsqrt %186 : vector<64x1xf32>
    %188 = vector.broadcast %187 : vector<64x1xf32> to vector<64x32xf32>
    %189 = arith.mulf %179, %188 : vector<64x32xf32>
    %190 = vector.broadcast %101 : vector<1x32xf32> to vector<64x32xf32>
    %191 = arith.mulf %189, %190 : vector<64x32xf32>
    %192 = vector.broadcast %102 : vector<1x32xf32> to vector<64x32xf32>
    %193 = arith.addf %191, %192 : vector<64x32xf32>
    %194 = arith.addf %123, %193 : vector<64x32xf32>
    %c0_82 = arith.constant 0 : index
    %c0_83 = arith.constant 0 : index
    %c0_84 = arith.constant 0 : index
    %195 = vector.load %arg11[%c0_82, %c0_83, %c0_84] : memref<1x64x32xf32, #tpu.memory_space<vmem>>, vector<1x64x32xf32>
    %196 = vector.shape_cast %195 : vector<1x64x32xf32> to vector<64x32xf32>
    %197 = vector.shape_cast %194 : vector<64x32xf32> to vector<1x64x32xf32>
    tpu.vector_store %arg11[%c0_82, %c0_83, %c0_84], %197 {strides = array<i32>} : memref<1x64x32xf32, #tpu.memory_space<vmem>>, vector<1x64x32xf32>,
    return
  }
  func.func @transform_0(%arg0: i32) -> (i32, i32, i32) {
    %c0_i32 = arith.constant 0 : i32
    %c0_i32_0 = arith.constant 0 : i32
    %c0_i32_1 = arith.constant 0 : i32
    return %arg0, %c0_i32, %c0_i32_0 : i32, i32, i32
  }
  func.func @transform_1(%arg0: i32) -> (i32, i32, i32) {
    %c0_i32 = arith.constant 0 : i32
    %c0_i32_0 = arith.constant 0 : i32
    %c0_i32_1 = arith.constant 0 : i32
    %c0_i32_2 = arith.constant 0 : i32
    return %c0_i32, %c0_i32_0, %c0_i32_1 : i32, i32, i32
  }
  func.func @transform_2(%arg0: i32) -> (i32, i32, i32) {
    %c0_i32 = arith.constant 0 : i32
    %c0_i32_0 = arith.constant 0 : i32
    %c0_i32_1 = arith.constant 0 : i32
    %c0_i32_2 = arith.constant 0 : i32
    return %c0_i32, %c0_i32_0, %c0_i32_1 : i32, i32, i32
  }
  func.func @transform_3(%arg0: i32) -> (i32, i32, i32) {
    %c0_i32 = arith.constant 0 : i32
    %c0_i32_0 = arith.constant 0 : i32
    %c0_i32_1 = arith.constant 0 : i32
    %c0_i32_2 = arith.constant 0 : i32
    return %c0_i32, %c0_i32_0, %c0_i32_1 : i32, i32, i32
  }
  func.func @transform_4(%arg0: i32) -> (i32, i32) {
    %c0_i32 = arith.constant 0 : i32
    %c0_i32_0 = arith.constant 0 : i32
    %c0_i32_1 = arith.constant 0 : i32
    return %c0_i32, %c0_i32_0 : i32, i32
  }
  func.func @transform_5(%arg0: i32) -> (i32, i32) {
    %c0_i32 = arith.constant 0 : i32
    %c0_i32_0 = arith.constant 0 : i32
    %c0_i32_1 = arith.constant 0 : i32
    return %c0_i32, %c0_i32_0 : i32, i32
  }
  func.func @transform_6(%arg0: i32) -> (i32, i32) {
    %c0_i32 = arith.constant 0 : i32
    %c0_i32_0 = arith.constant 0 : i32
    %c0_i32_1 = arith.constant 0 : i32
    return %c0_i32, %c0_i32_0 : i32, i32
  }
  func.func @transform_7(%arg0: i32) -> (i32, i32) {
    %c0_i32 = arith.constant 0 : i32
    %c0_i32_0 = arith.constant 0 : i32
    %c0_i32_1 = arith.constant 0 : i32
    return %c0_i32, %c0_i32_0 : i32, i32
  }
  func.func @transform_8(%arg0: i32) -> (i32, i32) {
    %c0_i32 = arith.constant 0 : i32
    %c0_i32_0 = arith.constant 0 : i32
    %c0_i32_1 = arith.constant 0 : i32
    return %c0_i32, %c0_i32_0 : i32, i32
  }
  func.func @transform_9(%arg0: i32) -> (i32, i32) {
    %c0_i32 = arith.constant 0 : i32
    %c0_i32_0 = arith.constant 0 : i32
    %c0_i32_1 = arith.constant 0 : i32
    return %c0_i32, %c0_i32_0 : i32, i32
  }
  func.func @transform_10(%arg0: i32) -> (i32, i32, i32) {
    %c0_i32 = arith.constant 0 : i32
    %c0_i32_0 = arith.constant 0 : i32
    %c0_i32_1 = arith.constant 0 : i32
    return %arg0, %c0_i32, %c0_i32_0 : i32, i32, i32
  }
}

</mosaic_0001>

<llo_original>
// kernel: _lambda_.3
$region0: #{_lambda_.3}
  #allocation0 [shape = 'u32[]', space=smem, size = 0x4, offset = 0x4, fixed_abs, tag = 'smem constant byte address 0x4 - core index']
  #allocation1 [shape = 'u32[144,128]{1,0:T(1,128)}', space=vmem, size = 0x12000, scoped, tag = 'internal scratch']
  %s0 = inlined_call_operand.vmem [shape: f32[2,64,16], index: 0, kind: input, shape index: {}]
  %s1 = inlined_call_operand.vmem [shape: f32[16,32], index: 1, kind: input, shape index: {}]
  %s2 = inlined_call_operand.vmem [shape: f32[1,32], index: 2, kind: input, shape index: {}]
  %s3 = inlined_call_operand.vmem [shape: f32[2,64,32], index: 3, kind: output, shape index: {}]
  %s4 = sld [smem:[#allocation0]]
  $region45: #{_lambda_.3} parent=0
    _
  %s6 = ssub.s32 1, %s4
  %s7 = scalar_select 0, %s6, %s4
  loop: start=0, step=1, limit=4
  $region2: #{_lambda_.3} parent=0 // loop_pre_header
    _
  $region3: #{_lambda_.3} parent=0 // loop_header
    %s9 = sphi 0, %s13
    %p10 = scmp.ge.s32.totalorder %s9, 4
    %s19 = sphi 0, %s21
    %s22 = sphi 0, %s19
    %s23 = sphi 0, %s22
    %s39 = sphi 0, %s23
    %s43 = sphi 0, %s43
    %s45 = sphi 0, %s43
    %s46 = sphi 0, %s45
    %s60 = sphi 0, %s46
    %s64 = sphi 0, %s64
    %s66 = sphi 0, %s64
    %s67 = sphi 0, %s66
    %s81 = sphi 0, %s67
    %s87 = sphi 0, %s89
    %s90 = sphi 0, %s87
    %s91 = sphi 0, %s90
    %s107 = sphi 0, %s91
  $region4: #{_lambda_.3} parent=0 // loop_header_branch
    %12 = sbr.rel (%p10) target = $region8
  $region5: #{_lambda_.3} parent=0 // loop_body
    %s14 = ssub.s32 %s9, 1
    %s15 = ssub.s32 %s9, 2
    %s16 = sadd.s32 %s9, 1
    %s17 = ssub.s32 %s9, %s16
    %p18 = scmp.eq.s32.totalorder %s17, 0
    %s20 = sadd.s32 %s19, 1
    %s21 = scalar_select %p18, %s19, %s20
    %p24 = pneg %p18
    %p25 = scmp.eq.s32.totalorder %s9, 1
    %p26 = por %p24, %p25
    %p27 = scmp.ne.s32.totalorder %s19, %s22
    %p28 = scmp.eq.s32.totalorder %s9, 0
    %p29 = por %p27, %p28
    %p30 = scmp.ne.s32.totalorder %s19, %s22
    %p31 = scmp.eq.s32.totalorder %s14, 1
    %p32 = por %p30, %p31
    %p33 = scmp.ne.s32.totalorder %s22, %s23
    %p34 = scmp.eq.s32.totalorder %s14, 0
    %p35 = por %p33, %p34
    %p36 = scmp.ne.s32.totalorder %s22, %s23
    %p37 = scmp.eq.s32.totalorder %s15, 1
    %p38 = por %p36, %p37
    %p40 = scmp.ne.s32.totalorder %s23, %s39
    %p41 = scmp.eq.s32.totalorder %s15, 0
    %p42 = por %p40, %p41
    %s44 = sadd.s32 %s43, 1
    %p47 = scmp.eq.s32.totalorder %s9, 1
    %p48 = scmp.ne.s32.totalorder %s43, %s45
    %p49 = scmp.eq.s32.totalorder %s9, 0
    %p50 = por %p48, %p49
    %p51 = scmp.ne.s32.totalorder %s43, %s45
    %p52 = scmp.eq.s32.totalorder %s14, 1
    %p53 = por %p51, %p52
    %p54 = scmp.ne.s32.totalorder %s45, %s46
    %p55 = scmp.eq.s32.totalorder %s14, 0
    %p56 = por %p54, %p55
    %p57 = scmp.ne.s32.totalorder %s45, %s46
    %p58 = scmp.eq.s32.totalorder %s15, 1
    %p59 = por %p57, %p58
    %p61 = scmp.ne.s32.totalorder %s46, %s60
    %p62 = scmp.eq.s32.totalorder %s15, 0
    %p63 = por %p61, %p62
    %s65 = sadd.s32 %s64, 1
    %p68 = scmp.eq.s32.totalorder %s9, 1
    %p69 = scmp.ne.s32.totalorder %s64, %s66
    %p70 = scmp.eq.s32.totalorder %s9, 0
    %p71 = por %p69, %p70
    %p72 = scmp.ne.s32.totalorder %s64, %s66
    %p73 = scmp.eq.s32.totalorder %s14, 1
    %p74 = por %p72, %p73
    %p75 = scmp.ne.s32.totalorder %s66, %s67
    %p76 = scmp.eq.s32.totalorder %s14, 0
    %p77 = por %p75, %p76
    %p78 = scmp.ne.s32.totalorder %s66, %s67
    %p79 = scmp.eq.s32.totalorder %s15, 1
    %p80 = por %p78, %p79
    %p82 = scmp.ne.s32.totalorder %s67, %s81
    %p83 = scmp.eq.s32.totalorder %s15, 0
    %p84 = por %p82, %p83
    %s85 = ssub.s32 %s9, %s16
    %p86 = scmp.eq.s32.totalorder %s85, 0
    %s88 = sadd.s32 %s87, 1
    %s89 = scalar_select %p86, %s87, %s88
    %p92 = pneg %p86
    %p93 = scmp.eq.s32.totalorder %s9, 1
    %p94 = por %p92, %p93
    %p95 = scmp.ne.s32.totalorder %s87, %s90
    %p96 = scmp.eq.s32.totalorder %s9, 0
    %p97 = por %p95, %p96
    %p98 = scmp.ne.s32.totalorder %s87, %s90
    %p99 = scmp.eq.s32.totalorder %s14, 1
    %p100 = por %p98, %p99
    %p101 = scmp.ne.s32.totalorder %s90, %s91
    %p102 = scmp.eq.s32.totalorder %s14, 0
    %p103 = por %p101, %p102
    %p104 = scmp.ne.s32.totalorder %s90, %s91
    %p105 = scmp.eq.s32.totalorder %s15, 1
    %p106 = por %p104, %p105
    %p108 = scmp.ne.s32.totalorder %s91, %s107
    %p109 = scmp.eq.s32.totalorder %s15, 0
    %p110 = por %p108, %p109
    %p111 = scmp.le.s32.totalorder 1, %s9
    %p112 = scmp.lt.s32.totalorder %s9, 3
    %p113 = pnand %p111, %p112
    %p114 = pneg %p113
    // Predicated region
    $region9: #{_lambda_.3} parent=5 // pred_check
      _
    $region10: #{_lambda_.3} parent=5 // pred_check_branch
      %116 = sbr.rel (%p113) target = $region12
    $region11: #{_lambda_.3} parent=5 // pred_region
      %s117 = ssub.s32 %s9, 1
      // Predicated region
      $region13: #{_lambda_.3} parent=11 // pred_check
        %p118 = pneg %p56
      $region14: #{_lambda_.3} parent=11 // pred_check_branch
        %120 = sbr.rel (%p118) target = $region16
      $region15: #{_lambda_.3} parent=11 // pred_region
        _
      $region16: #{_lambda_.3} parent=11 // pred_fallthru
        _
      // Predicated region
      $region17: #{_lambda_.3} parent=11 // pred_check
        %p121 = pneg %p77
      $region18: #{_lambda_.3} parent=11 // pred_check_branch
        %123 = sbr.rel (%p121) target = $region20
      $region19: #{_lambda_.3} parent=11 // pred_region
        _
      $region20: #{_lambda_.3} parent=11 // pred_fallthru
        _
    $region12: #{_lambda_.3} parent=5 // pred_fallthru
      _
    %p124 = scmp.lt.s32.totalorder %s9, 2
    // Predicated region
    $region21: #{_lambda_.3} parent=5 // pred_check
      %p125 = pneg %p124
    $region22: #{_lambda_.3} parent=5 // pred_check_branch
      %127 = sbr.rel (%p125) target = $region24
    $region23: #{_lambda_.3} parent=5 // pred_region
      // Predicated region
      $region25: #{_lambda_.3} parent=23 // pred_check
        %p128 = pneg %p29
      $region26: #{_lambda_.3} parent=23 // pred_check_branch
        %130 = sbr.rel (%p128) target = $region28
      $region27: #{_lambda_.3} parent=23 // pred_region
        %p131 = scmp.lt.s32.totalorder %s9, 1
        %s132 = scalar_select %p131, %s9, 1
        %s133 = smul.addr %s132, 8
        %s134 = smul.addr %s133, 8
        %s135 = scalar_lea.vmem %s0, %s134
      $region28: #{_lambda_.3} parent=23 // pred_fallthru
        _
    $region24: #{_lambda_.3} parent=5 // pred_fallthru
      _
    %p136 = scmp.le.s32.totalorder 1, %s9
    %p137 = scmp.lt.s32.totalorder %s9, 3
    %p138 = pnand %p136, %p137
    %p139 = pneg %p138
    // Predicated region
    $region29: #{_lambda_.3} parent=5 // pred_check
      _
    $region30: #{_lambda_.3} parent=5 // pred_check_branch
      %141 = sbr.rel (%p138) target = $region32
    $region31: #{_lambda_.3} parent=5 // pred_region
      %s142 = ssub.s32 %s9, 1
      %p143 = scmp.lt.s32.totalorder %s14, 1
      %s144 = scalar_select %p143, %s14, 1
      %s145 = smul.addr %s144, 8
      %s146 = smul.addr %s145, 8
      %s147 = scalar_lea.vmem %s0, %s146
      %p148 = pneg %p35
      %p149 = pneg %p32
      %p150 = pneg %p56
      %p151 = pneg %p53
      %p152 = pneg %p77
      %p153 = pneg %p74
      %p154 = pneg %p103
      %p155 = pneg %p100
      %p156 = scmp.lt.s32.totalorder %s14, 1
      %s157 = scalar_select %p156, %s14, 1
      %s158 = smul.addr %s157, 8
      %s159 = smul.addr %s158, 8
      %s160 = scalar_lea.vmem %s3, %s159
      %p161 = scmp.lt.s32.totalorder %s14, 1
      %s162 = scalar_select %p161, %s14, 1
      %s163 = smul.addr %s162, 8
      %s164 = smul.addr %s163, 8
      %s165 = scalar_lea.vmem %s0, %s164
      %p166 = scmp.lt.s32.totalorder %s14, 1
      %s167 = scalar_select %p166, %s14, 1
      %s168 = smul.addr %s167, 8
      %s169 = smul.addr %s168, 8
      %s170 = scalar_lea.vmem %s3, %s169
      %v171 = vld [vmem:[%s165] sm:$0xff]
      %v172 = vld [vmem:[%s165 + $0x8] sm:$0xff]
      %v173 = vld [vmem:[%s165 + $0x10] sm:$0xff]
      %v174 = vld [vmem:[%s165 + $0x18] sm:$0xff]
      %v175 = vld [vmem:[%s165 + $0x20] sm:$0xff]
      %v176 = vld [vmem:[%s165 + $0x28] sm:$0xff]
      %v177 = vld [vmem:[%s165 + $0x30] sm:$0xff]
      %v178 = vld [vmem:[%s165 + $0x38] sm:$0xff]
      %v179 = vld [vmem:[%s1] sm:$0xff]
      %v180 = vld [vmem:[%s1 + $0x8] sm:$0xff]
      %v181 = vld [vmem:[%s2] sm:$0x1]
      %v183 = vlaneseq
      %v184 = vshrl.u32 %v183, 7
      %v185 = vsub.s32 0, %v184
      %v186 = vrot.slane %v181, %v185
      %vm188 = vcmask 130048
      %v190 = vsel %vm188, %v171, 0
      %v193 = vsel %vm188, %v172, 0
      %v196 = vsel %vm188, %v173, 0
      %v199 = vsel %vm188, %v174, 0
      %v202 = vsel %vm188, %v175, 0
      %v205 = vsel %vm188, %v176, 0
      %v208 = vsel %vm188, %v177, 0
      %v211 = vsel %vm188, %v178, 0
      %213 = vmatprep.subr.mxu0 0.0
      %214 = vmatpush1.msra.mxu0 %v179
      %215 = vmatprep.subr.mxu0 0.0
      %216 = vmatpush1.msra.mxu0 %v180
      %217 = vmatprep.subr.mxu0 0.0
      %218 = vmatpush1.msra.mxu0 0.0
      %219 = vmatprep.subr.mxu0 0.0
      %220 = vmatpush1.msra.mxu0 0.0
      %221 = vmatprep.subr.mxu0 0.0
      %222 = vmatpush1.msra.mxu0 0.0
      %223 = vmatprep.subr.mxu0 0.0
      %224 = vmatpush1.msra.mxu0 0.0
      %225 = vmatprep.subr.mxu0 0.0
      %226 = vmatpush1.msra.mxu0 0.0
      %227 = vmatprep.subr.mxu0 0.0
      %228 = vmatpush1.msra.mxu0 0.0
      %229 = vmatprep.subr.mxu0 0.0
      %230 = vmatpush1.msra.mxu0 0.0
      %231 = vmatprep.subr.mxu0 0.0
      %232 = vmatpush1.msra.mxu0 0.0
      %233 = vmatprep.subr.mxu0 0.0
      %234 = vmatpush1.msra.mxu0 0.0
      %235 = vmatprep.subr.mxu0 0.0
      %236 = vmatpush1.msra.mxu0 0.0
      %237 = vmatprep.subr.mxu0 0.0
      %238 = vmatpush1.msra.mxu0 0.0
      %239 = vmatprep.subr.mxu0 0.0
      %240 = vmatpush1.msra.mxu0 0.0
      %241 = vmatprep.subr.mxu0 0.0
      %242 = vmatpush1.msra.mxu0 0.0
      %243 = vmatprep.subr.mxu0 0.0
      %244 = vmatpush1.msra.mxu0 0.0
      %245 = vmatprep.subr.mxu0 0.0
      %246 = vmatpush1.msra.mxu0 0.0
      %247 = vmatprep.subr.mxu0 0.0
      %248 = vmatpush1.msra.mxu0 0.0
      %249 = vmatprep.subr.mxu0 0.0
      %250 = vmatpush1.msra.mxu0 0.0
      %251 = vmatprep.subr.mxu0 0.0
      %252 = vmatpush1.msra.mxu0 0.0
      %253 = vmatprep.subr.mxu0 0.0
      %254 = vmatpush1.msra.mxu0 0.0
      %255 = vmatprep.subr.mxu0 0.0
      %256 = vmatpush1.msra.mxu0 0.0
      %257 = vmatprep.subr.mxu0 0.0
      %258 = vmatpush1.msra.mxu0 0.0
      %259 = vmatprep.subr.mxu0 0.0
      %260 = vmatpush1.msra.mxu0 0.0
      %261 = vmatprep.subr.mxu0 0.0
      %262 = vmatpush1.msra.mxu0 0.0
      %263 = vmatprep.subr.mxu0 0.0
      %264 = vmatpush1.msra.mxu0 0.0
      %265 = vmatprep.subr.mxu0 0.0
      %266 = vmatpush1.msra.mxu0 0.0
      %267 = vmatprep.subr.mxu0 0.0
      %268 = vmatpush1.msra.mxu0 0.0
      %269 = vmatprep.subr.mxu0 0.0
      %270 = vmatpush1.msra.mxu0 0.0
      %271 = vmatprep.subr.mxu0 0.0
      %272 = vmatpush1.msra.mxu0 0.0
      %273 = vmatprep.subr.mxu0 0.0
      %274 = vmatpush1.msra.mxu0 0.0
      %275 = vmatprep.subr.mxu0 0.0
      %276 = vmatpush1.msra.mxu0 0.0
      %277 = vmatprep.mubr.f32.mxu0 0.0
      %278 = vmatmul.mubr.f32.gmra.mrb[0].mxu0 %v190
      %v279 = vpop.f32.mrb[0].mxu0
      %v280 = vadd.f32 %v186, %v279
      %v281 = vpop.f32.mrb[0].mxu0
      %282 = vmatprep.mubr.f32.mxu0 0.0
      %283 = vmatmul.mubr.f32.gmra.mrb[0].mxu0 %v193
      %v284 = vpop.f32.mrb[0].mxu0
      %v285 = vadd.f32 %v186, %v284
      %v286 = vpop.f32.mrb[0].mxu0
      %287 = vmatprep.mubr.f32.mxu0 0.0
      %288 = vmatmul.mubr.f32.gmra.mrb[0].mxu0 %v196
      %v289 = vpop.f32.mrb[0].mxu0
      %v290 = vadd.f32 %v186, %v289
      %v291 = vpop.f32.mrb[0].mxu0
      %292 = vmatprep.mubr.f32.mxu0 0.0
      %293 = vmatmul.mubr.f32.gmra.mrb[0].mxu0 %v199
      %v294 = vpop.f32.mrb[0].mxu0
      %v295 = vadd.f32 %v186, %v294
      %v296 = vpop.f32.mrb[0].mxu0
      %297 = vmatprep.mubr.f32.mxu0 0.0
      %298 = vmatmul.mubr.f32.gmra.mrb[0].mxu0 %v202
      %v299 = vpop.f32.mrb[0].mxu0
      %v300 = vadd.f32 %v186, %v299
      %v301 = vpop.f32.mrb[0].mxu0
      %302 = vmatprep.mubr.f32.mxu0 0.0
      %303 = vmatmul.mubr.f32.gmra.mrb[0].mxu0 %v205
      %v304 = vpop.f32.mrb[0].mxu0
      %v305 = vadd.f32 %v186, %v304
      %v306 = vpop.f32.mrb[0].mxu0
      %307 = vmatprep.mubr.f32.mxu0 0.0
      %308 = vmatmul.mubr.f32.gmra.mrb[0].mxu0 %v208
      %v309 = vpop.f32.mrb[0].mxu0
      %v310 = vadd.f32 %v186, %v309
      %v311 = vpop.f32.mrb[0].mxu0
      %312 = vmatprep.mubr.f32.mxu0 0.0
      %313 = vmatmul.mubr.f32.gmra.mrb[0].mxu0 %v211
      %v314 = vpop.f32.mrb[0].mxu0
      %v315 = vadd.f32 %v186, %v314
      %v316 = vpop.f32.mrb[0].mxu0
      %317 = vdwg.mxu0
      %vm318 = vcmask 261120
      %319 = vst.msk [vmem:[%s170] sm:$0xff] %vm318, %v280
      %320 = vst.msk [vmem:[%s170 + $0x8] sm:$0xff] %vm318, %v285
      %321 = vst.msk [vmem:[%s170 + $0x10] sm:$0xff] %vm318, %v290
      %322 = vst.msk [vmem:[%s170 + $0x18] sm:$0xff] %vm318, %v295
      %323 = vst.msk [vmem:[%s170 + $0x20] sm:$0xff] %vm318, %v300
      %324 = vst.msk [vmem:[%s170 + $0x28] sm:$0xff] %vm318, %v305
      %325 = vst.msk [vmem:[%s170 + $0x30] sm:$0xff] %vm318, %v310
      %326 = vst.msk [vmem:[%s170 + $0x38] sm:$0xff] %vm318, %v315
      %p327 = scmp.lt.s32.totalorder %s14, 1
      %s328 = scalar_select %p327, %s14, 1
      %s329 = smul.addr %s328, 8
      %s330 = smul.addr %s329, 8
      %s331 = scalar_lea.vmem %s3, %s330
      // Predicated region
      $region33: #{_lambda_.3} parent=31 // pred_check
        %p332 = pneg %p100
      $region34: #{_lambda_.3} parent=31 // pred_check_branch
        %334 = sbr.rel (%p332) target = $region36
      $region35: #{_lambda_.3} parent=31 // pred_region
        _
      $region36: #{_lambda_.3} parent=31 // pred_fallthru
        _
    $region32: #{_lambda_.3} parent=5 // pred_fallthru
      _
    %p335 = scmp.le.s32.totalorder 2, %s9
    // Predicated region
    $region37: #{_lambda_.3} parent=5 // pred_check
      %p336 = pneg %p335
    $region38: #{_lambda_.3} parent=5 // pred_check_branch
      %338 = sbr.rel (%p336) target = $region40
    $region39: #{_lambda_.3} parent=5 // pred_region
      %s339 = ssub.s32 %s9, 2
      // Predicated region
      $region41: #{_lambda_.3} parent=39 // pred_check
        %p340 = pneg %p106
      $region42: #{_lambda_.3} parent=39 // pred_check_branch
        %342 = sbr.rel (%p340) target = $region44
      $region43: #{_lambda_.3} parent=39 // pred_region
        %p343 = scmp.lt.s32.totalorder %s15, 1
        %s344 = scalar_select %p343, %s15, 1
        %s345 = smul.addr %s344, 8
        %s346 = smul.addr %s345, 8
        %s347 = scalar_lea.vmem %s3, %s346
      $region44: #{_lambda_.3} parent=39 // pred_fallthru
        _
    $region40: #{_lambda_.3} parent=5 // pred_fallthru
      _
  $region6: #{_lambda_.3} parent=0 // loop_footer
    %s13 = sadd.s32 1, %s9
  $region7: #{_lambda_.3} parent=0 // loop_footer_branch
    %8 = sbr.rel target = $region3
  $region8: #{_lambda_.3} parent=0 // loop_exit
    _

// kernel: _lambda_.4
$region0: #{_lambda_.4}
  #allocation0 [shape = 'u32[]', space=smem, size = 0x4, offset = 0x4, fixed_abs, tag = 'smem constant byte address 0x4 - core index']
  #allocation1 [shape = 'u32[144,128]{1,0:T(1,128)}', space=vmem, size = 0x12000, scoped, tag = 'internal scratch']
  %s0 = inlined_call_operand.vmem [shape: f32[2,64,32], index: 0, kind: input, shape index: {}]
  %s1 = inlined_call_operand.vmem [shape: f32[3,32,32], index: 1, kind: input, shape index: {}]
  %s2 = inlined_call_operand.vmem [shape: f32[3,1,32], index: 2, kind: input, shape index: {}]
  %s3 = inlined_call_operand.vmem [shape: f32[4,16,16], index: 3, kind: input, shape index: {}]
  %s4 = inlined_call_operand.vmem [shape: f32[1,32], index: 4, kind: input, shape index: {}]
  %s5 = inlined_call_operand.vmem [shape: f32[1,32], index: 5, kind: input, shape index: {}]
  %s6 = inlined_call_operand.vmem [shape: f32[32,128], index: 6, kind: input, shape index: {}]
  %s7 = inlined_call_operand.vmem [shape: f32[1,128], index: 7, kind: input, shape index: {}]
  %s8 = inlined_call_operand.vmem [shape: f32[128,32], index: 8, kind: input, shape index: {}]
  %s9 = inlined_call_operand.vmem [shape: f32[1,32], index: 9, kind: input, shape index: {}]
  %s10 = inlined_call_operand.vmem [shape: f32[2,64,32], index: 10, kind: output, shape index: {}]
  %s11 = sld [smem:[#allocation0]]
  $region73: #{_lambda_.4} parent=0
    _
  %s13 = ssub.s32 1, %s11
  %s14 = scalar_select 0, %s13, %s11
  loop: start=0, step=1, limit=4
  $region2: #{_lambda_.4} parent=0 // loop_pre_header
    _
  $region3: #{_lambda_.4} parent=0 // loop_header
    %s16 = sphi 0, %s20
    %p17 = scmp.ge.s32.totalorder %s16, 4
    %s26 = sphi 0, %s28
    %s29 = sphi 0, %s26
    %s30 = sphi 0, %s29
    %s46 = sphi 0, %s30
    %s50 = sphi 0, %s50
    %s52 = sphi 0, %s50
    %s53 = sphi 0, %s52
    %s67 = sphi 0, %s53
    %s71 = sphi 0, %s71
    %s73 = sphi 0, %s71
    %s74 = sphi 0, %s73
    %s88 = sphi 0, %s74
    %s92 = sphi 0, %s92
    %s94 = sphi 0, %s92
    %s95 = sphi 0, %s94
    %s109 = sphi 0, %s95
    %s113 = sphi 0, %s113
    %s115 = sphi 0, %s113
    %s116 = sphi 0, %s115
    %s130 = sphi 0, %s116
    %s134 = sphi 0, %s134
    %s136 = sphi 0, %s134
    %s137 = sphi 0, %s136
    %s151 = sphi 0, %s137
    %s155 = sphi 0, %s155
    %s157 = sphi 0, %s155
    %s158 = sphi 0, %s157
    %s172 = sphi 0, %s158
    %s176 = sphi 0, %s176
    %s178 = sphi 0, %s176
    %s179 = sphi 0, %s178
    %s193 = sphi 0, %s179
    %s197 = sphi 0, %s197
    %s199 = sphi 0, %s197
    %s200 = sphi 0, %s199
    %s214 = sphi 0, %s200
    %s218 = sphi 0, %s218
    %s220 = sphi 0, %s218
    %s221 = sphi 0, %s220
    %s235 = sphi 0, %s221
    %s241 = sphi 0, %s243
    %s244 = sphi 0, %s241
    %s245 = sphi 0, %s244
    %s261 = sphi 0, %s245
  $region4: #{_lambda_.4} parent=0 // loop_header_branch
    %19 = sbr.rel (%p17) target = $region8
  $region5: #{_lambda_.4} parent=0 // loop_body
    %s21 = ssub.s32 %s16, 1
    %s22 = ssub.s32 %s16, 2
    %s23 = sadd.s32 %s16, 1
    %s24 = ssub.s32 %s16, %s23
    %p25 = scmp.eq.s32.totalorder %s24, 0
    %s27 = sadd.s32 %s26, 1
    %s28 = scalar_select %p25, %s26, %s27
    %p31 = pneg %p25
    %p32 = scmp.eq.s32.totalorder %s16, 1
    %p33 = por %p31, %p32
    %p34 = scmp.ne.s32.totalorder %s26, %s29
    %p35 = scmp.eq.s32.totalorder %s16, 0
    %p36 = por %p34, %p35
    %p37 = scmp.ne.s32.totalorder %s26, %s29
    %p38 = scmp.eq.s32.totalorder %s21, 1
    %p39 = por %p37, %p38
    %p40 = scmp.ne.s32.totalorder %s29, %s30
    %p41 = scmp.eq.s32.totalorder %s21, 0
    %p42 = por %p40, %p41
    %p43 = scmp.ne.s32.totalorder %s29, %s30
    %p44 = scmp.eq.s32.totalorder %s22, 1
    %p45 = por %p43, %p44
    %p47 = scmp.ne.s32.totalorder %s30, %s46
    %p48 = scmp.eq.s32.totalorder %s22, 0
    %p49 = por %p47, %p48
    %s51 = sadd.s32 %s50, 1
    %p54 = scmp.eq.s32.totalorder %s16, 1
    %p55 = scmp.ne.s32.totalorder %s50, %s52
    %p56 = scmp.eq.s32.totalorder %s16, 0
    %p57 = por %p55, %p56
    %p58 = scmp.ne.s32.totalorder %s50, %s52
    %p59 = scmp.eq.s32.totalorder %s21, 1
    %p60 = por %p58, %p59
    %p61 = scmp.ne.s32.totalorder %s52, %s53
    %p62 = scmp.eq.s32.totalorder %s21, 0
    %p63 = por %p61, %p62
    %p64 = scmp.ne.s32.totalorder %s52, %s53
    %p65 = scmp.eq.s32.totalorder %s22, 1
    %p66 = por %p64, %p65
    %p68 = scmp.ne.s32.totalorder %s53, %s67
    %p69 = scmp.eq.s32.totalorder %s22, 0
    %p70 = por %p68, %p69
    %s72 = sadd.s32 %s71, 1
    %p75 = scmp.eq.s32.totalorder %s16, 1
    %p76 = scmp.ne.s32.totalorder %s71, %s73
    %p77 = scmp.eq.s32.totalorder %s16, 0
    %p78 = por %p76, %p77
    %p79 = scmp.ne.s32.totalorder %s71, %s73
    %p80 = scmp.eq.s32.totalorder %s21, 1
    %p81 = por %p79, %p80
    %p82 = scmp.ne.s32.totalorder %s73, %s74
    %p83 = scmp.eq.s32.totalorder %s21, 0
    %p84 = por %p82, %p83
    %p85 = scmp.ne.s32.totalorder %s73, %s74
    %p86 = scmp.eq.s32.totalorder %s22, 1
    %p87 = por %p85, %p86
    %p89 = scmp.ne.s32.totalorder %s74, %s88
    %p90 = scmp.eq.s32.totalorder %s22, 0
    %p91 = por %p89, %p90
    %s93 = sadd.s32 %s92, 1
    %p96 = scmp.eq.s32.totalorder %s16, 1
    %p97 = scmp.ne.s32.totalorder %s92, %s94
    %p98 = scmp.eq.s32.totalorder %s16, 0
    %p99 = por %p97, %p98
    %p100 = scmp.ne.s32.totalorder %s92, %s94
    %p101 = scmp.eq.s32.totalorder %s21, 1
    %p102 = por %p100, %p101
    %p103 = scmp.ne.s32.totalorder %s94, %s95
    %p104 = scmp.eq.s32.totalorder %s21, 0
    %p105 = por %p103, %p104
    %p106 = scmp.ne.s32.totalorder %s94, %s95
    %p107 = scmp.eq.s32.totalorder %s22, 1
    %p108 = por %p106, %p107
    %p110 = scmp.ne.s32.totalorder %s95, %s109
    %p111 = scmp.eq.s32.totalorder %s22, 0
    %p112 = por %p110, %p111
    %s114 = sadd.s32 %s113, 1
    %p117 = scmp.eq.s32.totalorder %s16, 1
    %p118 = scmp.ne.s32.totalorder %s113, %s115
    %p119 = scmp.eq.s32.totalorder %s16, 0
    %p120 = por %p118, %p119
    %p121 = scmp.ne.s32.totalorder %s113, %s115
    %p122 = scmp.eq.s32.totalorder %s21, 1
    %p123 = por %p121, %p122
    %p124 = scmp.ne.s32.totalorder %s115, %s116
    %p125 = scmp.eq.s32.totalorder %s21, 0
    %p126 = por %p124, %p125
    %p127 = scmp.ne.s32.totalorder %s115, %s116
    %p128 = scmp.eq.s32.totalorder %s22, 1
    %p129 = por %p127, %p128
    %p131 = scmp.ne.s32.totalorder %s116, %s130
    %p132 = scmp.eq.s32.totalorder %s22, 0
    %p133 = por %p131, %p132
    %s135 = sadd.s32 %s134, 1
    %p138 = scmp.eq.s32.totalorder %s16, 1
    %p139 = scmp.ne.s32.totalorder %s134, %s136
    %p140 = scmp.eq.s32.totalorder %s16, 0
    %p141 = por %p139, %p140
    %p142 = scmp.ne.s32.totalorder %s134, %s136
    %p143 = scmp.eq.s32.totalorder %s21, 1
    %p144 = por %p142, %p143
    %p145 = scmp.ne.s32.totalorder %s136, %s137
    %p146 = scmp.eq.s32.totalorder %s21, 0
    %p147 = por %p145, %p146
    %p148 = scmp.ne.s32.totalorder %s136, %s137
    %p149 = scmp.eq.s32.totalorder %s22, 1
    %p150 = por %p148, %p149
    %p152 = scmp.ne.s32.totalorder %s137, %s151
    %p153 = scmp.eq.s32.totalorder %s22, 0
    %p154 = por %p152, %p153
    %s156 = sadd.s32 %s155, 1
    %p159 = scmp.eq.s32.totalorder %s16, 1
    %p160 = scmp.ne.s32.totalorder %s155, %s157
    %p161 = scmp.eq.s32.totalorder %s16, 0
    %p162 = por %p160, %p161
    %p163 = scmp.ne.s32.totalorder %s155, %s157
    %p164 = scmp.eq.s32.totalorder %s21, 1
    %p165 = por %p163, %p164
    %p166 = scmp.ne.s32.totalorder %s157, %s158
    %p167 = scmp.eq.s32.totalorder %s21, 0
    %p168 = por %p166, %p167
    %p169 = scmp.ne.s32.totalorder %s157, %s158
    %p170 = scmp.eq.s32.totalorder %s22, 1
    %p171 = por %p169, %p170
    %p173 = scmp.ne.s32.totalorder %s158, %s172
    %p174 = scmp.eq.s32.totalorder %s22, 0
    %p175 = por %p173, %p174
    %s177 = sadd.s32 %s176, 1
    %p180 = scmp.eq.s32.totalorder %s16, 1
    %p181 = scmp.ne.s32.totalorder %s176, %s178
    %p182 = scmp.eq.s32.totalorder %s16, 0
    %p183 = por %p181, %p182
    %p184 = scmp.ne.s32.totalorder %s176, %s178
    %p185 = scmp.eq.s32.totalorder %s21, 1
    %p186 = por %p184, %p185
    %p187 = scmp.ne.s32.totalorder %s178, %s179
    %p188 = scmp.eq.s32.totalorder %s21, 0
    %p189 = por %p187, %p188
    %p190 = scmp.ne.s32.totalorder %s178, %s179
    %p191 = scmp.eq.s32.totalorder %s22, 1
    %p192 = por %p190, %p191
    %p194 = scmp.ne.s32.totalorder %s179, %s193
    %p195 = scmp.eq.s32.totalorder %s22, 0
    %p196 = por %p194, %p195
    %s198 = sadd.s32 %s197, 1
    %p201 = scmp.eq.s32.totalorder %s16, 1
    %p202 = scmp.ne.s32.totalorder %s197, %s199
    %p203 = scmp.eq.s32.totalorder %s16, 0
    %p204 = por %p202, %p203
    %p205 = scmp.ne.s32.totalorder %s197, %s199
    %p206 = scmp.eq.s32.totalorder %s21, 1
    %p207 = por %p205, %p206
    %p208 = scmp.ne.s32.totalorder %s199, %s200
    %p209 = scmp.eq.s32.totalorder %s21, 0
    %p210 = por %p208, %p209
    %p211 = scmp.ne.s32.totalorder %s199, %s200
    %p212 = scmp.eq.s32.totalorder %s22, 1
    %p213 = por %p211, %p212
    %p215 = scmp.ne.s32.totalorder %s200, %s214
    %p216 = scmp.eq.s32.totalorder %s22, 0
    %p217 = por %p215, %p216
    %s219 = sadd.s32 %s218, 1
    %p222 = scmp.eq.s32.totalorder %s16, 1
    %p223 = scmp.ne.s32.totalorder %s218, %s220
    %p224 = scmp.eq.s32.totalorder %s16, 0
    %p225 = por %p223, %p224
    %p226 = scmp.ne.s32.totalorder %s218, %s220
    %p227 = scmp.eq.s32.totalorder %s21, 1
    %p228 = por %p226, %p227
    %p229 = scmp.ne.s32.totalorder %s220, %s221
    %p230 = scmp.eq.s32.totalorder %s21, 0
    %p231 = por %p229, %p230
    %p232 = scmp.ne.s32.totalorder %s220, %s221
    %p233 = scmp.eq.s32.totalorder %s22, 1
    %p234 = por %p232, %p233
    %p236 = scmp.ne.s32.totalorder %s221, %s235
    %p237 = scmp.eq.s32.totalorder %s22, 0
    %p238 = por %p236, %p237
    %s239 = ssub.s32 %s16, %s23
    %p240 = scmp.eq.s32.totalorder %s239, 0
    %s242 = sadd.s32 %s241, 1
    %s243 = scalar_select %p240, %s241, %s242
    %p246 = pneg %p240
    %p247 = scmp.eq.s32.totalorder %s16, 1
    %p248 = por %p246, %p247
    %p249 = scmp.ne.s32.totalorder %s241, %s244
    %p250 = scmp.eq.s32.totalorder %s16, 0
    %p251 = por %p249, %p250
    %p252 = scmp.ne.s32.totalorder %s241, %s244
    %p253 = scmp.eq.s32.totalorder %s21, 1
    %p254 = por %p252, %p253
    %p255 = scmp.ne.s32.totalorder %s244, %s245
    %p256 = scmp.eq.s32.totalorder %s21, 0
    %p257 = por %p255, %p256
    %p258 = scmp.ne.s32.totalorder %s244, %s245
    %p259 = scmp.eq.s32.totalorder %s22, 1
    %p260 = por %p258, %p259
    %p262 = scmp.ne.s32.totalorder %s245, %s261
    %p263 = scmp.eq.s32.totalorder %s22, 0
    %p264 = por %p262, %p263
    %p265 = scmp.le.s32.totalorder 1, %s16
    %p266 = scmp.lt.s32.totalorder %s16, 3
    %p267 = pnand %p265, %p266
    %p268 = pneg %p267
    // Predicated region
    $region9: #{_lambda_.4} parent=5 // pred_check
      _
    $region10: #{_lambda_.4} parent=5 // pred_check_branch
      %270 = sbr.rel (%p267) target = $region12
    $region11: #{_lambda_.4} parent=5 // pred_region
      %s271 = ssub.s32 %s16, 1
      // Predicated region
      $region13: #{_lambda_.4} parent=11 // pred_check
        %p272 = pneg %p63
      $region14: #{_lambda_.4} parent=11 // pred_check_branch
        %274 = sbr.rel (%p272) target = $region16
      $region15: #{_lambda_.4} parent=11 // pred_region
        _
      $region16: #{_lambda_.4} parent=11 // pred_fallthru
        _
      // Predicated region
      $region17: #{_lambda_.4} parent=11 // pred_check
        %p275 = pneg %p84
      $region18: #{_lambda_.4} parent=11 // pred_check_branch
        %277 = sbr.rel (%p275) target = $region20
      $region19: #{_lambda_.4} parent=11 // pred_region
        _
      $region20: #{_lambda_.4} parent=11 // pred_fallthru
        _
      // Predicated region
      $region21: #{_lambda_.4} parent=11 // pred_check
        %p278 = pneg %p105
      $region22: #{_lambda_.4} parent=11 // pred_check_branch
        %280 = sbr.rel (%p278) target = $region24
      $region23: #{_lambda_.4} parent=11 // pred_region
        _
      $region24: #{_lambda_.4} parent=11 // pred_fallthru
        _
      // Predicated region
      $region25: #{_lambda_.4} parent=11 // pred_check
        %p281 = pneg %p126
      $region26: #{_lambda_.4} parent=11 // pred_check_branch
        %283 = sbr.rel (%p281) target = $region28
      $region27: #{_lambda_.4} parent=11 // pred_region
        _
      $region28: #{_lambda_.4} parent=11 // pred_fallthru
        _
      // Predicated region
      $region29: #{_lambda_.4} parent=11 // pred_check
        %p284 = pneg %p147
      $region30: #{_lambda_.4} parent=11 // pred_check_branch
        %286 = sbr.rel (%p284) target = $region32
      $region31: #{_lambda_.4} parent=11 // pred_region
        _
      $region32: #{_lambda_.4} parent=11 // pred_fallthru
        _
      // Predicated region
      $region33: #{_lambda_.4} parent=11 // pred_check
        %p287 = pneg %p168
      $region34: #{_lambda_.4} parent=11 // pred_check_branch
        %289 = sbr.rel (%p287) target = $region36
      $region35: #{_lambda_.4} parent=11 // pred_region
        _
      $region36: #{_lambda_.4} parent=11 // pred_fallthru
        _
      // Predicated region
      $region37: #{_lambda_.4} parent=11 // pred_check
        %p290 = pneg %p189
      $region38: #{_lambda_.4} parent=11 // pred_check_branch
        %292 = sbr.rel (%p290) target = $region40
      $region39: #{_lambda_.4} parent=11 // pred_region
        _
      $region40: #{_lambda_.4} parent=11 // pred_fallthru
        _
      // Predicated region
      $region41: #{_lambda_.4} parent=11 // pred_check
        %p293 = pneg %p210
      $region42: #{_lambda_.4} parent=11 // pred_check_branch
        %295 = sbr.rel (%p293) target = $region44
      $region43: #{_lambda_.4} parent=11 // pred_region
        _
      $region44: #{_lambda_.4} parent=11 // pred_fallthru
        _
      // Predicated region
      $region45: #{_lambda_.4} parent=11 // pred_check
        %p296 = pneg %p231
      $region46: #{_lambda_.4} parent=11 // pred_check_branch
        %298 = sbr.rel (%p296) target = $region48
      $region47: #{_lambda_.4} parent=11 // pred_region
        _
      $region48: #{_lambda_.4} parent=11 // pred_fallthru
        _
    $region12: #{_lambda_.4} parent=5 // pred_fallthru
      _
    %p299 = scmp.lt.s32.totalorder %s16, 2
    // Predicated region
    $region49: #{_lambda_.4} parent=5 // pred_check
      %p300 = pneg %p299
    $region50: #{_lambda_.4} parent=5 // pred_check_branch
      %302 = sbr.rel (%p300) target = $region52
    $region51: #{_lambda_.4} parent=5 // pred_region
      // Predicated region
      $region53: #{_lambda_.4} parent=51 // pred_check
        %p303 = pneg %p36
      $region54: #{_lambda_.4} parent=51 // pred_check_branch
        %305 = sbr.rel (%p303) target = $region56
      $region55: #{_lambda_.4} parent=51 // pred_region
        %p306 = scmp.lt.s32.totalorder %s16, 1
        %s307 = scalar_select %p306, %s16, 1
        %s308 = smul.addr %s307, 8
        %s309 = smul.addr %s308, 8
        %s310 = scalar_lea.vmem %s0, %s309
      $region56: #{_lambda_.4} parent=51 // pred_fallthru
        _
    $region52: #{_lambda_.4} parent=5 // pred_fallthru
      _
    %p311 = scmp.le.s32.totalorder 1, %s16
    %p312 = scmp.lt.s32.totalorder %s16, 3
    %p313 = pnand %p311, %p312
    %p314 = pneg %p313
    // Predicated region
    $region57: #{_lambda_.4} parent=5 // pred_check
      _
    $region58: #{_lambda_.4} parent=5 // pred_check_branch
      %316 = sbr.rel (%p313) target = $region60
    $region59: #{_lambda_.4} parent=5 // pred_region
      %s317 = ssub.s32 %s16, 1
      %p318 = scmp.lt.s32.totalorder %s21, 1
      %s319 = scalar_select %p318, %s21, 1
      %s320 = smul.addr %s319, 8
      %s321 = smul.addr %s320, 8
      %s322 = scalar_lea.vmem %s0, %s321
      %p323 = pneg %p42
      %p324 = pneg %p39
      %p325 = pneg %p63
      %p326 = pneg %p60
      %p327 = pneg %p84
      %p328 = pneg %p81
      %p329 = pneg %p105
      %p330 = pneg %p102
      %p331 = pneg %p126
      %p332 = pneg %p123
      %p333 = pneg %p147
      %p334 = pneg %p144
      %p335 = pneg %p168
      %p336 = pneg %p165
      %p337 = pneg %p189
      %p338 = pneg %p186
      %p339 = pneg %p210
      %p340 = pneg %p207
      %p341 = pneg %p231
      %p342 = pneg %p228
      %p343 = pneg %p257
      %p344 = pneg %p254
      %p345 = scmp.lt.s32.totalorder %s21, 1
      %s346 = scalar_select %p345, %s21, 1
      %s347 = smul.addr %s346, 8
      %s348 = smul.addr %s347, 8
      %s349 = scalar_lea.vmem %s10, %s348
      %p350 = scmp.lt.s32.totalorder %s21, 1
      %s351 = scalar_select %p350, %s21, 1
      %s352 = smul.addr %s351, 8
      %s353 = smul.addr %s352, 8
      %s354 = scalar_lea.vmem %s0, %s353
      %p355 = scmp.lt.s32.totalorder %s21, 1
      %s356 = scalar_select %p355, %s21, 1
      %s357 = smul.addr %s356, 8
      %s358 = smul.addr %s357, 8
      %s359 = scalar_lea.vmem %s10, %s358
      %v360 = vld [vmem:[%s354] sm:$0xff]
      %v361 = vld [vmem:[%s354 + $0x8] sm:$0xff]
      %v362 = vld [vmem:[%s354 + $0x10] sm:$0xff]
      %v363 = vld [vmem:[%s354 + $0x18] sm:$0xff]
      %v364 = vld [vmem:[%s354 + $0x20] sm:$0xff]
      %v365 = vld [vmem:[%s354 + $0x28] sm:$0xff]
      %v366 = vld [vmem:[%s354 + $0x30] sm:$0xff]
      %v367 = vld [vmem:[%s354 + $0x38] sm:$0xff]
      %v368 = vld [vmem:[%s1] sm:$0xff]
      %v369 = vld [vmem:[%s1 + $0x8] sm:$0xff]
      %v370 = vld [vmem:[%s1 + $0x10] sm:$0xff]
      %v371 = vld [vmem:[%s1 + $0x18] sm:$0xff]
      %v372 = vld [vmem:[%s2] sm:$0x1]
      %v374 = vlaneseq
      %v375 = vshrl.u32 %v374, 7
      %v376 = vsub.s32 0, %v375
      %v377 = vrot.slane %v372, %v376
      %vm379 = vcmask 261120
      %v381 = vsel %vm379, %v360, 0
      %v384 = vsel %vm379, %v361, 0
      %v387 = vsel %vm379, %v362, 0
      %v390 = vsel %vm379, %v363, 0
      %v393 = vsel %vm379, %v364, 0
      %v396 = vsel %vm379, %v365, 0
      %v399 = vsel %vm379, %v366, 0
      %v402 = vsel %vm379, %v367, 0
      %404 = vmatprep.subr.mxu0 0.0
      %405 = vmatpush1.msra.mxu0 %v368
      %406 = vmatprep.subr.mxu0 0.0
      %407 = vmatpush1.msra.mxu0 %v369
      %408 = vmatprep.subr.mxu0 0.0
      %409 = vmatpush1.msra.mxu0 %v370
      %410 = vmatprep.subr.mxu0 0.0
      %411 = vmatpush1.msra.mxu0 %v371
      %412 = vmatprep.subr.mxu0 0.0
      %413 = vmatpush1.msra.mxu0 0.0
      %414 = vmatprep.subr.mxu0 0.0
      %415 = vmatpush1.msra.mxu0 0.0
      %416 = vmatprep.subr.mxu0 0.0
      %417 = vmatpush1.msra.mxu0 0.0
      %418 = vmatprep.subr.mxu0 0.0
      %419 = vmatpush1.msra.mxu0 0.0
      %420 = vmatprep.subr.mxu0 0.0
      %421 = vmatpush1.msra.mxu0 0.0
      %422 = vmatprep.subr.mxu0 0.0
      %423 = vmatpush1.msra.mxu0 0.0
      %424 = vmatprep.subr.mxu0 0.0
      %425 = vmatpush1.msra.mxu0 0.0
      %426 = vmatprep.subr.mxu0 0.0
      %427 = vmatpush1.msra.mxu0 0.0
      %428 = vmatprep.subr.mxu0 0.0
      %429 = vmatpush1.msra.mxu0 0.0
      %430 = vmatprep.subr.mxu0 0.0
      %431 = vmatpush1.msra.mxu0 0.0
      %432 = vmatprep.subr.mxu0 0.0
      %433 = vmatpush1.msra.mxu0 0.0
      %434 = vmatprep.subr.mxu0 0.0
      %435 = vmatpush1.msra.mxu0 0.0
      %436 = vmatprep.subr.mxu0 0.0
      %437 = vmatpush1.msra.mxu0 0.0
      %438 = vmatprep.subr.mxu0 0.0
      %439 = vmatpush1.msra.mxu0 0.0
      %440 = vmatprep.subr.mxu0 0.0
      %441 = vmatpush1.msra.mxu0 0.0
      %442 = vmatprep.subr.mxu0 0.0
      %443 = vmatpush1.msra.mxu0 0.0
      %444 = vmatprep.subr.mxu0 0.0
      %445 = vmatpush1.msra.mxu0 0.0
      %446 = vmatprep.subr.mxu0 0.0
      %447 = vmatpush1.msra.mxu0 0.0
      %448 = vmatprep.subr.mxu0 0.0
      %449 = vmatpush1.msra.mxu0 0.0
      %450 = vmatprep.subr.mxu0 0.0
      %451 = vmatpush1.msra.mxu0 0.0
      %452 = vmatprep.subr.mxu0 0.0
      %453 = vmatpush1.msra.mxu0 0.0
      %454 = vmatprep.subr.mxu0 0.0
      %455 = vmatpush1.msra.mxu0 0.0
      %456 = vmatprep.subr.mxu0 0.0
      %457 = vmatpush1.msra.mxu0 0.0
      %458 = vmatprep.subr.mxu0 0.0
      %459 = vmatpush1.msra.mxu0 0.0
      %460 = vmatprep.subr.mxu0 0.0
      %461 = vmatpush1.msra.mxu0 0.0
      %462 = vmatprep.subr.mxu0 0.0
      %463 = vmatpush1.msra.mxu0 0.0
      %464 = vmatprep.subr.mxu0 0.0
      %465 = vmatpush1.msra.mxu0 0.0
      %466 = vmatprep.subr.mxu0 0.0
      %467 = vmatpush1.msra.mxu0 0.0
      %468 = vmatprep.mubr.f32.mxu0 0.0
      %469 = vmatmul.mubr.f32.gmra.mrb[0].mxu0 %v381
      %v470 = vpop.f32.mrb[0].mxu0
      %v471 = vadd.f32 %v377, %v470
      %v472 = vpop.f32.mrb[0].mxu0
      %473 = vmatprep.mubr.f32.mxu0 0.0
      %474 = vmatmul.mubr.f32.gmra.mrb[0].mxu0 %v384
      %v475 = vpop.f32.mrb[0].mxu0
      %v476 = vadd.f32 %v377, %v475
      %v477 = vpop.f32.mrb[0].mxu0
      %478 = vmatprep.mubr.f32.mxu0 0.0
      %479 = vmatmul.mubr.f32.gmra.mrb[0].mxu0 %v387
      %v480 = vpop.f32.mrb[0].mxu0
      %v481 = vadd.f32 %v377, %v480
      %v482 = vpop.f32.mrb[0].mxu0
      %483 = vmatprep.mubr.f32.mxu0 0.0
      %484 = vmatmul.mubr.f32.gmra.mrb[0].mxu0 %v390
      %v485 = vpop.f32.mrb[0].mxu0
      %v486 = vadd.f32 %v377, %v485
      %v487 = vpop.f32.mrb[0].mxu0
      %488 = vmatprep.mubr.f32.mxu0 0.0
      %489 = vmatmul.mubr.f32.gmra.mrb[0].mxu0 %v393
      %v490 = vpop.f32.mrb[0].mxu0
      %v491 = vadd.f32 %v377, %v490
      %v492 = vpop.f32.mrb[0].mxu0
      %493 = vmatprep.mubr.f32.mxu0 0.0
      %494 = vmatmul.mubr.f32.gmra.mrb[0].mxu0 %v396
      %v495 = vpop.f32.mrb[0].mxu0
      %v496 = vadd.f32 %v377, %v495
      %v497 = vpop.f32.mrb[0].mxu0
      %498 = vmatprep.mubr.f32.mxu0 0.0
      %499 = vmatmul.mubr.f32.gmra.mrb[0].mxu0 %v399
      %v500 = vpop.f32.mrb[0].mxu0
      %v501 = vadd.f32 %v377, %v500
      %v502 = vpop.f32.mrb[0].mxu0
      %503 = vmatprep.mubr.f32.mxu0 0.0
      %504 = vmatmul.mubr.f32.gmra.mrb[0].mxu0 %v402
      %v505 = vpop.f32.mrb[0].mxu0
      %v506 = vadd.f32 %v377, %v505
      %v507 = vpop.f32.mrb[0].mxu0
      %508 = vdwg.mxu0
      %s509 = scalar_lea.vmem %s1, 32
      %v510 = vld [vmem:[%s509] sm:$0xff]
      %v511 = vld [vmem:[%s509 + $0x8] sm:$0xff]
      %v512 = vld [vmem:[%s509 + $0x10] sm:$0xff]
      %v513 = vld [vmem:[%s509 + $0x18] sm:$0xff]
      %s514 = scalar_lea.vmem %s2, 1
      %v515 = vld [vmem:[%s514] sm:$0x1]
      %v517 = vlaneseq
      %v518 = vshrl.u32 %v517, 7
      %v519 = vsub.s32 0, %v518
      %v520 = vrot.slane %v515, %v519
      %522 = vmatprep.subr.mxu0 0.0
      %523 = vmatpush1.msra.mxu0 %v510
      %524 = vmatprep.subr.mxu0 0.0
      %525 = vmatpush1.msra.mxu0 %v511
      %526 = vmatprep.subr.mxu0 0.0
      %527 = vmatpush1.msra.mxu0 %v512
      %528 = vmatprep.subr.mxu0 0.0
      %529 = vmatpush1.msra.mxu0 %v513
      %530 = vmatprep.subr.mxu0 0.0
      %531 = vmatpush1.msra.mxu0 0.0
      %532 = vmatprep.subr.mxu0 0.0
      %533 = vmatpush1.msra.mxu0 0.0
      %534 = vmatprep.subr.mxu0 0.0
      %535 = vmatpush1.msra.mxu0 0.0
      %536 = vmatprep.subr.mxu0 0.0
      %537 = vmatpush1.msra.mxu0 0.0
      %538 = vmatprep.subr.mxu0 0.0
      %539 = vmatpush1.msra.mxu0 0.0
      %540 = vmatprep.subr.mxu0 0.0
      %541 = vmatpush1.msra.mxu0 0.0
      %542 = vmatprep.subr.mxu0 0.0
      %543 = vmatpush1.msra.mxu0 0.0
      %544 = vmatprep.subr.mxu0 0.0
      %545 = vmatpush1.msra.mxu0 0.0
      %546 = vmatprep.subr.mxu0 0.0
      %547 = vmatpush1.msra.mxu0 0.0
      %548 = vmatprep.subr.mxu0 0.0
      %549 = vmatpush1.msra.mxu0 0.0
      %550 = vmatprep.subr.mxu0 0.0
      %551 = vmatpush1.msra.mxu0 0.0
      %552 = vmatprep.subr.mxu0 0.0
      %553 = vmatpush1.msra.mxu0 0.0
      %554 = vmatprep.subr.mxu0 0.0
      %555 = vmatpush1.msra.mxu0 0.0
      %556 = vmatprep.subr.mxu0 0.0
      %557 = vmatpush1.msra.mxu0 0.0
      %558 = vmatprep.subr.mxu0 0.0
      %559 = vmatpush1.msra.mxu0 0.0
      %560 = vmatprep.subr.mxu0 0.0
      %561 = vmatpush1.msra.mxu0 0.0
      %562 = vmatprep.subr.mxu0 0.0
      %563 = vmatpush1.msra.mxu0 0.0
      %564 = vmatprep.subr.mxu0 0.0
      %565 = vmatpush1.msra.mxu0 0.0
      %566 = vmatprep.subr.mxu0 0.0
      %567 = vmatpush1.msra.mxu0 0.0
      %568 = vmatprep.subr.mxu0 0.0
      %569 = vmatpush1.msra.mxu0 0.0
      %570 = vmatprep.subr.mxu0 0.0
      %571 = vmatpush1.msra.mxu0 0.0
      %572 = vmatprep.subr.mxu0 0.0
      %573 = vmatpush1.msra.mxu0 0.0
      %574 = vmatprep.subr.mxu0 0.0
      %575 = vmatpush1.msra.mxu0 0.0
      %576 = vmatprep.subr.mxu0 0.0
      %577 = vmatpush1.msra.mxu0 0.0
      %578 = vmatprep.subr.mxu0 0.0
      %579 = vmatpush1.msra.mxu0 0.0
      %580 = vmatprep.subr.mxu0 0.0
      %581 = vmatpush1.msra.mxu0 0.0
      %582 = vmatprep.subr.mxu0 0.0
      %583 = vmatpush1.msra.mxu0 0.0
      %584 = vmatprep.subr.mxu0 0.0
      %585 = vmatpush1.msra.mxu0 0.0
      %586 = vmatprep.mubr.f32.mxu0 0.0
      %587 = vmatmul.mubr.f32.gmra.mrb[0].mxu0 %v381
      %v588 = vpop.f32.mrb[0].mxu0
      %v589 = vadd.f32 %v520, %v588
      %v590 = vpop.f32.mrb[0].mxu0
      %591 = vmatprep.mubr.f32.mxu0 0.0
      %592 = vmatmul.mubr.f32.gmra.mrb[0].mxu0 %v384
      %v593 = vpop.f32.mrb[0].mxu0
      %v594 = vadd.f32 %v520, %v593
      %v595 = vpop.f32.mrb[0].mxu0
      %596 = vmatprep.mubr.f32.mxu0 0.0
      %597 = vmatmul.mubr.f32.gmra.mrb[0].mxu0 %v387
      %v598 = vpop.f32.mrb[0].mxu0
      %v599 = vadd.f32 %v520, %v598
      %v600 = vpop.f32.mrb[0].mxu0
      %601 = vmatprep.mubr.f32.mxu0 0.0
      %602 = vmatmul.mubr.f32.gmra.mrb[0].mxu0 %v390
      %v603 = vpop.f32.mrb[0].mxu0
      %v604 = vadd.f32 %v520, %v603
      %v605 = vpop.f32.mrb[0].mxu0
      %606 = vmatprep.mubr.f32.mxu0 0.0
      %607 = vmatmul.mubr.f32.gmra.mrb[0].mxu0 %v393
      %v608 = vpop.f32.mrb[0].mxu0
      %v609 = vadd.f32 %v520, %v608
      %v610 = vpop.f32.mrb[0].mxu0
      %611 = vmatprep.mubr.f32.mxu0 0.0
      %612 = vmatmul.mubr.f32.gmra.mrb[0].mxu0 %v396
      %v613 = vpop.f32.mrb[0].mxu0
      %v614 = vadd.f32 %v520, %v613
      %v615 = vpop.f32.mrb[0].mxu0
      %616 = vmatprep.mubr.f32.mxu0 0.0
      %617 = vmatmul.mubr.f32.gmra.mrb[0].mxu0 %v399
      %v618 = vpop.f32.mrb[0].mxu0
      %v619 = vadd.f32 %v520, %v618
      %v620 = vpop.f32.mrb[0].mxu0
      %621 = vmatprep.mubr.f32.mxu0 0.0
      %622 = vmatmul.mubr.f32.gmra.mrb[0].mxu0 %v402
      %v623 = vpop.f32.mrb[0].mxu0
      %v624 = vadd.f32 %v520, %v623
      %v625 = vpop.f32.mrb[0].mxu0
      %626 = vdwg.mxu0
      %s627 = scalar_lea.vmem %s1, 64
      %v628 = vld [vmem:[%s627] sm:$0xff]
      %v629 = vld [vmem:[%s627 + $0x8] sm:$0xff]
      %v630 = vld [vmem:[%s627 + $0x10] sm:$0xff]
      %v631 = vld [vmem:[%s627 + $0x18] sm:$0xff]
      %s632 = scalar_lea.vmem %s2, 2
      %v633 = vld [vmem:[%s632] sm:$0x1]
      %v635 = vlaneseq
      %v636 = vshrl.u32 %v635, 7
      %v637 = vsub.s32 0, %v636
      %v638 = vrot.slane %v633, %v637
      %640 = vmatprep.subr.mxu0 0.0
      %641 = vmatpush1.msra.mxu0 %v628
      %642 = vmatprep.subr.mxu0 0.0
      %643 = vmatpush1.msra.mxu0 %v629
      %644 = vmatprep.subr.mxu0 0.0
      %645 = vmatpush1.msra.mxu0 %v630
      %646 = vmatprep.subr.mxu0 0.0
      %647 = vmatpush1.msra.mxu0 %v631
      %648 = vmatprep.subr.mxu0 0.0
      %649 = vmatpush1.msra.mxu0 0.0
      %650 = vmatprep.subr.mxu0 0.0
      %651 = vmatpush1.msra.mxu0 0.0
      %652 = vmatprep.subr.mxu0 0.0
      %653 = vmatpush1.msra.mxu0 0.0
      %654 = vmatprep.subr.mxu0 0.0
      %655 = vmatpush1.msra.mxu0 0.0
      %656 = vmatprep.subr.mxu0 0.0
      %657 = vmatpush1.msra.mxu0 0.0
      %658 = vmatprep.subr.mxu0 0.0
      %659 = vmatpush1.msra.mxu0 0.0
      %660 = vmatprep.subr.mxu0 0.0
      %661 = vmatpush1.msra.mxu0 0.0
      %662 = vmatprep.subr.mxu0 0.0
      %663 = vmatpush1.msra.mxu0 0.0
      %664 = vmatprep.subr.mxu0 0.0
      %665 = vmatpush1.msra.mxu0 0.0
      %666 = vmatprep.subr.mxu0 0.0
      %667 = vmatpush1.msra.mxu0 0.0
      %668 = vmatprep.subr.mxu0 0.0
      %669 = vmatpush1.msra.mxu0 0.0
      %670 = vmatprep.subr.mxu0 0.0
      %671 = vmatpush1.msra.mxu0 0.0
      %672 = vmatprep.subr.mxu0 0.0
      %673 = vmatpush1.msra.mxu0 0.0
      %674 = vmatprep.subr.mxu0 0.0
      %675 = vmatpush1.msra.mxu0 0.0
      %676 = vmatprep.subr.mxu0 0.0
      %677 = vmatpush1.msra.mxu0 0.0
      %678 = vmatprep.subr.mxu0 0.0
      %679 = vmatpush1.msra.mxu0 0.0
      %680 = vmatprep.subr.mxu0 0.0
      %681 = vmatpush1.msra.mxu0 0.0
      %682 = vmatprep.subr.mxu0 0.0
      %683 = vmatpush1.msra.mxu0 0.0
      %684 = vmatprep.subr.mxu0 0.0
      %685 = vmatpush1.msra.mxu0 0.0
      %686 = vmatprep.subr.mxu0 0.0
      %687 = vmatpush1.msra.mxu0 0.0
      %688 = vmatprep.subr.mxu0 0.0
      %689 = vmatpush1.msra.mxu0 0.0
      %690 = vmatprep.subr.mxu0 0.0
      %691 = vmatpush1.msra.mxu0 0.0
      %692 = vmatprep.subr.mxu0 0.0
      %693 = vmatpush1.msra.mxu0 0.0
      %694 = vmatprep.subr.mxu0 0.0
      %695 = vmatpush1.msra.mxu0 0.0
      %696 = vmatprep.subr.mxu0 0.0
      %697 = vmatpush1.msra.mxu0 0.0
      %698 = vmatprep.subr.mxu0 0.0
      %699 = vmatpush1.msra.mxu0 0.0
      %700 = vmatprep.subr.mxu0 0.0
      %701 = vmatpush1.msra.mxu0 0.0
      %702 = vmatprep.subr.mxu0 0.0
      %703 = vmatpush1.msra.mxu0 0.0
      %704 = vmatprep.mubr.f32.mxu0 0.0
      %705 = vmatmul.mubr.f32.gmra.mrb[0].mxu0 %v381
      %v706 = vpop.f32.mrb[0].mxu0
      %v707 = vadd.f32 %v638, %v706
      %v708 = vpop.f32.mrb[0].mxu0
      %709 = vmatprep.mubr.f32.mxu0 0.0
      %710 = vmatmul.mubr.f32.gmra.mrb[0].mxu0 %v384
      %v711 = vpop.f32.mrb[0].mxu0
      %v712 = vadd.f32 %v638, %v711
      %v713 = vpop.f32.mrb[0].mxu0
      %714 = vmatprep.mubr.f32.mxu0 0.0
      %715 = vmatmul.mubr.f32.gmra.mrb[0].mxu0 %v387
      %v716 = vpop.f32.mrb[0].mxu0
      %v717 = vadd.f32 %v638, %v716
      %v718 = vpop.f32.mrb[0].mxu0
      %719 = vmatprep.mubr.f32.mxu0 0.0
      %720 = vmatmul.mubr.f32.gmra.mrb[0].mxu0 %v390
      %v721 = vpop.f32.mrb[0].mxu0
      %v722 = vadd.f32 %v638, %v721
      %v723 = vpop.f32.mrb[0].mxu0
      %724 = vmatprep.mubr.f32.mxu0 0.0
      %725 = vmatmul.mubr.f32.gmra.mrb[0].mxu0 %v393
      %v726 = vpop.f32.mrb[0].mxu0
      %v727 = vadd.f32 %v638, %v726
      %v728 = vpop.f32.mrb[0].mxu0
      %729 = vmatprep.mubr.f32.mxu0 0.0
      %730 = vmatmul.mubr.f32.gmra.mrb[0].mxu0 %v396
      %v731 = vpop.f32.mrb[0].mxu0
      %v732 = vadd.f32 %v638, %v731
      %v733 = vpop.f32.mrb[0].mxu0
      %734 = vmatprep.mubr.f32.mxu0 0.0
      %735 = vmatmul.mubr.f32.gmra.mrb[0].mxu0 %v399
      %v736 = vpop.f32.mrb[0].mxu0
      %v737 = vadd.f32 %v638, %v736
      %v738 = vpop.f32.mrb[0].mxu0
      %739 = vmatprep.mubr.f32.mxu0 0.0
      %740 = vmatmul.mubr.f32.gmra.mrb[0].mxu0 %v402
      %v741 = vpop.f32.mrb[0].mxu0
      %v742 = vadd.f32 %v638, %v741
      %v743 = vpop.f32.mrb[0].mxu0
      %744 = vdwg.mxu0
      %v745 = vld [vmem:[%s3] sm:$0xff]
      %v746 = vld [vmem:[%s3 + $0x8] sm:$0xff]
      %v747 = vld [vmem:[%s3 + $0x10] sm:$0xff]
      %v748 = vld [vmem:[%s3 + $0x18] sm:$0xff]
      %v749 = vld [vmem:[%s3 + $0x20] sm:$0xff]
      %v750 = vld [vmem:[%s3 + $0x28] sm:$0xff]
      %v751 = vld [vmem:[%s3 + $0x30] sm:$0xff]
      %v752 = vld [vmem:[%s3 + $0x38] sm:$0xff]
      %vm753 = vcmask 64512
      %v755 = vsel %vm753, %v471, 0
      %v758 = vsel %vm753, %v476, 0
      %v761 = vsel %vm753, %v589, 0
      %v764 = vsel %vm753, %v594, 0
      %766 = vmatprep.subr.mxu0 0.0
      %767 = vmatpush1.xpose.msra.mxu0 %v761
      %768 = vmatprep.subr.mxu0 0.0
      %769 = vmatpush1.xpose.msra.mxu0 %v764
      %770 = vmatprep.subr.mxu0 0.0
      %771 = vmatpush1.xpose.msra.mxu0 0.0
      %772 = vmatprep.subr.mxu0 0.0
      %773 = vmatpush1.xpose.msra.mxu0 0.0
      %774 = vmatprep.subr.mxu0 0.0
      %775 = vmatpush1.xpose.msra.mxu0 0.0
      %776 = vmatprep.subr.mxu0 0.0
      %777 = vmatpush1.xpose.msra.mxu0 0.0
      %778 = vmatprep.subr.mxu0 0.0
      %779 = vmatpush1.xpose.msra.mxu0 0.0
      %780 = vmatprep.subr.mxu0 0.0
      %781 = vmatpush1.xpose.msra.mxu0 0.0
      %782 = vmatprep.subr.mxu0 0.0
      %783 = vmatpush1.xpose.msra.mxu0 0.0
      %784 = vmatprep.subr.mxu0 0.0
      %785 = vmatpush1.xpose.msra.mxu0 0.0
      %786 = vmatprep.subr.mxu0 0.0
      %787 = vmatpush1.xpose.msra.mxu0 0.0
      %788 = vmatprep.subr.mxu0 0.0
      %789 = vmatpush1.xpose.msra.mxu0 0.0
      %790 = vmatprep.subr.mxu0 0.0
      %791 = vmatpush1.xpose.msra.mxu0 0.0
      %792 = vmatprep.subr.mxu0 0.0
      %793 = vmatpush1.xpose.msra.mxu0 0.0
      %794 = vmatprep.subr.mxu0 0.0
      %795 = vmatpush1.xpose.msra.mxu0 0.0
      %796 = vmatprep.subr.mxu0 0.0
      %797 = vmatpush1.xpose.msra.mxu0 0.0
      %798 = vmatprep.subr.mxu0 0.0
      %799 = vmatpush1.xpose.msra.mxu0 0.0
      %800 = vmatprep.subr.mxu0 0.0
      %801 = vmatpush1.xpose.msra.mxu0 0.0
      %802 = vmatprep.subr.mxu0 0.0
      %803 = vmatpush1.xpose.msra.mxu0 0.0
      %804 = vmatprep.subr.mxu0 0.0
      %805 = vmatpush1.xpose.msra.mxu0 0.0
      %806 = vmatprep.subr.mxu0 0.0
      %807 = vmatpush1.xpose.msra.mxu0 0.0
      %808 = vmatprep.subr.mxu0 0.0
      %809 = vmatpush1.xpose.msra.mxu0 0.0
      %810 = vmatprep.subr.mxu0 0.0
      %811 = vmatpush1.xpose.msra.mxu0 0.0
      %812 = vmatprep.subr.mxu0 0.0
      %813 = vmatpush1.xpose.msra.mxu0 0.0
      %814 = vmatprep.subr.mxu0 0.0
      %815 = vmatpush1.xpose.msra.mxu0 0.0
      %816 = vmatprep.subr.mxu0 0.0
      %817 = vmatpush1.xpose.msra.mxu0 0.0
      %818 = vmatprep.subr.mxu0 0.0
      %819 = vmatpush1.xpose.msra.mxu0 0.0
      %820 = vmatprep.subr.mxu0 0.0
      %821 = vmatpush1.xpose.msra.mxu0 0.0
      %822 = vmatprep.subr.mxu0 0.0
      %823 = vmatpush1.xpose.msra.mxu0 0.0
      %824 = vmatprep.subr.mxu0 0.0
      %825 = vmatpush1.xpose.msra.mxu0 0.0
      %826 = vmatprep.subr.mxu0 0.0
      %827 = vmatpush1.xpose.msra.mxu0 0.0
      %828 = vmatprep.subr.mxu0 0.0
      %829 = vmatpush1.xpose.msra.mxu0 0.0
      %830 = vmatprep.mubr.f32.mxu0 0.0
      %831 = vmatmul.mubr.f32.gmra.mrb[0].mxu0 %v755
      %v832 = vpop.f32.mrb[0].mxu0
      %v833 = vadd.f32 0.0, %v832
      %v834 = vpop.f32.mrb[0].mxu0
      %835 = vmatprep.mubr.f32.mxu0 0.0
      %836 = vmatmul.mubr.f32.gmra.mrb[0].mxu0 %v758
      %v837 = vpop.f32.mrb[0].mxu0
      %v838 = vadd.f32 0.0, %v837
      %v839 = vpop.f32.mrb[0].mxu0
      %840 = vdwg.mxu0
      %v842 = vsel %vm753, %v481, 0
      %v845 = vsel %vm753, %v486, 0
      %v848 = vsel %vm753, %v599, 0
      %v851 = vsel %vm753, %v604, 0
      %853 = vmatprep.subr.mxu0 0.0
      %854 = vmatpush1.xpose.msra.mxu0 %v848
      %855 = vmatprep.subr.mxu0 0.0
      %856 = vmatpush1.xpose.msra.mxu0 %v851
      %857 = vmatprep.subr.mxu0 0.0
      %858 = vmatpush1.xpose.msra.mxu0 0.0
      %859 = vmatprep.subr.mxu0 0.0
      %860 = vmatpush1.xpose.msra.mxu0 0.0
      %861 = vmatprep.subr.mxu0 0.0
      %862 = vmatpush1.xpose.msra.mxu0 0.0
      %863 = vmatprep.subr.mxu0 0.0
      %864 = vmatpush1.xpose.msra.mxu0 0.0
      %865 = vmatprep.subr.mxu0 0.0
      %866 = vmatpush1.xpose.msra.mxu0 0.0
      %867 = vmatprep.subr.mxu0 0.0
      %868 = vmatpush1.xpose.msra.mxu0 0.0
      %869 = vmatprep.subr.mxu0 0.0
      %870 = vmatpush1.xpose.msra.mxu0 0.0
      %871 = vmatprep.subr.mxu0 0.0
      %872 = vmatpush1.xpose.msra.mxu0 0.0
      %873 = vmatprep.subr.mxu0 0.0
      %874 = vmatpush1.xpose.msra.mxu0 0.0
      %875 = vmatprep.subr.mxu0 0.0
      %876 = vmatpush1.xpose.msra.mxu0 0.0
      %877 = vmatprep.subr.mxu0 0.0
      %878 = vmatpush1.xpose.msra.mxu0 0.0
      %879 = vmatprep.subr.mxu0 0.0
      %880 = vmatpush1.xpose.msra.mxu0 0.0
      %881 = vmatprep.subr.mxu0 0.0
      %882 = vmatpush1.xpose.msra.mxu0 0.0
      %883 = vmatprep.subr.mxu0 0.0
      %884 = vmatpush1.xpose.msra.mxu0 0.0
      %885 = vmatprep.subr.mxu0 0.0
      %886 = vmatpush1.xpose.msra.mxu0 0.0
      %887 = vmatprep.subr.mxu0 0.0
      %888 = vmatpush1.xpose.msra.mxu0 0.0
      %889 = vmatprep.subr.mxu0 0.0
      %890 = vmatpush1.xpose.msra.mxu0 0.0
      %891 = vmatprep.subr.mxu0 0.0
      %892 = vmatpush1.xpose.msra.mxu0 0.0
      %893 = vmatprep.subr.mxu0 0.0
      %894 = vmatpush1.xpose.msra.mxu0 0.0
      %895 = vmatprep.subr.mxu0 0.0
      %896 = vmatpush1.xpose.msra.mxu0 0.0
      %897 = vmatprep.subr.mxu0 0.0
      %898 = vmatpush1.xpose.msra.mxu0 0.0
      %899 = vmatprep.subr.mxu0 0.0
      %900 = vmatpush1.xpose.msra.mxu0 0.0
      %901 = vmatprep.subr.mxu0 0.0
      %902 = vmatpush1.xpose.msra.mxu0 0.0
      %903 = vmatprep.subr.mxu0 0.0
      %904 = vmatpush1.xpose.msra.mxu0 0.0
      %905 = vmatprep.subr.mxu0 0.0
      %906 = vmatpush1.xpose.msra.mxu0 0.0
      %907 = vmatprep.subr.mxu0 0.0
      %908 = vmatpush1.xpose.msra.mxu0 0.0
      %909 = vmatprep.subr.mxu0 0.0
      %910 = vmatpush1.xpose.msra.mxu0 0.0
      %911 = vmatprep.subr.mxu0 0.0
      %912 = vmatpush1.xpose.msra.mxu0 0.0
      %913 = vmatprep.subr.mxu0 0.0
      %914 = vmatpush1.xpose.msra.mxu0 0.0
      %915 = vmatprep.subr.mxu0 0.0
      %916 = vmatpush1.xpose.msra.mxu0 0.0
      %917 = vmatprep.mubr.f32.mxu0 0.0
      %918 = vmatmul.mubr.f32.gmra.mrb[0].mxu0 %v842
      %v919 = vpop.f32.mrb[0].mxu0
      %v920 = vadd.f32 0.0, %v919
      %v921 = vpop.f32.mrb[0].mxu0
      %922 = vmatprep.mubr.f32.mxu0 0.0
      %923 = vmatmul.mubr.f32.gmra.mrb[0].mxu0 %v845
      %v924 = vpop.f32.mrb[0].mxu0
      %v925 = vadd.f32 0.0, %v924
      %v926 = vpop.f32.mrb[0].mxu0
      %927 = vdwg.mxu0
      %v929 = vsel %vm753, %v491, 0
      %v932 = vsel %vm753, %v496, 0
      %v935 = vsel %vm753, %v609, 0
      %v938 = vsel %vm753, %v614, 0
      %940 = vmatprep.subr.mxu0 0.0
      %941 = vmatpush1.xpose.msra.mxu0 %v935
      %942 = vmatprep.subr.mxu0 0.0
      %943 = vmatpush1.xpose.msra.mxu0 %v938
      %944 = vmatprep.subr.mxu0 0.0
      %945 = vmatpush1.xpose.msra.mxu0 0.0
      %946 = vmatprep.subr.mxu0 0.0
      %947 = vmatpush1.xpose.msra.mxu0 0.0
      %948 = vmatprep.subr.mxu0 0.0
      %949 = vmatpush1.xpose.msra.mxu0 0.0
      %950 = vmatprep.subr.mxu0 0.0
      %951 = vmatpush1.xpose.msra.mxu0 0.0
      %952 = vmatprep.subr.mxu0 0.0
      %953 = vmatpush1.xpose.msra.mxu0 0.0
      %954 = vmatprep.subr.mxu0 0.0
      %955 = vmatpush1.xpose.msra.mxu0 0.0
      %956 = vmatprep.subr.mxu0 0.0
      %957 = vmatpush1.xpose.msra.mxu0 0.0
      %958 = vmatprep.subr.mxu0 0.0
      %959 = vmatpush1.xpose.msra.mxu0 0.0
      %960 = vmatprep.subr.mxu0 0.0
      %961 = vmatpush1.xpose.msra.mxu0 0.0
      %962 = vmatprep.subr.mxu0 0.0
      %963 = vmatpush1.xpose.msra.mxu0 0.0
      %964 = vmatprep.subr.mxu0 0.0
      %965 = vmatpush1.xpose.msra.mxu0 0.0
      %966 = vmatprep.subr.mxu0 0.0
      %967 = vmatpush1.xpose.msra.mxu0 0.0
      %968 = vmatprep.subr.mxu0 0.0
      %969 = vmatpush1.xpose.msra.mxu0 0.0
      %970 = vmatprep.subr.mxu0 0.0
      %971 = vmatpush1.xpose.msra.mxu0 0.0
      %972 = vmatprep.subr.mxu0 0.0
      %973 = vmatpush1.xpose.msra.mxu0 0.0
      %974 = vmatprep.subr.mxu0 0.0
      %975 = vmatpush1.xpose.msra.mxu0 0.0
      %976 = vmatprep.subr.mxu0 0.0
      %977 = vmatpush1.xpose.msra.mxu0 0.0
      %978 = vmatprep.subr.mxu0 0.0
      %979 = vmatpush1.xpose.msra.mxu0 0.0
      %980 = vmatprep.subr.mxu0 0.0
      %981 = vmatpush1.xpose.msra.mxu0 0.0
      %982 = vmatprep.subr.mxu0 0.0
      %983 = vmatpush1.xpose.msra.mxu0 0.0
      %984 = vmatprep.subr.mxu0 0.0
      %985 = vmatpush1.xpose.msra.mxu0 0.0
      %986 = vmatprep.subr.mxu0 0.0
      %987 = vmatpush1.xpose.msra.mxu0 0.0
      %988 = vmatprep.subr.mxu0 0.0
      %989 = vmatpush1.xpose.msra.mxu0 0.0
      %990 = vmatprep.subr.mxu0 0.0
      %991 = vmatpush1.xpose.msra.mxu0 0.0
      %992 = vmatprep.subr.mxu0 0.0
      %993 = vmatpush1.xpose.msra.mxu0 0.0
      %994 = vmatprep.subr.mxu0 0.0
      %995 = vmatpush1.xpose.msra.mxu0 0.0
      %996 = vmatprep.subr.mxu0 0.0
      %997 = vmatpush1.xpose.msra.mxu0 0.0
      %998 = vmatprep.subr.mxu0 0.0
      %999 = vmatpush1.xpose.msra.mxu0 0.0
      %1000 = vmatprep.subr.mxu0 0.0
      %1001 = vmatpush1.xpose.msra.mxu0 0.0
      %1002 = vmatprep.subr.mxu0 0.0
      %1003 = vmatpush1.xpose.msra.mxu0 0.0
      %1004 = vmatprep.mubr.f32.mxu0 0.0
      %1005 = vmatmul.mubr.f32.gmra.mrb[0].mxu0 %v929
      %v1006 = vpop.f32.mrb[0].mxu0
      %v1007 = vadd.f32 0.0, %v1006
      %v1008 = vpop.f32.mrb[0].mxu0
      %1009 = vmatprep.mubr.f32.mxu0 0.0
      %1010 = vmatmul.mubr.f32.gmra.mrb[0].mxu0 %v932
      %v1011 = vpop.f32.mrb[0].mxu0
      %v1012 = vadd.f32 0.0, %v1011
      %v1013 = vpop.f32.mrb[0].mxu0
      %1014 = vdwg.mxu0
      %v1016 = vsel %vm753, %v501, 0
      %v1019 = vsel %vm753, %v506, 0
      %v1022 = vsel %vm753, %v619, 0
      %v1025 = vsel %vm753, %v624, 0
      %1027 = vmatprep.subr.mxu0 0.0
      %1028 = vmatpush1.xpose.msra.mxu0 %v1022
      %1029 = vmatprep.subr.mxu0 0.0
      %1030 = vmatpush1.xpose.msra.mxu0 %v1025
      %1031 = vmatprep.subr.mxu0 0.0
      %1032 = vmatpush1.xpose.msra.mxu0 0.0
      %1033 = vmatprep.subr.mxu0 0.0
      %1034 = vmatpush1.xpose.msra.mxu0 0.0
      %1035 = vmatprep.subr.mxu0 0.0
      %1036 = vmatpush1.xpose.msra.mxu0 0.0
      %1037 = vmatprep.subr.mxu0 0.0
      %1038 = vmatpush1.xpose.msra.mxu0 0.0
      %1039 = vmatprep.subr.mxu0 0.0
      %1040 = vmatpush1.xpose.msra.mxu0 0.0
      %1041 = vmatprep.subr.mxu0 0.0
      %1042 = vmatpush1.xpose.msra.mxu0 0.0
      %1043 = vmatprep.subr.mxu0 0.0
      %1044 = vmatpush1.xpose.msra.mxu0 0.0
      %1045 = vmatprep.subr.mxu0 0.0
      %1046 = vmatpush1.xpose.msra.mxu0 0.0
      %1047 = vmatprep.subr.mxu0 0.0
      %1048 = vmatpush1.xpose.msra.mxu0 0.0
      %1049 = vmatprep.subr.mxu0 0.0
      %1050 = vmatpush1.xpose.msra.mxu0 0.0
      %1051 = vmatprep.subr.mxu0 0.0
      %1052 = vmatpush1.xpose.msra.mxu0 0.0
      %1053 = vmatprep.subr.mxu0 0.0
      %1054 = vmatpush1.xpose.msra.mxu0 0.0
      %1055 = vmatprep.subr.mxu0 0.0
      %1056 = vmatpush1.xpose.msra.mxu0 0.0
      %1057 = vmatprep.subr.mxu0 0.0
      %1058 = vmatpush1.xpose.msra.mxu0 0.0
      %1059 = vmatprep.subr.mxu0 0.0
      %1060 = vmatpush1.xpose.msra.mxu0 0.0
      %1061 = vmatprep.subr.mxu0 0.0
      %1062 = vmatpush1.xpose.msra.mxu0 0.0
      %1063 = vmatprep.subr.mxu0 0.0
      %1064 = vmatpush1.xpose.msra.mxu0 0.0
      %1065 = vmatprep.subr.mxu0 0.0
      %1066 = vmatpush1.xpose.msra.mxu0 0.0
      %1067 = vmatprep.subr.mxu0 0.0
      %1068 = vmatpush1.xpose.msra.mxu0 0.0
      %1069 = vmatprep.subr.mxu0 0.0
      %1070 = vmatpush1.xpose.msra.mxu0 0.0
      %1071 = vmatprep.subr.mxu0 0.0
      %1072 = vmatpush1.xpose.msra.mxu0 0.0
      %1073 = vmatprep.subr.mxu0 0.0
      %1074 = vmatpush1.xpose.msra.mxu0 0.0
      %1075 = vmatprep.subr.mxu0 0.0
      %1076 = vmatpush1.xpose.msra.mxu0 0.0
      %1077 = vmatprep.subr.mxu0 0.0
      %1078 = vmatpush1.xpose.msra.mxu0 0.0
      %1079 = vmatprep.subr.mxu0 0.0
      %1080 = vmatpush1.xpose.msra.mxu0 0.0
      %1081 = vmatprep.subr.mxu0 0.0
      %1082 = vmatpush1.xpose.msra.mxu0 0.0
      %1083 = vmatprep.subr.mxu0 0.0
      %1084 = vmatpush1.xpose.msra.mxu0 0.0
      %1085 = vmatprep.subr.mxu0 0.0
      %1086 = vmatpush1.xpose.msra.mxu0 0.0
      %1087 = vmatprep.subr.mxu0 0.0
      %1088 = vmatpush1.xpose.msra.mxu0 0.0
      %1089 = vmatprep.subr.mxu0 0.0
      %1090 = vmatpush1.xpose.msra.mxu0 0.0
      %1091 = vmatprep.mubr.f32.mxu0 0.0
      %1092 = vmatmul.mubr.f32.gmra.mrb[0].mxu0 %v1016
      %v1093 = vpop.f32.mrb[0].mxu0
      %v1094 = vadd.f32 0.0, %v1093
      %v1095 = vpop.f32.mrb[0].mxu0
      %1096 = vmatprep.mubr.f32.mxu0 0.0
      %1097 = vmatmul.mubr.f32.gmra.mrb[0].mxu0 %v1019
      %v1098 = vpop.f32.mrb[0].mxu0
      %v1099 = vadd.f32 0.0, %v1098
      %v1100 = vpop.f32.mrb[0].mxu0
      %1101 = vdwg.mxu0
      %v1102 = vmul.f32 %v833, 0.35355338
      %v1103 = vmul.f32 %v838, 0.35355338
      %v1104 = vmul.f32 %v920, 0.35355338
      %v1105 = vmul.f32 %v925, 0.35355338
      %v1106 = vmul.f32 %v1007, 0.35355338
      %v1107 = vmul.f32 %v1012, 0.35355338
      %v1108 = vmul.f32 %v1094, 0.35355338
      %v1109 = vmul.f32 %v1099, 0.35355338
      %v1110 = vadd.f32 %v1102, %v745
      %v1111 = vadd.f32 %v1103, %v746
      %v1112 = vadd.f32 %v1104, %v747
      %v1113 = vadd.f32 %v1105, %v748
      %v1114 = vadd.f32 %v1106, %v749
      %v1115 = vadd.f32 %v1107, %v750
      %v1116 = vadd.f32 %v1108, %v751
      %v1117 = vadd.f32 %v1109, %v752
      %vm1118 = vcmask 130048
      %v1119 = vsel %vm1118, %v1110, -inf
      %1120 = vmax.xlane.f32.xlu0 %v1119
      %v1121 = vpop.xlane.xlu0 %1120
      %v1122 = vsel %vm1118, %v1111, -inf
      %1123 = vmax.xlane.f32.xlu0 %v1122
      %v1124 = vpop.xlane.xlu0 %1123
      %v1125 = vsel %vm1118, %v1112, -inf
      %1126 = vmax.xlane.f32.xlu0 %v1125
      %v1127 = vpop.xlane.xlu0 %1126
      %v1128 = vsel %vm1118, %v1113, -inf
      %1129 = vmax.xlane.f32.xlu0 %v1128
      %v1130 = vpop.xlane.xlu0 %1129
      %v1131 = vsel %vm1118, %v1114, -inf
      %1132 = vmax.xlane.f32.xlu0 %v1131
      %v1133 = vpop.xlane.xlu0 %1132
      %v1134 = vsel %vm1118, %v1115, -inf
      %1135 = vmax.xlane.f32.xlu0 %v1134
      %v1136 = vpop.xlane.xlu0 %1135
      %v1137 = vsel %vm1118, %v1116, -inf
      %1138 = vmax.xlane.f32.xlu0 %v1137
      %v1139 = vpop.xlane.xlu0 %1138
      %v1140 = vsel %vm1118, %v1117, -inf
      %1141 = vmax.xlane.f32.xlu0 %v1140
      %v1142 = vpop.xlane.xlu0 %1141
      %v1143 = vsub.f32 %v1110, %v1121
      %v1144 = vsub.f32 %v1111, %v1124
      %v1145 = vsub.f32 %v1112, %v1127
      %v1146 = vsub.f32 %v1113, %v1130
      %v1147 = vsub.f32 %v1114, %v1133
      %v1148 = vsub.f32 %v1115, %v1136
      %v1149 = vsub.f32 %v1116, %v1139
      %v1150 = vsub.f32 %v1117, %v1142
      %v1151 = vmul.f32 %v1143, 1.442695
      %v1152 = vpow.pop %v1151
      %v1153 = vmul.f32 %v1144, 1.442695
      %v1154 = vpow.pop %v1153
      %v1155 = vmul.f32 %v1145, 1.442695
      %v1156 = vpow.pop %v1155
      %v1157 = vmul.f32 %v1146, 1.442695
      %v1158 = vpow.pop %v1157
      %v1159 = vmul.f32 %v1147, 1.442695
      %v1160 = vpow.pop %v1159
      %v1161 = vmul.f32 %v1148, 1.442695
      %v1162 = vpow.pop %v1161
      %v1163 = vmul.f32 %v1149, 1.442695
      %v1164 = vpow.pop %v1163
      %v1165 = vmul.f32 %v1150, 1.442695
      %v1166 = vpow.pop %v1165
      %v1167 = vsel %vm1118, %v1152, 0.0
      %1168 = vadd.xlane.f32.xlu0 %v1167
      %v1169 = vpop.xlane.xlu0 %1168
      %v1170 = vsel %vm1118, %v1154, 0.0
      %1171 = vadd.xlane.f32.xlu0 %v1170
      %v1172 = vpop.xlane.xlu0 %1171
      %v1173 = vsel %vm1118, %v1156, 0.0
      %1174 = vadd.xlane.f32.xlu0 %v1173
      %v1175 = vpop.xlane.xlu0 %1174
      %v1176 = vsel %vm1118, %v1158, 0.0
      %1177 = vadd.xlane.f32.xlu0 %v1176
      %v1178 = vpop.xlane.xlu0 %1177
      %v1179 = vsel %vm1118, %v1160, 0.0
      %1180 = vadd.xlane.f32.xlu0 %v1179
      %v1181 = vpop.xlane.xlu0 %1180
      %v1182 = vsel %vm1118, %v1162, 0.0
      %1183 = vadd.xlane.f32.xlu0 %v1182
      %v1184 = vpop.xlane.xlu0 %1183
      %v1185 = vsel %vm1118, %v1164, 0.0
      %1186 = vadd.xlane.f32.xlu0 %v1185
      %v1187 = vpop.xlane.xlu0 %1186
      %v1188 = vsel %vm1118, %v1166, 0.0
      %1189 = vadd.xlane.f32.xlu0 %v1188
      %v1190 = vpop.xlane.xlu0 %1189
      %v1191 = vrcp.pop %v1169
      %v1192 = vrcp.pop %v1172
      %v1193 = vrcp.pop %v1175
      %v1194 = vrcp.pop %v1178
      %v1195 = vrcp.pop %v1181
      %v1196 = vrcp.pop %v1184
      %v1197 = vrcp.pop %v1187
      %v1198 = vrcp.pop %v1190
      %v1199 = vmul.f32 %v1152, %v1191
      %v1200 = vmul.f32 %v1154, %v1192
      %v1201 = vmul.f32 %v1156, %v1193
      %v1202 = vmul.f32 %v1158, %v1194
      %v1203 = vmul.f32 %v1160, %v1195
      %v1204 = vmul.f32 %v1162, %v1196
      %v1205 = vmul.f32 %v1164, %v1197
      %v1206 = vmul.f32 %v1166, %v1198
      %v1208 = vsel %vm1118, %v1199, 0
      %v1211 = vsel %vm1118, %v1200, 0
      %1213 = vmatprep.subr.mxu0 0.0
      %1214 = vmatpush1.msra.mxu0 %v707
      %1215 = vmatprep.subr.mxu0 0.0
      %1216 = vmatpush1.msra.mxu0 %v712
      %1217 = vmatprep.subr.mxu0 0.0
      %1218 = vmatpush1.msra.mxu0 0.0
      %1219 = vmatprep.subr.mxu0 0.0
      %1220 = vmatpush1.msra.mxu0 0.0
      %1221 = vmatprep.subr.mxu0 0.0
      %1222 = vmatpush1.msra.mxu0 0.0
      %1223 = vmatprep.subr.mxu0 0.0
      %1224 = vmatpush1.msra.mxu0 0.0
      %1225 = vmatprep.subr.mxu0 0.0
      %1226 = vmatpush1.msra.mxu0 0.0
      %1227 = vmatprep.subr.mxu0 0.0
      %1228 = vmatpush1.msra.mxu0 0.0
      %1229 = vmatprep.subr.mxu0 0.0
      %1230 = vmatpush1.msra.mxu0 0.0
      %1231 = vmatprep.subr.mxu0 0.0
      %1232 = vmatpush1.msra.mxu0 0.0
      %1233 = vmatprep.subr.mxu0 0.0
      %1234 = vmatpush1.msra.mxu0 0.0
      %1235 = vmatprep.subr.mxu0 0.0
      %1236 = vmatpush1.msra.mxu0 0.0
      %1237 = vmatprep.subr.mxu0 0.0
      %1238 = vmatpush1.msra.mxu0 0.0
      %1239 = vmatprep.subr.mxu0 0.0
      %1240 = vmatpush1.msra.mxu0 0.0
      %1241 = vmatprep.subr.mxu0 0.0
      %1242 = vmatpush1.msra.mxu0 0.0
      %1243 = vmatprep.subr.mxu0 0.0
      %1244 = vmatpush1.msra.mxu0 0.0
      %1245 = vmatprep.subr.mxu0 0.0
      %1246 = vmatpush1.msra.mxu0 0.0
      %1247 = vmatprep.subr.mxu0 0.0
      %1248 = vmatpush1.msra.mxu0 0.0
      %1249 = vmatprep.subr.mxu0 0.0
      %1250 = vmatpush1.msra.mxu0 0.0
      %1251 = vmatprep.subr.mxu0 0.0
      %1252 = vmatpush1.msra.mxu0 0.0
      %1253 = vmatprep.subr.mxu0 0.0
      %1254 = vmatpush1.msra.mxu0 0.0
      %1255 = vmatprep.subr.mxu0 0.0
      %1256 = vmatpush1.msra.mxu0 0.0
      %1257 = vmatprep.subr.mxu0 0.0
      %1258 = vmatpush1.msra.mxu0 0.0
      %1259 = vmatprep.subr.mxu0 0.0
      %1260 = vmatpush1.msra.mxu0 0.0
      %1261 = vmatprep.subr.mxu0 0.0
      %1262 = vmatpush1.msra.mxu0 0.0
      %1263 = vmatprep.subr.mxu0 0.0
      %1264 = vmatpush1.msra.mxu0 0.0
      %1265 = vmatprep.subr.mxu0 0.0
      %1266 = vmatpush1.msra.mxu0 0.0
      %1267 = vmatprep.subr.mxu0 0.0
      %1268 = vmatpush1.msra.mxu0 0.0
      %1269 = vmatprep.subr.mxu0 0.0
      %1270 = vmatpush1.msra.mxu0 0.0
      %1271 = vmatprep.subr.mxu0 0.0
      %1272 = vmatpush1.msra.mxu0 0.0
      %1273 = vmatprep.subr.mxu0 0.0
      %1274 = vmatpush1.msra.mxu0 0.0
      %1275 = vmatprep.subr.mxu0 0.0
      %1276 = vmatpush1.msra.mxu0 0.0
      %1277 = vmatprep.mubr.f32.mxu0 0.0
      %1278 = vmatmul.mubr.f32.gmra.mrb[0].mxu0 %v1208
      %v1279 = vpop.f32.mrb[0].mxu0
      %v1280 = vadd.f32 0.0, %v1279
      %v1281 = vpop.f32.mrb[0].mxu0
      %1282 = vmatprep.mubr.f32.mxu0 0.0
      %1283 = vmatmul.mubr.f32.gmra.mrb[0].mxu0 %v1211
      %v1284 = vpop.f32.mrb[0].mxu0
      %v1285 = vadd.f32 0.0, %v1284
      %v1286 = vpop.f32.mrb[0].mxu0
      %1287 = vdwg.mxu0
      %v1289 = vsel %vm1118, %v1201, 0
      %v1292 = vsel %vm1118, %v1202, 0
      %1294 = vmatprep.subr.mxu0 0.0
      %1295 = vmatpush1.msra.mxu0 %v717
      %1296 = vmatprep.subr.mxu0 0.0
      %1297 = vmatpush1.msra.mxu0 %v722
      %1298 = vmatprep.subr.mxu0 0.0
      %1299 = vmatpush1.msra.mxu0 0.0
      %1300 = vmatprep.subr.mxu0 0.0
      %1301 = vmatpush1.msra.mxu0 0.0
      %1302 = vmatprep.subr.mxu0 0.0
      %1303 = vmatpush1.msra.mxu0 0.0
      %1304 = vmatprep.subr.mxu0 0.0
      %1305 = vmatpush1.msra.mxu0 0.0
      %1306 = vmatprep.subr.mxu0 0.0
      %1307 = vmatpush1.msra.mxu0 0.0
      %1308 = vmatprep.subr.mxu0 0.0
      %1309 = vmatpush1.msra.mxu0 0.0
      %1310 = vmatprep.subr.mxu0 0.0
      %1311 = vmatpush1.msra.mxu0 0.0
      %1312 = vmatprep.subr.mxu0 0.0
      %1313 = vmatpush1.msra.mxu0 0.0
      %1314 = vmatprep.subr.mxu0 0.0
      %1315 = vmatpush1.msra.mxu0 0.0
      %1316 = vmatprep.subr.mxu0 0.0
      %1317 = vmatpush1.msra.mxu0 0.0
      %1318 = vmatprep.subr.mxu0 0.0
      %1319 = vmatpush1.msra.mxu0 0.0
      %1320 = vmatprep.subr.mxu0 0.0
      %1321 = vmatpush1.msra.mxu0 0.0
      %1322 = vmatprep.subr.mxu0 0.0
      %1323 = vmatpush1.msra.mxu0 0.0
      %1324 = vmatprep.subr.mxu0 0.0
      %1325 = vmatpush1.msra.mxu0 0.0
      %1326 = vmatprep.subr.mxu0 0.0
      %1327 = vmatpush1.msra.mxu0 0.0
      %1328 = vmatprep.subr.mxu0 0.0
      %1329 = vmatpush1.msra.mxu0 0.0
      %1330 = vmatprep.subr.mxu0 0.0
      %1331 = vmatpush1.msra.mxu0 0.0
      %1332 = vmatprep.subr.mxu0 0.0
      %1333 = vmatpush1.msra.mxu0 0.0
      %1334 = vmatprep.subr.mxu0 0.0
      %1335 = vmatpush1.msra.mxu0 0.0
      %1336 = vmatprep.subr.mxu0 0.0
      %1337 = vmatpush1.msra.mxu0 0.0
      %1338 = vmatprep.subr.mxu0 0.0
      %1339 = vmatpush1.msra.mxu0 0.0
      %1340 = vmatprep.subr.mxu0 0.0
      %1341 = vmatpush1.msra.mxu0 0.0
      %1342 = vmatprep.subr.mxu0 0.0
      %1343 = vmatpush1.msra.mxu0 0.0
      %1344 = vmatprep.subr.mxu0 0.0
      %1345 = vmatpush1.msra.mxu0 0.0
      %1346 = vmatprep.subr.mxu0 0.0
      %1347 = vmatpush1.msra.mxu0 0.0
      %1348 = vmatprep.subr.mxu0 0.0
      %1349 = vmatpush1.msra.mxu0 0.0
      %1350 = vmatprep.subr.mxu0 0.0
      %1351 = vmatpush1.msra.mxu0 0.0
      %1352 = vmatprep.subr.mxu0 0.0
      %1353 = vmatpush1.msra.mxu0 0.0
      %1354 = vmatprep.subr.mxu0 0.0
      %1355 = vmatpush1.msra.mxu0 0.0
      %1356 = vmatprep.subr.mxu0 0.0
      %1357 = vmatpush1.msra.mxu0 0.0
      %1358 = vmatprep.mubr.f32.mxu0 0.0
      %1359 = vmatmul.mubr.f32.gmra.mrb[0].mxu0 %v1289
      %v1360 = vpop.f32.mrb[0].mxu0
      %v1361 = vadd.f32 0.0, %v1360
      %v1362 = vpop.f32.mrb[0].mxu0
      %1363 = vmatprep.mubr.f32.mxu0 0.0
      %1364 = vmatmul.mubr.f32.gmra.mrb[0].mxu0 %v1292
      %v1365 = vpop.f32.mrb[0].mxu0
      %v1366 = vadd.f32 0.0, %v1365
      %v1367 = vpop.f32.mrb[0].mxu0
      %1368 = vdwg.mxu0
      %v1370 = vsel %vm1118, %v1203, 0
      %v1373 = vsel %vm1118, %v1204, 0
      %1375 = vmatprep.subr.mxu0 0.0
      %1376 = vmatpush1.msra.mxu0 %v727
      %1377 = vmatprep.subr.mxu0 0.0
      %1378 = vmatpush1.msra.mxu0 %v732
      %1379 = vmatprep.subr.mxu0 0.0
      %1380 = vmatpush1.msra.mxu0 0.0
      %1381 = vmatprep.subr.mxu0 0.0
      %1382 = vmatpush1.msra.mxu0 0.0
      %1383 = vmatprep.subr.mxu0 0.0
      %1384 = vmatpush1.msra.mxu0 0.0
      %1385 = vmatprep.subr.mxu0 0.0
      %1386 = vmatpush1.msra.mxu0 0.0
      %1387 = vmatprep.subr.mxu0 0.0
      %1388 = vmatpush1.msra.mxu0 0.0
      %1389 = vmatprep.subr.mxu0 0.0
      %1390 = vmatpush1.msra.mxu0 0.0
      %1391 = vmatprep.subr.mxu0 0.0
      %1392 = vmatpush1.msra.mxu0 0.0
      %1393 = vmatprep.subr.mxu0 0.0
      %1394 = vmatpush1.msra.mxu0 0.0
      %1395 = vmatprep.subr.mxu0 0.0
      %1396 = vmatpush1.msra.mxu0 0.0
      %1397 = vmatprep.subr.mxu0 0.0
      %1398 = vmatpush1.msra.mxu0 0.0
      %1399 = vmatprep.subr.mxu0 0.0
      %1400 = vmatpush1.msra.mxu0 0.0
      %1401 = vmatprep.subr.mxu0 0.0
      %1402 = vmatpush1.msra.mxu0 0.0
      %1403 = vmatprep.subr.mxu0 0.0
      %1404 = vmatpush1.msra.mxu0 0.0
      %1405 = vmatprep.subr.mxu0 0.0
      %1406 = vmatpush1.msra.mxu0 0.0
      %1407 = vmatprep.subr.mxu0 0.0
      %1408 = vmatpush1.msra.mxu0 0.0
      %1409 = vmatprep.subr.mxu0 0.0
      %1410 = vmatpush1.msra.mxu0 0.0
      %1411 = vmatprep.subr.mxu0 0.0
      %1412 = vmatpush1.msra.mxu0 0.0
      %1413 = vmatprep.subr.mxu0 0.0
      %1414 = vmatpush1.msra.mxu0 0.0
      %1415 = vmatprep.subr.mxu0 0.0
      %1416 = vmatpush1.msra.mxu0 0.0
      %1417 = vmatprep.subr.mxu0 0.0
      %1418 = vmatpush1.msra.mxu0 0.0
      %1419 = vmatprep.subr.mxu0 0.0
      %1420 = vmatpush1.msra.mxu0 0.0
      %1421 = vmatprep.subr.mxu0 0.0
      %1422 = vmatpush1.msra.mxu0 0.0
      %1423 = vmatprep.subr.mxu0 0.0
      %1424 = vmatpush1.msra.mxu0 0.0
      %1425 = vmatprep.subr.mxu0 0.0
      %1426 = vmatpush1.msra.mxu0 0.0
      %1427 = vmatprep.subr.mxu0 0.0
      %1428 = vmatpush1.msra.mxu0 0.0
      %1429 = vmatprep.subr.mxu0 0.0
      %1430 = vmatpush1.msra.mxu0 0.0
      %1431 = vmatprep.subr.mxu0 0.0
      %1432 = vmatpush1.msra.mxu0 0.0
      %1433 = vmatprep.subr.mxu0 0.0
      %1434 = vmatpush1.msra.mxu0 0.0
      %1435 = vmatprep.subr.mxu0 0.0
      %1436 = vmatpush1.msra.mxu0 0.0
      %1437 = vmatprep.subr.mxu0 0.0
      %1438 = vmatpush1.msra.mxu0 0.0
      %1439 = vmatprep.mubr.f32.mxu0 0.0
      %1440 = vmatmul.mubr.f32.gmra.mrb[0].mxu0 %v1370
      %v1441 = vpop.f32.mrb[0].mxu0
      %v1442 = vadd.f32 0.0, %v1441
      %v1443 = vpop.f32.mrb[0].mxu0
      %1444 = vmatprep.mubr.f32.mxu0 0.0
      %1445 = vmatmul.mubr.f32.gmra.mrb[0].mxu0 %v1373
      %v1446 = vpop.f32.mrb[0].mxu0
      %v1447 = vadd.f32 0.0, %v1446
      %v1448 = vpop.f32.mrb[0].mxu0
      %1449 = vdwg.mxu0
      %v1451 = vsel %vm1118, %v1205, 0
      %v1454 = vsel %vm1118, %v1206, 0
      %1456 = vmatprep.subr.mxu0 0.0
      %1457 = vmatpush1.msra.mxu0 %v737
      %1458 = vmatprep.subr.mxu0 0.0
      %1459 = vmatpush1.msra.mxu0 %v742
      %1460 = vmatprep.subr.mxu0 0.0
      %1461 = vmatpush1.msra.mxu0 0.0
      %1462 = vmatprep.subr.mxu0 0.0
      %1463 = vmatpush1.msra.mxu0 0.0
      %1464 = vmatprep.subr.mxu0 0.0
      %1465 = vmatpush1.msra.mxu0 0.0
      %1466 = vmatprep.subr.mxu0 0.0
      %1467 = vmatpush1.msra.mxu0 0.0
      %1468 = vmatprep.subr.mxu0 0.0
      %1469 = vmatpush1.msra.mxu0 0.0
      %1470 = vmatprep.subr.mxu0 0.0
      %1471 = vmatpush1.msra.mxu0 0.0
      %1472 = vmatprep.subr.mxu0 0.0
      %1473 = vmatpush1.msra.mxu0 0.0
      %1474 = vmatprep.subr.mxu0 0.0
      %1475 = vmatpush1.msra.mxu0 0.0
      %1476 = vmatprep.subr.mxu0 0.0
      %1477 = vmatpush1.msra.mxu0 0.0
      %1478 = vmatprep.subr.mxu0 0.0
      %1479 = vmatpush1.msra.mxu0 0.0
      %1480 = vmatprep.subr.mxu0 0.0
      %1481 = vmatpush1.msra.mxu0 0.0
      %1482 = vmatprep.subr.mxu0 0.0
      %1483 = vmatpush1.msra.mxu0 0.0
      %1484 = vmatprep.subr.mxu0 0.0
      %1485 = vmatpush1.msra.mxu0 0.0
      %1486 = vmatprep.subr.mxu0 0.0
      %1487 = vmatpush1.msra.mxu0 0.0
      %1488 = vmatprep.subr.mxu0 0.0
      %1489 = vmatpush1.msra.mxu0 0.0
      %1490 = vmatprep.subr.mxu0 0.0
      %1491 = vmatpush1.msra.mxu0 0.0
      %1492 = vmatprep.subr.mxu0 0.0
      %1493 = vmatpush1.msra.mxu0 0.0
      %1494 = vmatprep.subr.mxu0 0.0
      %1495 = vmatpush1.msra.mxu0 0.0
      %1496 = vmatprep.subr.mxu0 0.0
      %1497 = vmatpush1.msra.mxu0 0.0
      %1498 = vmatprep.subr.mxu0 0.0
      %1499 = vmatpush1.msra.mxu0 0.0
      %1500 = vmatprep.subr.mxu0 0.0
      %1501 = vmatpush1.msra.mxu0 0.0
      %1502 = vmatprep.subr.mxu0 0.0
      %1503 = vmatpush1.msra.mxu0 0.0
      %1504 = vmatprep.subr.mxu0 0.0
      %1505 = vmatpush1.msra.mxu0 0.0
      %1506 = vmatprep.subr.mxu0 0.0
      %1507 = vmatpush1.msra.mxu0 0.0
      %1508 = vmatprep.subr.mxu0 0.0
      %1509 = vmatpush1.msra.mxu0 0.0
      %1510 = vmatprep.subr.mxu0 0.0
      %1511 = vmatpush1.msra.mxu0 0.0
      %1512 = vmatprep.subr.mxu0 0.0
      %1513 = vmatpush1.msra.mxu0 0.0
      %1514 = vmatprep.subr.mxu0 0.0
      %1515 = vmatpush1.msra.mxu0 0.0
      %1516 = vmatprep.subr.mxu0 0.0
      %1517 = vmatpush1.msra.mxu0 0.0
      %1518 = vmatprep.subr.mxu0 0.0
      %1519 = vmatpush1.msra.mxu0 0.0
      %1520 = vmatprep.mubr.f32.mxu0 0.0
      %1521 = vmatmul.mubr.f32.gmra.mrb[0].mxu0 %v1451
      %v1522 = vpop.f32.mrb[0].mxu0
      %v1523 = vadd.f32 0.0, %v1522
      %v1524 = vpop.f32.mrb[0].mxu0
      %1525 = vmatprep.mubr.f32.mxu0 0.0
      %1526 = vmatmul.mubr.f32.gmra.mrb[0].mxu0 %v1454
      %v1527 = vpop.f32.mrb[0].mxu0
      %v1528 = vadd.f32 0.0, %v1527
      %v1529 = vpop.f32.mrb[0].mxu0
      %1530 = vdwg.mxu0
      %1531 = vrot.lane.b32.xlu0 %v471, 120
      %v1532 = vpop.permute.xlu0 %1531
      %1533 = vrot.lane.b32.xlu0 %v476, 120
      %v1534 = vpop.permute.xlu0 %1533
      %1535 = vrot.lane.b32.xlu0 %v589, 120
      %v1536 = vpop.permute.xlu0 %1535
      %1537 = vrot.lane.b32.xlu0 %v594, 120
      %v1538 = vpop.permute.xlu0 %1537
      %v1539 = vsel %vm753, %v1532, 0
      %v1541 = vsel %vm753, %v1534, 0
      %v1543 = vsel %vm753, %v1536, 0
      %v1545 = vsel %vm753, %v1538, 0
      %1547 = vmatprep.subr.mxu0 0.0
      %1548 = vmatpush1.xpose.msra.mxu0 %v1543
      %1549 = vmatprep.subr.mxu0 0.0
      %1550 = vmatpush1.xpose.msra.mxu0 %v1545
      %1551 = vmatprep.subr.mxu0 0.0
      %1552 = vmatpush1.xpose.msra.mxu0 0.0
      %1553 = vmatprep.subr.mxu0 0.0
      %1554 = vmatpush1.xpose.msra.mxu0 0.0
      %1555 = vmatprep.subr.mxu0 0.0
      %1556 = vmatpush1.xpose.msra.mxu0 0.0
      %1557 = vmatprep.subr.mxu0 0.0
      %1558 = vmatpush1.xpose.msra.mxu0 0.0
      %1559 = vmatprep.subr.mxu0 0.0
      %1560 = vmatpush1.xpose.msra.mxu0 0.0
      %1561 = vmatprep.subr.mxu0 0.0
      %1562 = vmatpush1.xpose.msra.mxu0 0.0
      %1563 = vmatprep.subr.mxu0 0.0
      %1564 = vmatpush1.xpose.msra.mxu0 0.0
      %1565 = vmatprep.subr.mxu0 0.0
      %1566 = vmatpush1.xpose.msra.mxu0 0.0
      %1567 = vmatprep.subr.mxu0 0.0
      %1568 = vmatpush1.xpose.msra.mxu0 0.0
      %1569 = vmatprep.subr.mxu0 0.0
      %1570 = vmatpush1.xpose.msra.mxu0 0.0
      %1571 = vmatprep.subr.mxu0 0.0
      %1572 = vmatpush1.xpose.msra.mxu0 0.0
      %1573 = vmatprep.subr.mxu0 0.0
      %1574 = vmatpush1.xpose.msra.mxu0 0.0
      %1575 = vmatprep.subr.mxu0 0.0
      %1576 = vmatpush1.xpose.msra.mxu0 0.0
      %1577 = vmatprep.subr.mxu0 0.0
      %1578 = vmatpush1.xpose.msra.mxu0 0.0
      %1579 = vmatprep.subr.mxu0 0.0
      %1580 = vmatpush1.xpose.msra.mxu0 0.0
      %1581 = vmatprep.subr.mxu0 0.0
      %1582 = vmatpush1.xpose.msra.mxu0 0.0
      %1583 = vmatprep.subr.mxu0 0.0
      %1584 = vmatpush1.xpose.msra.mxu0 0.0
      %1585 = vmatprep.subr.mxu0 0.0
      %1586 = vmatpush1.xpose.msra.mxu0 0.0
      %1587 = vmatprep.subr.mxu0 0.0
      %1588 = vmatpush1.xpose.msra.mxu0 0.0
      %1589 = vmatprep.subr.mxu0 0.0
      %1590 = vmatpush1.xpose.msra.mxu0 0.0
      %1591 = vmatprep.subr.mxu0 0.0
      %1592 = vmatpush1.xpose.msra.mxu0 0.0
      %1593 = vmatprep.subr.mxu0 0.0
      %1594 = vmatpush1.xpose.msra.mxu0 0.0
      %1595 = vmatprep.subr.mxu0 0.0
      %1596 = vmatpush1.xpose.msra.mxu0 0.0
      %1597 = vmatprep.subr.mxu0 0.0
      %1598 = vmatpush1.xpose.msra.mxu0 0.0
      %1599 = vmatprep.subr.mxu0 0.0
      %1600 = vmatpush1.xpose.msra.mxu0 0.0
      %1601 = vmatprep.subr.mxu0 0.0
      %1602 = vmatpush1.xpose.msra.mxu0 0.0
      %1603 = vmatprep.subr.mxu0 0.0
      %1604 = vmatpush1.xpose.msra.mxu0 0.0
      %1605 = vmatprep.subr.mxu0 0.0
      %1606 = vmatpush1.xpose.msra.mxu0 0.0
      %1607 = vmatprep.subr.mxu0 0.0
      %1608 = vmatpush1.xpose.msra.mxu0 0.0
      %1609 = vmatprep.subr.mxu0 0.0
      %1610 = vmatpush1.xpose.msra.mxu0 0.0
      %1611 = vmatprep.mubr.f32.mxu0 0.0
      %1612 = vmatmul.mubr.f32.gmra.mrb[0].mxu0 %v1539
      %v1613 = vpop.f32.mrb[0].mxu0
      %v1614 = vadd.f32 0.0, %v1613
      %v1615 = vpop.f32.mrb[0].mxu0
      %1616 = vmatprep.mubr.f32.mxu0 0.0
      %1617 = vmatmul.mubr.f32.gmra.mrb[0].mxu0 %v1541
      %v1618 = vpop.f32.mrb[0].mxu0
      %v1619 = vadd.f32 0.0, %v1618
      %v1620 = vpop.f32.mrb[0].mxu0
      %1621 = vdwg.mxu0
      %1622 = vrot.lane.b32.xlu0 %v481, 120
      %v1623 = vpop.permute.xlu0 %1622
      %1624 = vrot.lane.b32.xlu0 %v486, 120
      %v1625 = vpop.permute.xlu0 %1624
      %1626 = vrot.lane.b32.xlu0 %v599, 120
      %v1627 = vpop.permute.xlu0 %1626
      %1628 = vrot.lane.b32.xlu0 %v604, 120
      %v1629 = vpop.permute.xlu0 %1628
      %v1630 = vsel %vm753, %v1623, 0
      %v1632 = vsel %vm753, %v1625, 0
      %v1634 = vsel %vm753, %v1627, 0
      %v1636 = vsel %vm753, %v1629, 0
      %1638 = vmatprep.subr.mxu0 0.0
      %1639 = vmatpush1.xpose.msra.mxu0 %v1634
      %1640 = vmatprep.subr.mxu0 0.0
      %1641 = vmatpush1.xpose.msra.mxu0 %v1636
      %1642 = vmatprep.subr.mxu0 0.0
      %1643 = vmatpush1.xpose.msra.mxu0 0.0
      %1644 = vmatprep.subr.mxu0 0.0
      %1645 = vmatpush1.xpose.msra.mxu0 0.0
      %1646 = vmatprep.subr.mxu0 0.0
      %1647 = vmatpush1.xpose.msra.mxu0 0.0
      %1648 = vmatprep.subr.mxu0 0.0
      %1649 = vmatpush1.xpose.msra.mxu0 0.0
      %1650 = vmatprep.subr.mxu0 0.0
      %1651 = vmatpush1.xpose.msra.mxu0 0.0
      %1652 = vmatprep.subr.mxu0 0.0
      %1653 = vmatpush1.xpose.msra.mxu0 0.0
      %1654 = vmatprep.subr.mxu0 0.0
      %1655 = vmatpush1.xpose.msra.mxu0 0.0
      %1656 = vmatprep.subr.mxu0 0.0
      %1657 = vmatpush1.xpose.msra.mxu0 0.0
      %1658 = vmatprep.subr.mxu0 0.0
      %1659 = vmatpush1.xpose.msra.mxu0 0.0
      %1660 = vmatprep.subr.mxu0 0.0
      %1661 = vmatpush1.xpose.msra.mxu0 0.0
      %1662 = vmatprep.subr.mxu0 0.0
      %1663 = vmatpush1.xpose.msra.mxu0 0.0
      %1664 = vmatprep.subr.mxu0 0.0
      %1665 = vmatpush1.xpose.msra.mxu0 0.0
      %1666 = vmatprep.subr.mxu0 0.0
      %1667 = vmatpush1.xpose.msra.mxu0 0.0
      %1668 = vmatprep.subr.mxu0 0.0
      %1669 = vmatpush1.xpose.msra.mxu0 0.0
      %1670 = vmatprep.subr.mxu0 0.0
      %1671 = vmatpush1.xpose.msra.mxu0 0.0
      %1672 = vmatprep.subr.mxu0 0.0
      %1673 = vmatpush1.xpose.msra.mxu0 0.0
      %1674 = vmatprep.subr.mxu0 0.0
      %1675 = vmatpush1.xpose.msra.mxu0 0.0
      %1676 = vmatprep.subr.mxu0 0.0
      %1677 = vmatpush1.xpose.msra.mxu0 0.0
      %1678 = vmatprep.subr.mxu0 0.0
      %1679 = vmatpush1.xpose.msra.mxu0 0.0
      %1680 = vmatprep.subr.mxu0 0.0
      %1681 = vmatpush1.xpose.msra.mxu0 0.0
      %1682 = vmatprep.subr.mxu0 0.0
      %1683 = vmatpush1.xpose.msra.mxu0 0.0
      %1684 = vmatprep.subr.mxu0 0.0
      %1685 = vmatpush1.xpose.msra.mxu0 0.0
      %1686 = vmatprep.subr.mxu0 0.0
      %1687 = vmatpush1.xpose.msra.mxu0 0.0
      %1688 = vmatprep.subr.mxu0 0.0
      %1689 = vmatpush1.xpose.msra.mxu0 0.0
      %1690 = vmatprep.subr.mxu0 0.0
      %1691 = vmatpush1.xpose.msra.mxu0 0.0
      %1692 = vmatprep.subr.mxu0 0.0
      %1693 = vmatpush1.xpose.msra.mxu0 0.0
      %1694 = vmatprep.subr.mxu0 0.0
      %1695 = vmatpush1.xpose.msra.mxu0 0.0
      %1696 = vmatprep.subr.mxu0 0.0
      %1697 = vmatpush1.xpose.msra.mxu0 0.0
      %1698 = vmatprep.subr.mxu0 0.0
      %1699 = vmatpush1.xpose.msra.mxu0 0.0
      %1700 = vmatprep.subr.mxu0 0.0
      %1701 = vmatpush1.xpose.msra.mxu0 0.0
      %1702 = vmatprep.mubr.f32.mxu0 0.0
      %1703 = vmatmul.mubr.f32.gmra.mrb[0].mxu0 %v1630
      %v1704 = vpop.f32.mrb[0].mxu0
      %v1705 = vadd.f32 0.0, %v1704
      %v1706 = vpop.f32.mrb[0].mxu0
      %1707 = vmatprep.mubr.f32.mxu0 0.0
      %1708 = vmatmul.mubr.f32.gmra.mrb[0].mxu0 %v1632
      %v1709 = vpop.f32.mrb[0].mxu0
      %v1710 = vadd.f32 0.0, %v1709
      %v1711 = vpop.f32.mrb[0].mxu0
      %1712 = vdwg.mxu0
      %1713 = vrot.lane.b32.xlu0 %v491, 120
      %v1714 = vpop.permute.xlu0 %1713
      %1715 = vrot.lane.b32.xlu0 %v496, 120
      %v1716 = vpop.permute.xlu0 %1715
      %1717 = vrot.lane.b32.xlu0 %v609, 120
      %v1718 = vpop.permute.xlu0 %1717
      %1719 = vrot.lane.b32.xlu0 %v614, 120
      %v1720 = vpop.permute.xlu0 %1719
      %v1721 = vsel %vm753, %v1714, 0
      %v1723 = vsel %vm753, %v1716, 0
      %v1725 = vsel %vm753, %v1718, 0
      %v1727 = vsel %vm753, %v1720, 0
      %1729 = vmatprep.subr.mxu0 0.0
      %1730 = vmatpush1.xpose.msra.mxu0 %v1725
      %1731 = vmatprep.subr.mxu0 0.0
      %1732 = vmatpush1.xpose.msra.mxu0 %v1727
      %1733 = vmatprep.subr.mxu0 0.0
      %1734 = vmatpush1.xpose.msra.mxu0 0.0
      %1735 = vmatprep.subr.mxu0 0.0
      %1736 = vmatpush1.xpose.msra.mxu0 0.0
      %1737 = vmatprep.subr.mxu0 0.0
      %1738 = vmatpush1.xpose.msra.mxu0 0.0
      %1739 = vmatprep.subr.mxu0 0.0
      %1740 = vmatpush1.xpose.msra.mxu0 0.0
      %1741 = vmatprep.subr.mxu0 0.0
      %1742 = vmatpush1.xpose.msra.mxu0 0.0
      %1743 = vmatprep.subr.mxu0 0.0
      %1744 = vmatpush1.xpose.msra.mxu0 0.0
      %1745 = vmatprep.subr.mxu0 0.0
      %1746 = vmatpush1.xpose.msra.mxu0 0.0
      %1747 = vmatprep.subr.mxu0 0.0
      %1748 = vmatpush1.xpose.msra.mxu0 0.0
      %1749 = vmatprep.subr.mxu0 0.0
      %1750 = vmatpush1.xpose.msra.mxu0 0.0
      %1751 = vmatprep.subr.mxu0 0.0
      %1752 = vmatpush1.xpose.msra.mxu0 0.0
      %1753 = vmatprep.subr.mxu0 0.0
      %1754 = vmatpush1.xpose.msra.mxu0 0.0
      %1755 = vmatprep.subr.mxu0 0.0
      %1756 = vmatpush1.xpose.msra.mxu0 0.0
      %1757 = vmatprep.subr.mxu0 0.0
      %1758 = vmatpush1.xpose.msra.mxu0 0.0
      %1759 = vmatprep.subr.mxu0 0.0
      %1760 = vmatpush1.xpose.msra.mxu0 0.0
      %1761 = vmatprep.subr.mxu0 0.0
      %1762 = vmatpush1.xpose.msra.mxu0 0.0
      %1763 = vmatprep.subr.mxu0 0.0
      %1764 = vmatpush1.xpose.msra.mxu0 0.0
      %1765 = vmatprep.subr.mxu0 0.0
      %1766 = vmatpush1.xpose.msra.mxu0 0.0
      %1767 = vmatprep.subr.mxu0 0.0
      %1768 = vmatpush1.xpose.msra.mxu0 0.0
      %1769 = vmatprep.subr.mxu0 0.0
      %1770 = vmatpush1.xpose.msra.mxu0 0.0
      %1771 = vmatprep.subr.mxu0 0.0
      %1772 = vmatpush1.xpose.msra.mxu0 0.0
      %1773 = vmatprep.subr.mxu0 0.0
      %1774 = vmatpush1.xpose.msra.mxu0 0.0
      %1775 = vmatprep.subr.mxu0 0.0
      %1776 = vmatpush1.xpose.msra.mxu0 0.0
      %1777 = vmatprep.subr.mxu0 0.0
      %1778 = vmatpush1.xpose.msra.mxu0 0.0
      %1779 = vmatprep.subr.mxu0 0.0
      %1780 = vmatpush1.xpose.msra.mxu0 0.0
      %1781 = vmatprep.subr.mxu0 0.0
      %1782 = vmatpush1.xpose.msra.mxu0 0.0
      %1783 = vmatprep.subr.mxu0 0.0
      %1784 = vmatpush1.xpose.msra.mxu0 0.0
      %1785 = vmatprep.subr.mxu0 0.0
      %1786 = vmatpush1.xpose.msra.mxu0 0.0
      %1787 = vmatprep.subr.mxu0 0.0
      %1788 = vmatpush1.xpose.msra.mxu0 0.0
      %1789 = vmatprep.subr.mxu0 0.0
      %1790 = vmatpush1.xpose.msra.mxu0 0.0
      %1791 = vmatprep.subr.mxu0 0.0
      %1792 = vmatpush1.xpose.msra.mxu0 0.0
      %1793 = vmatprep.mubr.f32.mxu0 0.0
      %1794 = vmatmul.mubr.f32.gmra.mrb[0].mxu0 %v1721
      %v1795 = vpop.f32.mrb[0].mxu0
      %v1796 = vadd.f32 0.0, %v1795
      %v1797 = vpop.f32.mrb[0].mxu0
      %1798 = vmatprep.mubr.f32.mxu0 0.0
      %1799 = vmatmul.mubr.f32.gmra.mrb[0].mxu0 %v1723
      %v1800 = vpop.f32.mrb[0].mxu0
      %v1801 = vadd.f32 0.0, %v1800
      %v1802 = vpop.f32.mrb[0].mxu0
      %1803 = vdwg.mxu0
      %1804 = vrot.lane.b32.xlu0 %v501, 120
      %v1805 = vpop.permute.xlu0 %1804
      %1806 = vrot.lane.b32.xlu0 %v506, 120
      %v1807 = vpop.permute.xlu0 %1806
      %1808 = vrot.lane.b32.xlu0 %v619, 120
      %v1809 = vpop.permute.xlu0 %1808
      %1810 = vrot.lane.b32.xlu0 %v624, 120
      %v1811 = vpop.permute.xlu0 %1810
      %v1812 = vsel %vm753, %v1805, 0
      %v1814 = vsel %vm753, %v1807, 0
      %v1816 = vsel %vm753, %v1809, 0
      %v1818 = vsel %vm753, %v1811, 0
      %1820 = vmatprep.subr.mxu0 0.0
      %1821 = vmatpush1.xpose.msra.mxu0 %v1816
      %1822 = vmatprep.subr.mxu0 0.0
      %1823 = vmatpush1.xpose.msra.mxu0 %v1818
      %1824 = vmatprep.subr.mxu0 0.0
      %1825 = vmatpush1.xpose.msra.mxu0 0.0
      %1826 = vmatprep.subr.mxu0 0.0
      %1827 = vmatpush1.xpose.msra.mxu0 0.0
      %1828 = vmatprep.subr.mxu0 0.0
      %1829 = vmatpush1.xpose.msra.mxu0 0.0
      %1830 = vmatprep.subr.mxu0 0.0
      %1831 = vmatpush1.xpose.msra.mxu0 0.0
      %1832 = vmatprep.subr.mxu0 0.0
      %1833 = vmatpush1.xpose.msra.mxu0 0.0
      %1834 = vmatprep.subr.mxu0 0.0
      %1835 = vmatpush1.xpose.msra.mxu0 0.0
      %1836 = vmatprep.subr.mxu0 0.0
      %1837 = vmatpush1.xpose.msra.mxu0 0.0
      %1838 = vmatprep.subr.mxu0 0.0
      %1839 = vmatpush1.xpose.msra.mxu0 0.0
      %1840 = vmatprep.subr.mxu0 0.0
      %1841 = vmatpush1.xpose.msra.mxu0 0.0
      %1842 = vmatprep.subr.mxu0 0.0
      %1843 = vmatpush1.xpose.msra.mxu0 0.0
      %1844 = vmatprep.subr.mxu0 0.0
      %1845 = vmatpush1.xpose.msra.mxu0 0.0
      %1846 = vmatprep.subr.mxu0 0.0
      %1847 = vmatpush1.xpose.msra.mxu0 0.0
      %1848 = vmatprep.subr.mxu0 0.0
      %1849 = vmatpush1.xpose.msra.mxu0 0.0
      %1850 = vmatprep.subr.mxu0 0.0
      %1851 = vmatpush1.xpose.msra.mxu0 0.0
      %1852 = vmatprep.subr.mxu0 0.0
      %1853 = vmatpush1.xpose.msra.mxu0 0.0
      %1854 = vmatprep.subr.mxu0 0.0
      %1855 = vmatpush1.xpose.msra.mxu0 0.0
      %1856 = vmatprep.subr.mxu0 0.0
      %1857 = vmatpush1.xpose.msra.mxu0 0.0
      %1858 = vmatprep.subr.mxu0 0.0
      %1859 = vmatpush1.xpose.msra.mxu0 0.0
      %1860 = vmatprep.subr.mxu0 0.0
      %1861 = vmatpush1.xpose.msra.mxu0 0.0
      %1862 = vmatprep.subr.mxu0 0.0
      %1863 = vmatpush1.xpose.msra.mxu0 0.0
      %1864 = vmatprep.subr.mxu0 0.0
      %1865 = vmatpush1.xpose.msra.mxu0 0.0
      %1866 = vmatprep.subr.mxu0 0.0
      %1867 = vmatpush1.xpose.msra.mxu0 0.0
      %1868 = vmatprep.subr.mxu0 0.0
      %1869 = vmatpush1.xpose.msra.mxu0 0.0
      %1870 = vmatprep.subr.mxu0 0.0
      %1871 = vmatpush1.xpose.msra.mxu0 0.0
      %1872 = vmatprep.subr.mxu0 0.0
      %1873 = vmatpush1.xpose.msra.mxu0 0.0
      %1874 = vmatprep.subr.mxu0 0.0
      %1875 = vmatpush1.xpose.msra.mxu0 0.0
      %1876 = vmatprep.subr.mxu0 0.0
      %1877 = vmatpush1.xpose.msra.mxu0 0.0
      %1878 = vmatprep.subr.mxu0 0.0
      %1879 = vmatpush1.xpose.msra.mxu0 0.0
      %1880 = vmatprep.subr.mxu0 0.0
      %1881 = vmatpush1.xpose.msra.mxu0 0.0
      %1882 = vmatprep.subr.mxu0 0.0
      %1883 = vmatpush1.xpose.msra.mxu0 0.0
      %1884 = vmatprep.mubr.f32.mxu0 0.0
      %1885 = vmatmul.mubr.f32.gmra.mrb[0].mxu0 %v1812
      %v1886 = vpop.f32.mrb[0].mxu0
      %v1887 = vadd.f32 0.0, %v1886
      %v1888 = vpop.f32.mrb[0].mxu0
      %1889 = vmatprep.mubr.f32.mxu0 0.0
      %1890 = vmatmul.mubr.f32.gmra.mrb[0].mxu0 %v1814
      %v1891 = vpop.f32.mrb[0].mxu0
      %v1892 = vadd.f32 0.0, %v1891
      %v1893 = vpop.f32.mrb[0].mxu0
      %1894 = vdwg.mxu0
      %v1895 = vmul.f32 %v1614, 0.35355338
      %v1896 = vmul.f32 %v1619, 0.35355338
      %v1897 = vmul.f32 %v1705, 0.35355338
      %v1898 = vmul.f32 %v1710, 0.35355338
      %v1899 = vmul.f32 %v1796, 0.35355338
      %v1900 = vmul.f32 %v1801, 0.35355338
      %v1901 = vmul.f32 %v1887, 0.35355338
      %v1902 = vmul.f32 %v1892, 0.35355338
      %v1903 = vadd.f32 %v1895, %v745
      %v1904 = vadd.f32 %v1896, %v746
      %v1905 = vadd.f32 %v1897, %v747
      %v1906 = vadd.f32 %v1898, %v748
      %v1907 = vadd.f32 %v1899, %v749
      %v1908 = vadd.f32 %v1900, %v750
      %v1909 = vadd.f32 %v1901, %v751
      %v1910 = vadd.f32 %v1902, %v752
      %v1911 = vsel %vm1118, %v1903, -inf
      %1912 = vmax.xlane.f32.xlu0 %v1911
      %v1913 = vpop.xlane.xlu0 %1912
      %v1914 = vsel %vm1118, %v1904, -inf
      %1915 = vmax.xlane.f32.xlu0 %v1914
      %v1916 = vpop.xlane.xlu0 %1915
      %v1917 = vsel %vm1118, %v1905, -inf
      %1918 = vmax.xlane.f32.xlu0 %v1917
      %v1919 = vpop.xlane.xlu0 %1918
      %v1920 = vsel %vm1118, %v1906, -inf
      %1921 = vmax.xlane.f32.xlu0 %v1920
      %v1922 = vpop.xlane.xlu0 %1921
      %v1923 = vsel %vm1118, %v1907, -inf
      %1924 = vmax.xlane.f32.xlu0 %v1923
      %v1925 = vpop.xlane.xlu0 %1924
      %v1926 = vsel %vm1118, %v1908, -inf
      %1927 = vmax.xlane.f32.xlu0 %v1926
      %v1928 = vpop.xlane.xlu0 %1927
      %v1929 = vsel %vm1118, %v1909, -inf
      %1930 = vmax.xlane.f32.xlu0 %v1929
      %v1931 = vpop.xlane.xlu0 %1930
      %v1932 = vsel %vm1118, %v1910, -inf
      %1933 = vmax.xlane.f32.xlu0 %v1932
      %v1934 = vpop.xlane.xlu0 %1933
      %v1935 = vsub.f32 %v1903, %v1913
      %v1936 = vsub.f32 %v1904, %v1916
      %v1937 = vsub.f32 %v1905, %v1919
      %v1938 = vsub.f32 %v1906, %v1922
      %v1939 = vsub.f32 %v1907, %v1925
      %v1940 = vsub.f32 %v1908, %v1928
      %v1941 = vsub.f32 %v1909, %v1931
      %v1942 = vsub.f32 %v1910, %v1934
      %v1943 = vmul.f32 %v1935, 1.442695
      %v1944 = vpow.pop %v1943
      %v1945 = vmul.f32 %v1936, 1.442695
      %v1946 = vpow.pop %v1945
      %v1947 = vmul.f32 %v1937, 1.442695
      %v1948 = vpow.pop %v1947
      %v1949 = vmul.f32 %v1938, 1.442695
      %v1950 = vpow.pop %v1949
      %v1951 = vmul.f32 %v1939, 1.442695
      %v1952 = vpow.pop %v1951
      %v1953 = vmul.f32 %v1940, 1.442695
      %v1954 = vpow.pop %v1953
      %v1955 = vmul.f32 %v1941, 1.442695
      %v1956 = vpow.pop %v1955
      %v1957 = vmul.f32 %v1942, 1.442695
      %v1958 = vpow.pop %v1957
      %v1959 = vsel %vm1118, %v1944, 0.0
      %1960 = vadd.xlane.f32.xlu0 %v1959
      %v1961 = vpop.xlane.xlu0 %1960
      %v1962 = vsel %vm1118, %v1946, 0.0
      %1963 = vadd.xlane.f32.xlu0 %v1962
      %v1964 = vpop.xlane.xlu0 %1963
      %v1965 = vsel %vm1118, %v1948, 0.0
      %1966 = vadd.xlane.f32.xlu0 %v1965
      %v1967 = vpop.xlane.xlu0 %1966
      %v1968 = vsel %vm1118, %v1950, 0.0
      %1969 = vadd.xlane.f32.xlu0 %v1968
      %v1970 = vpop.xlane.xlu0 %1969
      %v1971 = vsel %vm1118, %v1952, 0.0
      %1972 = vadd.xlane.f32.xlu0 %v1971
      %v1973 = vpop.xlane.xlu0 %1972
      %v1974 = vsel %vm1118, %v1954, 0.0
      %1975 = vadd.xlane.f32.xlu0 %v1974
      %v1976 = vpop.xlane.xlu0 %1975
      %v1977 = vsel %vm1118, %v1956, 0.0
      %1978 = vadd.xlane.f32.xlu0 %v1977
      %v1979 = vpop.xlane.xlu0 %1978
      %v1980 = vsel %vm1118, %v1958, 0.0
      %1981 = vadd.xlane.f32.xlu0 %v1980
      %v1982 = vpop.xlane.xlu0 %1981
      %v1983 = vrcp.pop %v1961
      %v1984 = vrcp.pop %v1964
      %v1985 = vrcp.pop %v1967
      %v1986 = vrcp.pop %v1970
      %v1987 = vrcp.pop %v1973
      %v1988 = vrcp.pop %v1976
      %v1989 = vrcp.pop %v1979
      %v1990 = vrcp.pop %v1982
      %v1991 = vmul.f32 %v1944, %v1983
      %v1992 = vmul.f32 %v1946, %v1984
      %v1993 = vmul.f32 %v1948, %v1985
      %v1994 = vmul.f32 %v1950, %v1986
      %v1995 = vmul.f32 %v1952, %v1987
      %v1996 = vmul.f32 %v1954, %v1988
      %v1997 = vmul.f32 %v1956, %v1989
      %v1998 = vmul.f32 %v1958, %v1990
      %2001 = vrot.lane.b32.xlu0 %v707, 120
      %v2002 = vpop.permute.xlu0 %2001
      %2003 = vrot.lane.b32.xlu0 %v712, 120
      %v2004 = vpop.permute.xlu0 %2003
      %v2008 = vsel %vm1118, %v1991, 0
      %v2011 = vsel %vm1118, %v1992, 0
      %2013 = vmatprep.subr.mxu0 0.0
      %2014 = vmatpush1.msra.mxu0 %v2002
      %2015 = vmatprep.subr.mxu0 0.0
      %2016 = vmatpush1.msra.mxu0 %v2004
      %2017 = vmatprep.subr.mxu0 0.0
      %2018 = vmatpush1.msra.mxu0 0.0
      %2019 = vmatprep.subr.mxu0 0.0
      %2020 = vmatpush1.msra.mxu0 0.0
      %2021 = vmatprep.subr.mxu0 0.0
      %2022 = vmatpush1.msra.mxu0 0.0
      %2023 = vmatprep.subr.mxu0 0.0
      %2024 = vmatpush1.msra.mxu0 0.0
      %2025 = vmatprep.subr.mxu0 0.0
      %2026 = vmatpush1.msra.mxu0 0.0
      %2027 = vmatprep.subr.mxu0 0.0
      %2028 = vmatpush1.msra.mxu0 0.0
      %2029 = vmatprep.subr.mxu0 0.0
      %2030 = vmatpush1.msra.mxu0 0.0
      %2031 = vmatprep.subr.mxu0 0.0
      %2032 = vmatpush1.msra.mxu0 0.0
      %2033 = vmatprep.subr.mxu0 0.0
      %2034 = vmatpush1.msra.mxu0 0.0
      %2035 = vmatprep.subr.mxu0 0.0
      %2036 = vmatpush1.msra.mxu0 0.0
      %2037 = vmatprep.subr.mxu0 0.0
      %2038 = vmatpush1.msra.mxu0 0.0
      %2039 = vmatprep.subr.mxu0 0.0
      %2040 = vmatpush1.msra.mxu0 0.0
      %2041 = vmatprep.subr.mxu0 0.0
      %2042 = vmatpush1.msra.mxu0 0.0
      %2043 = vmatprep.subr.mxu0 0.0
      %2044 = vmatpush1.msra.mxu0 0.0
      %2045 = vmatprep.subr.mxu0 0.0
      %2046 = vmatpush1.msra.mxu0 0.0
      %2047 = vmatprep.subr.mxu0 0.0
      %2048 = vmatpush1.msra.mxu0 0.0
      %2049 = vmatprep.subr.mxu0 0.0
      %2050 = vmatpush1.msra.mxu0 0.0
      %2051 = vmatprep.subr.mxu0 0.0
      %2052 = vmatpush1.msra.mxu0 0.0
      %2053 = vmatprep.subr.mxu0 0.0
      %2054 = vmatpush1.msra.mxu0 0.0
      %2055 = vmatprep.subr.mxu0 0.0
      %2056 = vmatpush1.msra.mxu0 0.0
      %2057 = vmatprep.subr.mxu0 0.0
      %2058 = vmatpush1.msra.mxu0 0.0
      %2059 = vmatprep.subr.mxu0 0.0
      %2060 = vmatpush1.msra.mxu0 0.0
      %2061 = vmatprep.subr.mxu0 0.0
      %2062 = vmatpush1.msra.mxu0 0.0
      %2063 = vmatprep.subr.mxu0 0.0
      %2064 = vmatpush1.msra.mxu0 0.0
      %2065 = vmatprep.subr.mxu0 0.0
      %2066 = vmatpush1.msra.mxu0 0.0
      %2067 = vmatprep.subr.mxu0 0.0
      %2068 = vmatpush1.msra.mxu0 0.0
      %2069 = vmatprep.subr.mxu0 0.0
      %2070 = vmatpush1.msra.mxu0 0.0
      %2071 = vmatprep.subr.mxu0 0.0
      %2072 = vmatpush1.msra.mxu0 0.0
      %2073 = vmatprep.subr.mxu0 0.0
      %2074 = vmatpush1.msra.mxu0 0.0
      %2075 = vmatprep.subr.mxu0 0.0
      %2076 = vmatpush1.msra.mxu0 0.0
      %2077 = vmatprep.mubr.f32.mxu0 0.0
      %2078 = vmatmul.mubr.f32.gmra.mrb[0].mxu0 %v2008
      %v2079 = vpop.f32.mrb[0].mxu0
      %v2080 = vadd.f32 0.0, %v2079
      %v2081 = vpop.f32.mrb[0].mxu0
      %2082 = vmatprep.mubr.f32.mxu0 0.0
      %2083 = vmatmul.mubr.f32.gmra.mrb[0].mxu0 %v2011
      %v2084 = vpop.f32.mrb[0].mxu0
      %v2085 = vadd.f32 0.0, %v2084
      %v2086 = vpop.f32.mrb[0].mxu0
      %2087 = vdwg.mxu0
      %2090 = vrot.lane.b32.xlu0 %v717, 120
      %v2091 = vpop.permute.xlu0 %2090
      %2092 = vrot.lane.b32.xlu0 %v722, 120
      %v2093 = vpop.permute.xlu0 %2092
      %v2097 = vsel %vm1118, %v1993, 0
      %v2100 = vsel %vm1118, %v1994, 0
      %2102 = vmatprep.subr.mxu0 0.0
      %2103 = vmatpush1.msra.mxu0 %v2091
      %2104 = vmatprep.subr.mxu0 0.0
      %2105 = vmatpush1.msra.mxu0 %v2093
      %2106 = vmatprep.subr.mxu0 0.0
      %2107 = vmatpush1.msra.mxu0 0.0
      %2108 = vmatprep.subr.mxu0 0.0
      %2109 = vmatpush1.msra.mxu0 0.0
      %2110 = vmatprep.subr.mxu0 0.0
      %2111 = vmatpush1.msra.mxu0 0.0
      %2112 = vmatprep.subr.mxu0 0.0
      %2113 = vmatpush1.msra.mxu0 0.0
      %2114 = vmatprep.subr.mxu0 0.0
      %2115 = vmatpush1.msra.mxu0 0.0
      %2116 = vmatprep.subr.mxu0 0.0
      %2117 = vmatpush1.msra.mxu0 0.0
      %2118 = vmatprep.subr.mxu0 0.0
      %2119 = vmatpush1.msra.mxu0 0.0
      %2120 = vmatprep.subr.mxu0 0.0
      %2121 = vmatpush1.msra.mxu0 0.0
      %2122 = vmatprep.subr.mxu0 0.0
      %2123 = vmatpush1.msra.mxu0 0.0
      %2124 = vmatprep.subr.mxu0 0.0
      %2125 = vmatpush1.msra.mxu0 0.0
      %2126 = vmatprep.subr.mxu0 0.0
      %2127 = vmatpush1.msra.mxu0 0.0
      %2128 = vmatprep.subr.mxu0 0.0
      %2129 = vmatpush1.msra.mxu0 0.0
      %2130 = vmatprep.subr.mxu0 0.0
      %2131 = vmatpush1.msra.mxu0 0.0
      %2132 = vmatprep.subr.mxu0 0.0
      %2133 = vmatpush1.msra.mxu0 0.0
      %2134 = vmatprep.subr.mxu0 0.0
      %2135 = vmatpush1.msra.mxu0 0.0
      %2136 = vmatprep.subr.mxu0 0.0
      %2137 = vmatpush1.msra.mxu0 0.0
      %2138 = vmatprep.subr.mxu0 0.0
      %2139 = vmatpush1.msra.mxu0 0.0
      %2140 = vmatprep.subr.mxu0 0.0
      %2141 = vmatpush1.msra.mxu0 0.0
      %2142 = vmatprep.subr.mxu0 0.0
      %2143 = vmatpush1.msra.mxu0 0.0
      %2144 = vmatprep.subr.mxu0 0.0
      %2145 = vmatpush1.msra.mxu0 0.0
      %2146 = vmatprep.subr.mxu0 0.0
      %2147 = vmatpush1.msra.mxu0 0.0
      %2148 = vmatprep.subr.mxu0 0.0
      %2149 = vmatpush1.msra.mxu0 0.0
      %2150 = vmatprep.subr.mxu0 0.0
      %2151 = vmatpush1.msra.mxu0 0.0
      %2152 = vmatprep.subr.mxu0 0.0
      %2153 = vmatpush1.msra.mxu0 0.0
      %2154 = vmatprep.subr.mxu0 0.0
      %2155 = vmatpush1.msra.mxu0 0.0
      %2156 = vmatprep.subr.mxu0 0.0
      %2157 = vmatpush1.msra.mxu0 0.0
      %2158 = vmatprep.subr.mxu0 0.0
      %2159 = vmatpush1.msra.mxu0 0.0
      %2160 = vmatprep.subr.mxu0 0.0
      %2161 = vmatpush1.msra.mxu0 0.0
      %2162 = vmatprep.subr.mxu0 0.0
      %2163 = vmatpush1.msra.mxu0 0.0
      %2164 = vmatprep.subr.mxu0 0.0
      %2165 = vmatpush1.msra.mxu0 0.0
      %2166 = vmatprep.mubr.f32.mxu0 0.0
      %2167 = vmatmul.mubr.f32.gmra.mrb[0].mxu0 %v2097
      %v2168 = vpop.f32.mrb[0].mxu0
      %v2169 = vadd.f32 0.0, %v2168
      %v2170 = vpop.f32.mrb[0].mxu0
      %2171 = vmatprep.mubr.f32.mxu0 0.0
      %2172 = vmatmul.mubr.f32.gmra.mrb[0].mxu0 %v2100
      %v2173 = vpop.f32.mrb[0].mxu0
      %v2174 = vadd.f32 0.0, %v2173
      %v2175 = vpop.f32.mrb[0].mxu0
      %2176 = vdwg.mxu0
      %2179 = vrot.lane.b32.xlu0 %v727, 120
      %v2180 = vpop.permute.xlu0 %2179
      %2181 = vrot.lane.b32.xlu0 %v732, 120
      %v2182 = vpop.permute.xlu0 %2181
      %v2186 = vsel %vm1118, %v1995, 0
      %v2189 = vsel %vm1118, %v1996, 0
      %2191 = vmatprep.subr.mxu0 0.0
      %2192 = vmatpush1.msra.mxu0 %v2180
      %2193 = vmatprep.subr.mxu0 0.0
      %2194 = vmatpush1.msra.mxu0 %v2182
      %2195 = vmatprep.subr.mxu0 0.0
      %2196 = vmatpush1.msra.mxu0 0.0
      %2197 = vmatprep.subr.mxu0 0.0
      %2198 = vmatpush1.msra.mxu0 0.0
      %2199 = vmatprep.subr.mxu0 0.0
      %2200 = vmatpush1.msra.mxu0 0.0
      %2201 = vmatprep.subr.mxu0 0.0
      %2202 = vmatpush1.msra.mxu0 0.0
      %2203 = vmatprep.subr.mxu0 0.0
      %2204 = vmatpush1.msra.mxu0 0.0
      %2205 = vmatprep.subr.mxu0 0.0
      %2206 = vmatpush1.msra.mxu0 0.0
      %2207 = vmatprep.subr.mxu0 0.0
      %2208 = vmatpush1.msra.mxu0 0.0
      %2209 = vmatprep.subr.mxu0 0.0
      %2210 = vmatpush1.msra.mxu0 0.0
      %2211 = vmatprep.subr.mxu0 0.0
      %2212 = vmatpush1.msra.mxu0 0.0
      %2213 = vmatprep.subr.mxu0 0.0
      %2214 = vmatpush1.msra.mxu0 0.0
      %2215 = vmatprep.subr.mxu0 0.0
      %2216 = vmatpush1.msra.mxu0 0.0
      %2217 = vmatprep.subr.mxu0 0.0
      %2218 = vmatpush1.msra.mxu0 0.0
      %2219 = vmatprep.subr.mxu0 0.0
      %2220 = vmatpush1.msra.mxu0 0.0
      %2221 = vmatprep.subr.mxu0 0.0
      %2222 = vmatpush1.msra.mxu0 0.0
      %2223 = vmatprep.subr.mxu0 0.0
      %2224 = vmatpush1.msra.mxu0 0.0
      %2225 = vmatprep.subr.mxu0 0.0
      %2226 = vmatpush1.msra.mxu0 0.0
      %2227 = vmatprep.subr.mxu0 0.0
      %2228 = vmatpush1.msra.mxu0 0.0
      %2229 = vmatprep.subr.mxu0 0.0
      %2230 = vmatpush1.msra.mxu0 0.0
      %2231 = vmatprep.subr.mxu0 0.0
      %2232 = vmatpush1.msra.mxu0 0.0
      %2233 = vmatprep.subr.mxu0 0.0
      %2234 = vmatpush1.msra.mxu0 0.0
      %2235 = vmatprep.subr.mxu0 0.0
      %2236 = vmatpush1.msra.mxu0 0.0
      %2237 = vmatprep.subr.mxu0 0.0
      %2238 = vmatpush1.msra.mxu0 0.0
      %2239 = vmatprep.subr.mxu0 0.0
      %2240 = vmatpush1.msra.mxu0 0.0
      %2241 = vmatprep.subr.mxu0 0.0
      %2242 = vmatpush1.msra.mxu0 0.0
      %2243 = vmatprep.subr.mxu0 0.0
      %2244 = vmatpush1.msra.mxu0 0.0
      %2245 = vmatprep.subr.mxu0 0.0
      %2246 = vmatpush1.msra.mxu0 0.0
      %2247 = vmatprep.subr.mxu0 0.0
      %2248 = vmatpush1.msra.mxu0 0.0
      %2249 = vmatprep.subr.mxu0 0.0
      %2250 = vmatpush1.msra.mxu0 0.0
      %2251 = vmatprep.subr.mxu0 0.0
      %2252 = vmatpush1.msra.mxu0 0.0
      %2253 = vmatprep.subr.mxu0 0.0
      %2254 = vmatpush1.msra.mxu0 0.0
      %2255 = vmatprep.mubr.f32.mxu0 0.0
      %2256 = vmatmul.mubr.f32.gmra.mrb[0].mxu0 %v2186
      %v2257 = vpop.f32.mrb[0].mxu0
      %v2258 = vadd.f32 0.0, %v2257
      %v2259 = vpop.f32.mrb[0].mxu0
      %2260 = vmatprep.mubr.f32.mxu0 0.0
      %2261 = vmatmul.mubr.f32.gmra.mrb[0].mxu0 %v2189
      %v2262 = vpop.f32.mrb[0].mxu0
      %v2263 = vadd.f32 0.0, %v2262
      %v2264 = vpop.f32.mrb[0].mxu0
      %2265 = vdwg.mxu0
      %2268 = vrot.lane.b32.xlu0 %v737, 120
      %v2269 = vpop.permute.xlu0 %2268
      %2270 = vrot.lane.b32.xlu0 %v742, 120
      %v2271 = vpop.permute.xlu0 %2270
      %v2275 = vsel %vm1118, %v1997, 0
      %v2278 = vsel %vm1118, %v1998, 0
      %2280 = vmatprep.subr.mxu0 0.0
      %2281 = vmatpush1.msra.mxu0 %v2269
      %2282 = vmatprep.subr.mxu0 0.0
      %2283 = vmatpush1.msra.mxu0 %v2271
      %2284 = vmatprep.subr.mxu0 0.0
      %2285 = vmatpush1.msra.mxu0 0.0
      %2286 = vmatprep.subr.mxu0 0.0
      %2287 = vmatpush1.msra.mxu0 0.0
      %2288 = vmatprep.subr.mxu0 0.0
      %2289 = vmatpush1.msra.mxu0 0.0
      %2290 = vmatprep.subr.mxu0 0.0
      %2291 = vmatpush1.msra.mxu0 0.0
      %2292 = vmatprep.subr.mxu0 0.0
      %2293 = vmatpush1.msra.mxu0 0.0
      %2294 = vmatprep.subr.mxu0 0.0
      %2295 = vmatpush1.msra.mxu0 0.0
      %2296 = vmatprep.subr.mxu0 0.0
      %2297 = vmatpush1.msra.mxu0 0.0
      %2298 = vmatprep.subr.mxu0 0.0
      %2299 = vmatpush1.msra.mxu0 0.0
      %2300 = vmatprep.subr.mxu0 0.0
      %2301 = vmatpush1.msra.mxu0 0.0
      %2302 = vmatprep.subr.mxu0 0.0
      %2303 = vmatpush1.msra.mxu0 0.0
      %2304 = vmatprep.subr.mxu0 0.0
      %2305 = vmatpush1.msra.mxu0 0.0
      %2306 = vmatprep.subr.mxu0 0.0
      %2307 = vmatpush1.msra.mxu0 0.0
      %2308 = vmatprep.subr.mxu0 0.0
      %2309 = vmatpush1.msra.mxu0 0.0
      %2310 = vmatprep.subr.mxu0 0.0
      %2311 = vmatpush1.msra.mxu0 0.0
      %2312 = vmatprep.subr.mxu0 0.0
      %2313 = vmatpush1.msra.mxu0 0.0
      %2314 = vmatprep.subr.mxu0 0.0
      %2315 = vmatpush1.msra.mxu0 0.0
      %2316 = vmatprep.subr.mxu0 0.0
      %2317 = vmatpush1.msra.mxu0 0.0
      %2318 = vmatprep.subr.mxu0 0.0
      %2319 = vmatpush1.msra.mxu0 0.0
      %2320 = vmatprep.subr.mxu0 0.0
      %2321 = vmatpush1.msra.mxu0 0.0
      %2322 = vmatprep.subr.mxu0 0.0
      %2323 = vmatpush1.msra.mxu0 0.0
      %2324 = vmatprep.subr.mxu0 0.0
      %2325 = vmatpush1.msra.mxu0 0.0
      %2326 = vmatprep.subr.mxu0 0.0
      %2327 = vmatpush1.msra.mxu0 0.0
      %2328 = vmatprep.subr.mxu0 0.0
      %2329 = vmatpush1.msra.mxu0 0.0
      %2330 = vmatprep.subr.mxu0 0.0
      %2331 = vmatpush1.msra.mxu0 0.0
      %2332 = vmatprep.subr.mxu0 0.0
      %2333 = vmatpush1.msra.mxu0 0.0
      %2334 = vmatprep.subr.mxu0 0.0
      %2335 = vmatpush1.msra.mxu0 0.0
      %2336 = vmatprep.subr.mxu0 0.0
      %2337 = vmatpush1.msra.mxu0 0.0
      %2338 = vmatprep.subr.mxu0 0.0
      %2339 = vmatpush1.msra.mxu0 0.0
      %2340 = vmatprep.subr.mxu0 0.0
      %2341 = vmatpush1.msra.mxu0 0.0
      %2342 = vmatprep.subr.mxu0 0.0
      %2343 = vmatpush1.msra.mxu0 0.0
      %2344 = vmatprep.mubr.f32.mxu0 0.0
      %2345 = vmatmul.mubr.f32.gmra.mrb[0].mxu0 %v2275
      %v2346 = vpop.f32.mrb[0].mxu0
      %v2347 = vadd.f32 0.0, %v2346
      %v2348 = vpop.f32.mrb[0].mxu0
      %2349 = vmatprep.mubr.f32.mxu0 0.0
      %2350 = vmatmul.mubr.f32.gmra.mrb[0].mxu0 %v2278
      %v2351 = vpop.f32.mrb[0].mxu0
      %v2352 = vadd.f32 0.0, %v2351
      %v2353 = vpop.f32.mrb[0].mxu0
      %2354 = vdwg.mxu0
      %2355 = vrot.lane.b32.xlu0 %v471, 112
      %v2356 = vpop.permute.xlu0 %2355
      %2357 = vrot.lane.b32.xlu0 %v476, 112
      %v2358 = vpop.permute.xlu0 %2357
      %2359 = vrot.lane.b32.xlu0 %v589, 112
      %v2360 = vpop.permute.xlu0 %2359
      %2361 = vrot.lane.b32.xlu0 %v594, 112
      %v2362 = vpop.permute.xlu0 %2361
      %v2363 = vsel %vm753, %v2356, 0
      %v2365 = vsel %vm753, %v2358, 0
      %v2367 = vsel %vm753, %v2360, 0
      %v2369 = vsel %vm753, %v2362, 0
      %2371 = vmatprep.subr.mxu0 0.0
      %2372 = vmatpush1.xpose.msra.mxu0 %v2367
      %2373 = vmatprep.subr.mxu0 0.0
      %2374 = vmatpush1.xpose.msra.mxu0 %v2369
      %2375 = vmatprep.subr.mxu0 0.0
      %2376 = vmatpush1.xpose.msra.mxu0 0.0
      %2377 = vmatprep.subr.mxu0 0.0
      %2378 = vmatpush1.xpose.msra.mxu0 0.0
      %2379 = vmatprep.subr.mxu0 0.0
      %2380 = vmatpush1.xpose.msra.mxu0 0.0
      %2381 = vmatprep.subr.mxu0 0.0
      %2382 = vmatpush1.xpose.msra.mxu0 0.0
      %2383 = vmatprep.subr.mxu0 0.0
      %2384 = vmatpush1.xpose.msra.mxu0 0.0
      %2385 = vmatprep.subr.mxu0 0.0
      %2386 = vmatpush1.xpose.msra.mxu0 0.0
      %2387 = vmatprep.subr.mxu0 0.0
      %2388 = vmatpush1.xpose.msra.mxu0 0.0
      %2389 = vmatprep.subr.mxu0 0.0
      %2390 = vmatpush1.xpose.msra.mxu0 0.0
      %2391 = vmatprep.subr.mxu0 0.0
      %2392 = vmatpush1.xpose.msra.mxu0 0.0
      %2393 = vmatprep.subr.mxu0 0.0
      %2394 = vmatpush1.xpose.msra.mxu0 0.0
      %2395 = vmatprep.subr.mxu0 0.0
      %2396 = vmatpush1.xpose.msra.mxu0 0.0
      %2397 = vmatprep.subr.mxu0 0.0
      %2398 = vmatpush1.xpose.msra.mxu0 0.0
      %2399 = vmatprep.subr.mxu0 0.0
      %2400 = vmatpush1.xpose.msra.mxu0 0.0
      %2401 = vmatprep.subr.mxu0 0.0
      %2402 = vmatpush1.xpose.msra.mxu0 0.0
      %2403 = vmatprep.subr.mxu0 0.0
      %2404 = vmatpush1.xpose.msra.mxu0 0.0
      %2405 = vmatprep.subr.mxu0 0.0
      %2406 = vmatpush1.xpose.msra.mxu0 0.0
      %2407 = vmatprep.subr.mxu0 0.0
      %2408 = vmatpush1.xpose.msra.mxu0 0.0
      %2409 = vmatprep.subr.mxu0 0.0
      %2410 = vmatpush1.xpose.msra.mxu0 0.0
      %2411 = vmatprep.subr.mxu0 0.0
      %2412 = vmatpush1.xpose.msra.mxu0 0.0
      %2413 = vmatprep.subr.mxu0 0.0
      %2414 = vmatpush1.xpose.msra.mxu0 0.0
      %2415 = vmatprep.subr.mxu0 0.0
      %2416 = vmatpush1.xpose.msra.mxu0 0.0
      %2417 = vmatprep.subr.mxu0 0.0
      %2418 = vmatpush1.xpose.msra.mxu0 0.0
      %2419 = vmatprep.subr.mxu0 0.0
      %2420 = vmatpush1.xpose.msra.mxu0 0.0
      %2421 = vmatprep.subr.mxu0 0.0
      %2422 = vmatpush1.xpose.msra.mxu0 0.0
      %2423 = vmatprep.subr.mxu0 0.0
      %2424 = vmatpush1.xpose.msra.mxu0 0.0
      %2425 = vmatprep.subr.mxu0 0.0
      %2426 = vmatpush1.xpose.msra.mxu0 0.0
      %2427 = vmatprep.subr.mxu0 0.0
      %2428 = vmatpush1.xpose.msra.mxu0 0.0
      %2429 = vmatprep.subr.mxu0 0.0
      %2430 = vmatpush1.xpose.msra.mxu0 0.0
      %2431 = vmatprep.subr.mxu0 0.0
      %2432 = vmatpush1.xpose.msra.mxu0 0.0
      %2433 = vmatprep.subr.mxu0 0.0
      %2434 = vmatpush1.xpose.msra.mxu0 0.0
      %2435 = vmatprep.mubr.f32.mxu0 0.0
      %2436 = vmatmul.mubr.f32.gmra.mrb[0].mxu0 %v2363
      %v2437 = vpop.f32.mrb[0].mxu0
      %v2438 = vadd.f32 0.0, %v2437
      %v2439 = vpop.f32.mrb[0].mxu0
      %2440 = vmatprep.mubr.f32.mxu0 0.0
      %2441 = vmatmul.mubr.f32.gmra.mrb[0].mxu0 %v2365
      %v2442 = vpop.f32.mrb[0].mxu0
      %v2443 = vadd.f32 0.0, %v2442
      %v2444 = vpop.f32.mrb[0].mxu0
      %2445 = vdwg.mxu0
      %2446 = vrot.lane.b32.xlu0 %v481, 112
      %v2447 = vpop.permute.xlu0 %2446
      %2448 = vrot.lane.b32.xlu0 %v486, 112
      %v2449 = vpop.permute.xlu0 %2448
      %2450 = vrot.lane.b32.xlu0 %v599, 112
      %v2451 = vpop.permute.xlu0 %2450
      %2452 = vrot.lane.b32.xlu0 %v604, 112
      %v2453 = vpop.permute.xlu0 %2452
      %v2454 = vsel %vm753, %v2447, 0
      %v2456 = vsel %vm753, %v2449, 0
      %v2458 = vsel %vm753, %v2451, 0
      %v2460 = vsel %vm753, %v2453, 0
      %2462 = vmatprep.subr.mxu0 0.0
      %2463 = vmatpush1.xpose.msra.mxu0 %v2458
      %2464 = vmatprep.subr.mxu0 0.0
      %2465 = vmatpush1.xpose.msra.mxu0 %v2460
      %2466 = vmatprep.subr.mxu0 0.0
      %2467 = vmatpush1.xpose.msra.mxu0 0.0
      %2468 = vmatprep.subr.mxu0 0.0
      %2469 = vmatpush1.xpose.msra.mxu0 0.0
      %2470 = vmatprep.subr.mxu0 0.0
      %2471 = vmatpush1.xpose.msra.mxu0 0.0
      %2472 = vmatprep.subr.mxu0 0.0
      %2473 = vmatpush1.xpose.msra.mxu0 0.0
      %2474 = vmatprep.subr.mxu0 0.0
      %2475 = vmatpush1.xpose.msra.mxu0 0.0
      %2476 = vmatprep.subr.mxu0 0.0
      %2477 = vmatpush1.xpose.msra.mxu0 0.0
      %2478 = vmatprep.subr.mxu0 0.0
      %2479 = vmatpush1.xpose.msra.mxu0 0.0
      %2480 = vmatprep.subr.mxu0 0.0
      %2481 = vmatpush1.xpose.msra.mxu0 0.0
      %2482 = vmatprep.subr.mxu0 0.0
      %2483 = vmatpush1.xpose.msra.mxu0 0.0
      %2484 = vmatprep.subr.mxu0 0.0
      %2485 = vmatpush1.xpose.msra.mxu0 0.0
      %2486 = vmatprep.subr.mxu0 0.0
      %2487 = vmatpush1.xpose.msra.mxu0 0.0
      %2488 = vmatprep.subr.mxu0 0.0
      %2489 = vmatpush1.xpose.msra.mxu0 0.0
      %2490 = vmatprep.subr.mxu0 0.0
      %2491 = vmatpush1.xpose.msra.mxu0 0.0
      %2492 = vmatprep.subr.mxu0 0.0
      %2493 = vmatpush1.xpose.msra.mxu0 0.0
      %2494 = vmatprep.subr.mxu0 0.0
      %2495 = vmatpush1.xpose.msra.mxu0 0.0
      %2496 = vmatprep.subr.mxu0 0.0
      %2497 = vmatpush1.xpose.msra.mxu0 0.0
      %2498 = vmatprep.subr.mxu0 0.0
      %2499 = vmatpush1.xpose.msra.mxu0 0.0
      %2500 = vmatprep.subr.mxu0 0.0
      %2501 = vmatpush1.xpose.msra.mxu0 0.0
      %2502 = vmatprep.subr.mxu0 0.0
      %2503 = vmatpush1.xpose.msra.mxu0 0.0
      %2504 = vmatprep.subr.mxu0 0.0
      %2505 = vmatpush1.xpose.msra.mxu0 0.0
      %2506 = vmatprep.subr.mxu0 0.0
      %2507 = vmatpush1.xpose.msra.mxu0 0.0
      %2508 = vmatprep.subr.mxu0 0.0
      %2509 = vmatpush1.xpose.msra.mxu0 0.0
      %2510 = vmatprep.subr.mxu0 0.0
      %2511 = vmatpush1.xpose.msra.mxu0 0.0
      %2512 = vmatprep.subr.mxu0 0.0
      %2513 = vmatpush1.xpose.msra.mxu0 0.0
      %2514 = vmatprep.subr.mxu0 0.0
      %2515 = vmatpush1.xpose.msra.mxu0 0.0
      %2516 = vmatprep.subr.mxu0 0.0
      %2517 = vmatpush1.xpose.msra.mxu0 0.0
      %2518 = vmatprep.subr.mxu0 0.0
      %2519 = vmatpush1.xpose.msra.mxu0 0.0
      %2520 = vmatprep.subr.mxu0 0.0
      %2521 = vmatpush1.xpose.msra.mxu0 0.0
      %2522 = vmatprep.subr.mxu0 0.0
      %2523 = vmatpush1.xpose.msra.mxu0 0.0
      %2524 = vmatprep.subr.mxu0 0.0
      %2525 = vmatpush1.xpose.msra.mxu0 0.0
      %2526 = vmatprep.mubr.f32.mxu0 0.0
      %2527 = vmatmul.mubr.f32.gmra.mrb[0].mxu0 %v2454
      %v2528 = vpop.f32.mrb[0].mxu0
      %v2529 = vadd.f32 0.0, %v2528
      %v2530 = vpop.f32.mrb[0].mxu0
      %2531 = vmatprep.mubr.f32.mxu0 0.0
      %2532 = vmatmul.mubr.f32.gmra.mrb[0].mxu0 %v2456
      %v2533 = vpop.f32.mrb[0].mxu0
      %v2534 = vadd.f32 0.0, %v2533
      %v2535 = vpop.f32.mrb[0].mxu0
      %2536 = vdwg.mxu0
      %2537 = vrot.lane.b32.xlu0 %v491, 112
      %v2538 = vpop.permute.xlu0 %2537
      %2539 = vrot.lane.b32.xlu0 %v496, 112
      %v2540 = vpop.permute.xlu0 %2539
      %2541 = vrot.lane.b32.xlu0 %v609, 112
      %v2542 = vpop.permute.xlu0 %2541
      %2543 = vrot.lane.b32.xlu0 %v614, 112
      %v2544 = vpop.permute.xlu0 %2543
      %v2545 = vsel %vm753, %v2538, 0
      %v2547 = vsel %vm753, %v2540, 0
      %v2549 = vsel %vm753, %v2542, 0
      %v2551 = vsel %vm753, %v2544, 0
      %2553 = vmatprep.subr.mxu0 0.0
      %2554 = vmatpush1.xpose.msra.mxu0 %v2549
      %2555 = vmatprep.subr.mxu0 0.0
      %2556 = vmatpush1.xpose.msra.mxu0 %v2551
      %2557 = vmatprep.subr.mxu0 0.0
      %2558 = vmatpush1.xpose.msra.mxu0 0.0
      %2559 = vmatprep.subr.mxu0 0.0
      %2560 = vmatpush1.xpose.msra.mxu0 0.0
      %2561 = vmatprep.subr.mxu0 0.0
      %2562 = vmatpush1.xpose.msra.mxu0 0.0
      %2563 = vmatprep.subr.mxu0 0.0
      %2564 = vmatpush1.xpose.msra.mxu0 0.0
      %2565 = vmatprep.subr.mxu0 0.0
      %2566 = vmatpush1.xpose.msra.mxu0 0.0
      %2567 = vmatprep.subr.mxu0 0.0
      %2568 = vmatpush1.xpose.msra.mxu0 0.0
      %2569 = vmatprep.subr.mxu0 0.0
      %2570 = vmatpush1.xpose.msra.mxu0 0.0
      %2571 = vmatprep.subr.mxu0 0.0
      %2572 = vmatpush1.xpose.msra.mxu0 0.0
      %2573 = vmatprep.subr.mxu0 0.0
      %2574 = vmatpush1.xpose.msra.mxu0 0.0
      %2575 = vmatprep.subr.mxu0 0.0
      %2576 = vmatpush1.xpose.msra.mxu0 0.0
      %2577 = vmatprep.subr.mxu0 0.0
      %2578 = vmatpush1.xpose.msra.mxu0 0.0
      %2579 = vmatprep.subr.mxu0 0.0
      %2580 = vmatpush1.xpose.msra.mxu0 0.0
      %2581 = vmatprep.subr.mxu0 0.0
      %2582 = vmatpush1.xpose.msra.mxu0 0.0
      %2583 = vmatprep.subr.mxu0 0.0
      %2584 = vmatpush1.xpose.msra.mxu0 0.0
      %2585 = vmatprep.subr.mxu0 0.0
      %2586 = vmatpush1.xpose.msra.mxu0 0.0
      %2587 = vmatprep.subr.mxu0 0.0
      %2588 = vmatpush1.xpose.msra.mxu0 0.0
      %2589 = vmatprep.subr.mxu0 0.0
      %2590 = vmatpush1.xpose.msra.mxu0 0.0
      %2591 = vmatprep.subr.mxu0 0.0
      %2592 = vmatpush1.xpose.msra.mxu0 0.0
      %2593 = vmatprep.subr.mxu0 0.0
      %2594 = vmatpush1.xpose.msra.mxu0 0.0
      %2595 = vmatprep.subr.mxu0 0.0
      %2596 = vmatpush1.xpose.msra.mxu0 0.0
      %2597 = vmatprep.subr.mxu0 0.0
      %2598 = vmatpush1.xpose.msra.mxu0 0.0
      %2599 = vmatprep.subr.mxu0 0.0
      %2600 = vmatpush1.xpose.msra.mxu0 0.0
      %2601 = vmatprep.subr.mxu0 0.0
      %2602 = vmatpush1.xpose.msra.mxu0 0.0
      %2603 = vmatprep.subr.mxu0 0.0
      %2604 = vmatpush1.xpose.msra.mxu0 0.0
      %2605 = vmatprep.subr.mxu0 0.0
      %2606 = vmatpush1.xpose.msra.mxu0 0.0
      %2607 = vmatprep.subr.mxu0 0.0
      %2608 = vmatpush1.xpose.msra.mxu0 0.0
      %2609 = vmatprep.subr.mxu0 0.0
      %2610 = vmatpush1.xpose.msra.mxu0 0.0
      %2611 = vmatprep.subr.mxu0 0.0
      %2612 = vmatpush1.xpose.msra.mxu0 0.0
      %2613 = vmatprep.subr.mxu0 0.0
      %2614 = vmatpush1.xpose.msra.mxu0 0.0
      %2615 = vmatprep.subr.mxu0 0.0
      %2616 = vmatpush1.xpose.msra.mxu0 0.0
      %2617 = vmatprep.mubr.f32.mxu0 0.0
      %2618 = vmatmul.mubr.f32.gmra.mrb[0].mxu0 %v2545
      %v2619 = vpop.f32.mrb[0].mxu0
      %v2620 = vadd.f32 0.0, %v2619
      %v2621 = vpop.f32.mrb[0].mxu0
      %2622 = vmatprep.mubr.f32.mxu0 0.0
      %2623 = vmatmul.mubr.f32.gmra.mrb[0].mxu0 %v2547
      %v2624 = vpop.f32.mrb[0].mxu0
      %v2625 = vadd.f32 0.0, %v2624
      %v2626 = vpop.f32.mrb[0].mxu0
      %2627 = vdwg.mxu0
      %2628 = vrot.lane.b32.xlu0 %v501, 112
      %v2629 = vpop.permute.xlu0 %2628
      %2630 = vrot.lane.b32.xlu0 %v506, 112
      %v2631 = vpop.permute.xlu0 %2630
      %2632 = vrot.lane.b32.xlu0 %v619, 112
      %v2633 = vpop.permute.xlu0 %2632
      %2634 = vrot.lane.b32.xlu0 %v624, 112
      %v2635 = vpop.permute.xlu0 %2634
      %v2636 = vsel %vm753, %v2629, 0
      %v2638 = vsel %vm753, %v2631, 0
      %v2640 = vsel %vm753, %v2633, 0
      %v2642 = vsel %vm753, %v2635, 0
      %2644 = vmatprep.subr.mxu0 0.0
      %2645 = vmatpush1.xpose.msra.mxu0 %v2640
      %2646 = vmatprep.subr.mxu0 0.0
      %2647 = vmatpush1.xpose.msra.mxu0 %v2642
      %2648 = vmatprep.subr.mxu0 0.0
      %2649 = vmatpush1.xpose.msra.mxu0 0.0
      %2650 = vmatprep.subr.mxu0 0.0
      %2651 = vmatpush1.xpose.msra.mxu0 0.0
      %2652 = vmatprep.subr.mxu0 0.0
      %2653 = vmatpush1.xpose.msra.mxu0 0.0
      %2654 = vmatprep.subr.mxu0 0.0
      %2655 = vmatpush1.xpose.msra.mxu0 0.0
      %2656 = vmatprep.subr.mxu0 0.0
      %2657 = vmatpush1.xpose.msra.mxu0 0.0
      %2658 = vmatprep.subr.mxu0 0.0
      %2659 = vmatpush1.xpose.msra.mxu0 0.0
      %2660 = vmatprep.subr.mxu0 0.0
      %2661 = vmatpush1.xpose.msra.mxu0 0.0
      %2662 = vmatprep.subr.mxu0 0.0
      %2663 = vmatpush1.xpose.msra.mxu0 0.0
      %2664 = vmatprep.subr.mxu0 0.0
      %2665 = vmatpush1.xpose.msra.mxu0 0.0
      %2666 = vmatprep.subr.mxu0 0.0
      %2667 = vmatpush1.xpose.msra.mxu0 0.0
      %2668 = vmatprep.subr.mxu0 0.0
      %2669 = vmatpush1.xpose.msra.mxu0 0.0
      %2670 = vmatprep.subr.mxu0 0.0
      %2671 = vmatpush1.xpose.msra.mxu0 0.0
      %2672 = vmatprep.subr.mxu0 0.0
      %2673 = vmatpush1.xpose.msra.mxu0 0.0
      %2674 = vmatprep.subr.mxu0 0.0
      %2675 = vmatpush1.xpose.msra.mxu0 0.0
      %2676 = vmatprep.subr.mxu0 0.0
      %2677 = vmatpush1.xpose.msra.mxu0 0.0
      %2678 = vmatprep.subr.mxu0 0.0
      %2679 = vmatpush1.xpose.msra.mxu0 0.0
      %2680 = vmatprep.subr.mxu0 0.0
      %2681 = vmatpush1.xpose.msra.mxu0 0.0
      %2682 = vmatprep.subr.mxu0 0.0
      %2683 = vmatpush1.xpose.msra.mxu0 0.0
      %2684 = vmatprep.subr.mxu0 0.0
      %2685 = vmatpush1.xpose.msra.mxu0 0.0
      %2686 = vmatprep.subr.mxu0 0.0
      %2687 = vmatpush1.xpose.msra.mxu0 0.0
      %2688 = vmatprep.subr.mxu0 0.0
      %2689 = vmatpush1.xpose.msra.mxu0 0.0
      %2690 = vmatprep.subr.mxu0 0.0
      %2691 = vmatpush1.xpose.msra.mxu0 0.0
      %2692 = vmatprep.subr.mxu0 0.0
      %2693 = vmatpush1.xpose.msra.mxu0 0.0
      %2694 = vmatprep.subr.mxu0 0.0
      %2695 = vmatpush1.xpose.msra.mxu0 0.0
      %2696 = vmatprep.subr.mxu0 0.0
      %2697 = vmatpush1.xpose.msra.mxu0 0.0
      %2698 = vmatprep.subr.mxu0 0.0
      %2699 = vmatpush1.xpose.msra.mxu0 0.0
      %2700 = vmatprep.subr.mxu0 0.0
      %2701 = vmatpush1.xpose.msra.mxu0 0.0
      %2702 = vmatprep.subr.mxu0 0.0
      %2703 = vmatpush1.xpose.msra.mxu0 0.0
      %2704 = vmatprep.subr.mxu0 0.0
      %2705 = vmatpush1.xpose.msra.mxu0 0.0
      %2706 = vmatprep.subr.mxu0 0.0
      %2707 = vmatpush1.xpose.msra.mxu0 0.0
      %2708 = vmatprep.mubr.f32.mxu0 0.0
      %2709 = vmatmul.mubr.f32.gmra.mrb[0].mxu0 %v2636
      %v2710 = vpop.f32.mrb[0].mxu0
      %v2711 = vadd.f32 0.0, %v2710
      %v2712 = vpop.f32.mrb[0].mxu0
      %2713 = vmatprep.mubr.f32.mxu0 0.0
      %2714 = vmatmul.mubr.f32.gmra.mrb[0].mxu0 %v2638
      %v2715 = vpop.f32.mrb[0].mxu0
      %v2716 = vadd.f32 0.0, %v2715
      %v2717 = vpop.f32.mrb[0].mxu0
      %2718 = vdwg.mxu0
      %v2719 = vmul.f32 %v2438, 0.35355338
      %v2720 = vmul.f32 %v2443, 0.35355338
      %v2721 = vmul.f32 %v2529, 0.35355338
      %v2722 = vmul.f32 %v2534, 0.35355338
      %v2723 = vmul.f32 %v2620, 0.35355338
      %v2724 = vmul.f32 %v2625, 0.35355338
      %v2725 = vmul.f32 %v2711, 0.35355338
      %v2726 = vmul.f32 %v2716, 0.35355338
      %v2727 = vadd.f32 %v2719, %v745
      %v2728 = vadd.f32 %v2720, %v746
      %v2729 = vadd.f32 %v2721, %v747
      %v2730 = vadd.f32 %v2722, %v748
      %v2731 = vadd.f32 %v2723, %v749
      %v2732 = vadd.f32 %v2724, %v750
      %v2733 = vadd.f32 %v2725, %v751
      %v2734 = vadd.f32 %v2726, %v752
      %v2735 = vsel %vm1118, %v2727, -inf
      %2736 = vmax.xlane.f32.xlu0 %v2735
      %v2737 = vpop.xlane.xlu0 %2736
      %v2738 = vsel %vm1118, %v2728, -inf
      %2739 = vmax.xlane.f32.xlu0 %v2738
      %v2740 = vpop.xlane.xlu0 %2739
      %v2741 = vsel %vm1118, %v2729, -inf
      %2742 = vmax.xlane.f32.xlu0 %v2741
      %v2743 = vpop.xlane.xlu0 %2742
      %v2744 = vsel %vm1118, %v2730, -inf
      %2745 = vmax.xlane.f32.xlu0 %v2744
      %v2746 = vpop.xlane.xlu0 %2745
      %v2747 = vsel %vm1118, %v2731, -inf
      %2748 = vmax.xlane.f32.xlu0 %v2747
      %v2749 = vpop.xlane.xlu0 %2748
      %v2750 = vsel %vm1118, %v2732, -inf
      %2751 = vmax.xlane.f32.xlu0 %v2750
      %v2752 = vpop.xlane.xlu0 %2751
      %v2753 = vsel %vm1118, %v2733, -inf
      %2754 = vmax.xlane.f32.xlu0 %v2753
      %v2755 = vpop.xlane.xlu0 %2754
      %v2756 = vsel %vm1118, %v2734, -inf
      %2757 = vmax.xlane.f32.xlu0 %v2756
      %v2758 = vpop.xlane.xlu0 %2757
      %v2759 = vsub.f32 %v2727, %v2737
      %v2760 = vsub.f32 %v2728, %v2740
      %v2761 = vsub.f32 %v2729, %v2743
      %v2762 = vsub.f32 %v2730, %v2746
      %v2763 = vsub.f32 %v2731, %v2749
      %v2764 = vsub.f32 %v2732, %v2752
      %v2765 = vsub.f32 %v2733, %v2755
      %v2766 = vsub.f32 %v2734, %v2758
      %v2767 = vmul.f32 %v2759, 1.442695
      %v2768 = vpow.pop %v2767
      %v2769 = vmul.f32 %v2760, 1.442695
      %v2770 = vpow.pop %v2769
      %v2771 = vmul.f32 %v2761, 1.442695
      %v2772 = vpow.pop %v2771
      %v2773 = vmul.f32 %v2762, 1.442695
      %v2774 = vpow.pop %v2773
      %v2775 = vmul.f32 %v2763, 1.442695
      %v2776 = vpow.pop %v2775
      %v2777 = vmul.f32 %v2764, 1.442695
      %v2778 = vpow.pop %v2777
      %v2779 = vmul.f32 %v2765, 1.442695
      %v2780 = vpow.pop %v2779
      %v2781 = vmul.f32 %v2766, 1.442695
      %v2782 = vpow.pop %v2781
      %v2783 = vsel %vm1118, %v2768, 0.0
      %2784 = vadd.xlane.f32.xlu0 %v2783
      %v2785 = vpop.xlane.xlu0 %2784
      %v2786 = vsel %vm1118, %v2770, 0.0
      %2787 = vadd.xlane.f32.xlu0 %v2786
      %v2788 = vpop.xlane.xlu0 %2787
      %v2789 = vsel %vm1118, %v2772, 0.0
      %2790 = vadd.xlane.f32.xlu0 %v2789
      %v2791 = vpop.xlane.xlu0 %2790
      %v2792 = vsel %vm1118, %v2774, 0.0
      %2793 = vadd.xlane.f32.xlu0 %v2792
      %v2794 = vpop.xlane.xlu0 %2793
      %v2795 = vsel %vm1118, %v2776, 0.0
      %2796 = vadd.xlane.f32.xlu0 %v2795
      %v2797 = vpop.xlane.xlu0 %2796
      %v2798 = vsel %vm1118, %v2778, 0.0
      %2799 = vadd.xlane.f32.xlu0 %v2798
      %v2800 = vpop.xlane.xlu0 %2799
      %v2801 = vsel %vm1118, %v2780, 0.0
      %2802 = vadd.xlane.f32.xlu0 %v2801
      %v2803 = vpop.xlane.xlu0 %2802
      %v2804 = vsel %vm1118, %v2782, 0.0
      %2805 = vadd.xlane.f32.xlu0 %v2804
      %v2806 = vpop.xlane.xlu0 %2805
      %v2807 = vrcp.pop %v2785
      %v2808 = vrcp.pop %v2788
      %v2809 = vrcp.pop %v2791
      %v2810 = vrcp.pop %v2794
      %v2811 = vrcp.pop %v2797
      %v2812 = vrcp.pop %v2800
      %v2813 = vrcp.pop %v2803
      %v2814 = vrcp.pop %v2806
      %v2815 = vmul.f32 %v2768, %v2807
      %v2816 = vmul.f32 %v2770, %v2808
      %v2817 = vmul.f32 %v2772, %v2809
      %v2818 = vmul.f32 %v2774, %v2810
      %v2819 = vmul.f32 %v2776, %v2811
      %v2820 = vmul.f32 %v2778, %v2812
      %v2821 = vmul.f32 %v2780, %v2813
      %v2822 = vmul.f32 %v2782, %v2814
      %2823 = vrot.lane.b32.xlu0 %v707, 112
      %v2824 = vpop.permute.xlu0 %2823
      %2825 = vrot.lane.b32.xlu0 %v712, 112
      %v2826 = vpop.permute.xlu0 %2825
      %v2830 = vsel %vm1118, %v2815, 0
      %v2833 = vsel %vm1118, %v2816, 0
      %2835 = vmatprep.subr.mxu0 0.0
      %2836 = vmatpush1.msra.mxu0 %v2824
      %2837 = vmatprep.subr.mxu0 0.0
      %2838 = vmatpush1.msra.mxu0 %v2826
      %2839 = vmatprep.subr.mxu0 0.0
      %2840 = vmatpush1.msra.mxu0 0.0
      %2841 = vmatprep.subr.mxu0 0.0
      %2842 = vmatpush1.msra.mxu0 0.0
      %2843 = vmatprep.subr.mxu0 0.0
      %2844 = vmatpush1.msra.mxu0 0.0
      %2845 = vmatprep.subr.mxu0 0.0
      %2846 = vmatpush1.msra.mxu0 0.0
      %2847 = vmatprep.subr.mxu0 0.0
      %2848 = vmatpush1.msra.mxu0 0.0
      %2849 = vmatprep.subr.mxu0 0.0
      %2850 = vmatpush1.msra.mxu0 0.0
      %2851 = vmatprep.subr.mxu0 0.0
      %2852 = vmatpush1.msra.mxu0 0.0
      %2853 = vmatprep.subr.mxu0 0.0
      %2854 = vmatpush1.msra.mxu0 0.0
      %2855 = vmatprep.subr.mxu0 0.0
      %2856 = vmatpush1.msra.mxu0 0.0
      %2857 = vmatprep.subr.mxu0 0.0
      %2858 = vmatpush1.msra.mxu0 0.0
      %2859 = vmatprep.subr.mxu0 0.0
      %2860 = vmatpush1.msra.mxu0 0.0
      %2861 = vmatprep.subr.mxu0 0.0
      %2862 = vmatpush1.msra.mxu0 0.0
      %2863 = vmatprep.subr.mxu0 0.0
      %2864 = vmatpush1.msra.mxu0 0.0
      %2865 = vmatprep.subr.mxu0 0.0
      %2866 = vmatpush1.msra.mxu0 0.0
      %2867 = vmatprep.subr.mxu0 0.0
      %2868 = vmatpush1.msra.mxu0 0.0
      %2869 = vmatprep.subr.mxu0 0.0
      %2870 = vmatpush1.msra.mxu0 0.0
      %2871 = vmatprep.subr.mxu0 0.0
      %2872 = vmatpush1.msra.mxu0 0.0
      %2873 = vmatprep.subr.mxu0 0.0
      %2874 = vmatpush1.msra.mxu0 0.0
      %2875 = vmatprep.subr.mxu0 0.0
      %2876 = vmatpush1.msra.mxu0 0.0
      %2877 = vmatprep.subr.mxu0 0.0
      %2878 = vmatpush1.msra.mxu0 0.0
      %2879 = vmatprep.subr.mxu0 0.0
      %2880 = vmatpush1.msra.mxu0 0.0
      %2881 = vmatprep.subr.mxu0 0.0
      %2882 = vmatpush1.msra.mxu0 0.0
      %2883 = vmatprep.subr.mxu0 0.0
      %2884 = vmatpush1.msra.mxu0 0.0
      %2885 = vmatprep.subr.mxu0 0.0
      %2886 = vmatpush1.msra.mxu0 0.0
      %2887 = vmatprep.subr.mxu0 0.0
      %2888 = vmatpush1.msra.mxu0 0.0
      %2889 = vmatprep.subr.mxu0 0.0
      %2890 = vmatpush1.msra.mxu0 0.0
      %2891 = vmatprep.subr.mxu0 0.0
      %2892 = vmatpush1.msra.mxu0 0.0
      %2893 = vmatprep.subr.mxu0 0.0
      %2894 = vmatpush1.msra.mxu0 0.0
      %2895 = vmatprep.subr.mxu0 0.0
      %2896 = vmatpush1.msra.mxu0 0.0
      %2897 = vmatprep.subr.mxu0 0.0
      %2898 = vmatpush1.msra.mxu0 0.0
      %2899 = vmatprep.mubr.f32.mxu0 0.0
      %2900 = vmatmul.mubr.f32.gmra.mrb[0].mxu0 %v2830
      %v2901 = vpop.f32.mrb[0].mxu0
      %v2902 = vadd.f32 0.0, %v2901
      %v2903 = vpop.f32.mrb[0].mxu0
      %2904 = vmatprep.mubr.f32.mxu0 0.0
      %2905 = vmatmul.mubr.f32.gmra.mrb[0].mxu0 %v2833
      %v2906 = vpop.f32.mrb[0].mxu0
      %v2907 = vadd.f32 0.0, %v2906
      %v2908 = vpop.f32.mrb[0].mxu0
      %2909 = vdwg.mxu0
      %2910 = vrot.lane.b32.xlu0 %v717, 112
      %v2911 = vpop.permute.xlu0 %2910
      %2912 = vrot.lane.b32.xlu0 %v722, 112
      %v2913 = vpop.permute.xlu0 %2912
      %v2917 = vsel %vm1118, %v2817, 0
      %v2920 = vsel %vm1118, %v2818, 0
      %2922 = vmatprep.subr.mxu0 0.0
      %2923 = vmatpush1.msra.mxu0 %v2911
      %2924 = vmatprep.subr.mxu0 0.0
      %2925 = vmatpush1.msra.mxu0 %v2913
      %2926 = vmatprep.subr.mxu0 0.0
      %2927 = vmatpush1.msra.mxu0 0.0
      %2928 = vmatprep.subr.mxu0 0.0
      %2929 = vmatpush1.msra.mxu0 0.0
      %2930 = vmatprep.subr.mxu0 0.0
      %2931 = vmatpush1.msra.mxu0 0.0
      %2932 = vmatprep.subr.mxu0 0.0
      %2933 = vmatpush1.msra.mxu0 0.0
      %2934 = vmatprep.subr.mxu0 0.0
      %2935 = vmatpush1.msra.mxu0 0.0
      %2936 = vmatprep.subr.mxu0 0.0
      %2937 = vmatpush1.msra.mxu0 0.0
      %2938 = vmatprep.subr.mxu0 0.0
      %2939 = vmatpush1.msra.mxu0 0.0
      %2940 = vmatprep.subr.mxu0 0.0
      %2941 = vmatpush1.msra.mxu0 0.0
      %2942 = vmatprep.subr.mxu0 0.0
      %2943 = vmatpush1.msra.mxu0 0.0
      %2944 = vmatprep.subr.mxu0 0.0
      %2945 = vmatpush1.msra.mxu0 0.0
      %2946 = vmatprep.subr.mxu0 0.0
      %2947 = vmatpush1.msra.mxu0 0.0
      %2948 = vmatprep.subr.mxu0 0.0
      %2949 = vmatpush1.msra.mxu0 0.0
      %2950 = vmatprep.subr.mxu0 0.0
      %2951 = vmatpush1.msra.mxu0 0.0
      %2952 = vmatprep.subr.mxu0 0.0
      %2953 = vmatpush1.msra.mxu0 0.0
      %2954 = vmatprep.subr.mxu0 0.0
      %2955 = vmatpush1.msra.mxu0 0.0
      %2956 = vmatprep.subr.mxu0 0.0
      %2957 = vmatpush1.msra.mxu0 0.0
      %2958 = vmatprep.subr.mxu0 0.0
      %2959 = vmatpush1.msra.mxu0 0.0
      %2960 = vmatprep.subr.mxu0 0.0
      %2961 = vmatpush1.msra.mxu0 0.0
      %2962 = vmatprep.subr.mxu0 0.0
      %2963 = vmatpush1.msra.mxu0 0.0
      %2964 = vmatprep.subr.mxu0 0.0
      %2965 = vmatpush1.msra.mxu0 0.0
      %2966 = vmatprep.subr.mxu0 0.0
      %2967 = vmatpush1.msra.mxu0 0.0
      %2968 = vmatprep.subr.mxu0 0.0
      %2969 = vmatpush1.msra.mxu0 0.0
      %2970 = vmatprep.subr.mxu0 0.0
      %2971 = vmatpush1.msra.mxu0 0.0
      %2972 = vmatprep.subr.mxu0 0.0
      %2973 = vmatpush1.msra.mxu0 0.0
      %2974 = vmatprep.subr.mxu0 0.0
      %2975 = vmatpush1.msra.mxu0 0.0
      %2976 = vmatprep.subr.mxu0 0.0
      %2977 = vmatpush1.msra.mxu0 0.0
      %2978 = vmatprep.subr.mxu0 0.0
      %2979 = vmatpush1.msra.mxu0 0.0
      %2980 = vmatprep.subr.mxu0 0.0
      %2981 = vmatpush1.msra.mxu0 0.0
      %2982 = vmatprep.subr.mxu0 0.0
      %2983 = vmatpush1.msra.mxu0 0.0
      %2984 = vmatprep.subr.mxu0 0.0
      %2985 = vmatpush1.msra.mxu0 0.0
      %2986 = vmatprep.mubr.f32.mxu0 0.0
      %2987 = vmatmul.mubr.f32.gmra.mrb[0].mxu0 %v2917
      %v2988 = vpop.f32.mrb[0].mxu0
      %v2989 = vadd.f32 0.0, %v2988
      %v2990 = vpop.f32.mrb[0].mxu0
      %2991 = vmatprep.mubr.f32.mxu0 0.0
      %2992 = vmatmul.mubr.f32.gmra.mrb[0].mxu0 %v2920
      %v2993 = vpop.f32.mrb[0].mxu0
      %v2994 = vadd.f32 0.0, %v2993
      %v2995 = vpop.f32.mrb[0].mxu0
      %2996 = vdwg.mxu0
      %2997 = vrot.lane.b32.xlu0 %v727, 112
      %v2998 = vpop.permute.xlu0 %2997
      %2999 = vrot.lane.b32.xlu0 %v732, 112
      %v3000 = vpop.permute.xlu0 %2999
      %v3004 = vsel %vm1118, %v2819, 0
      %v3007 = vsel %vm1118, %v2820, 0
      %3009 = vmatprep.subr.mxu0 0.0
      %3010 = vmatpush1.msra.mxu0 %v2998
      %3011 = vmatprep.subr.mxu0 0.0
      %3012 = vmatpush1.msra.mxu0 %v3000
      %3013 = vmatprep.subr.mxu0 0.0
      %3014 = vmatpush1.msra.mxu0 0.0
      %3015 = vmatprep.subr.mxu0 0.0
      %3016 = vmatpush1.msra.mxu0 0.0
      %3017 = vmatprep.subr.mxu0 0.0
      %3018 = vmatpush1.msra.mxu0 0.0
      %3019 = vmatprep.subr.mxu0 0.0
      %3020 = vmatpush1.msra.mxu0 0.0
      %3021 = vmatprep.subr.mxu0 0.0
      %3022 = vmatpush1.msra.mxu0 0.0
      %3023 = vmatprep.subr.mxu0 0.0
      %3024 = vmatpush1.msra.mxu0 0.0
      %3025 = vmatprep.subr.mxu0 0.0
      %3026 = vmatpush1.msra.mxu0 0.0
      %3027 = vmatprep.subr.mxu0 0.0
      %3028 = vmatpush1.msra.mxu0 0.0
      %3029 = vmatprep.subr.mxu0 0.0
      %3030 = vmatpush1.msra.mxu0 0.0
      %3031 = vmatprep.subr.mxu0 0.0
      %3032 = vmatpush1.msra.mxu0 0.0
      %3033 = vmatprep.subr.mxu0 0.0
      %3034 = vmatpush1.msra.mxu0 0.0
      %3035 = vmatprep.subr.mxu0 0.0
      %3036 = vmatpush1.msra.mxu0 0.0
      %3037 = vmatprep.subr.mxu0 0.0
      %3038 = vmatpush1.msra.mxu0 0.0
      %3039 = vmatprep.subr.mxu0 0.0
      %3040 = vmatpush1.msra.mxu0 0.0
      %3041 = vmatprep.subr.mxu0 0.0
      %3042 = vmatpush1.msra.mxu0 0.0
      %3043 = vmatprep.subr.mxu0 0.0
      %3044 = vmatpush1.msra.mxu0 0.0
      %3045 = vmatprep.subr.mxu0 0.0
      %3046 = vmatpush1.msra.mxu0 0.0
      %3047 = vmatprep.subr.mxu0 0.0
      %3048 = vmatpush1.msra.mxu0 0.0
      %3049 = vmatprep.subr.mxu0 0.0
      %3050 = vmatpush1.msra.mxu0 0.0
      %3051 = vmatprep.subr.mxu0 0.0
      %3052 = vmatpush1.msra.mxu0 0.0
      %3053 = vmatprep.subr.mxu0 0.0
      %3054 = vmatpush1.msra.mxu0 0.0
      %3055 = vmatprep.subr.mxu0 0.0
      %3056 = vmatpush1.msra.mxu0 0.0
      %3057 = vmatprep.subr.mxu0 0.0
      %3058 = vmatpush1.msra.mxu0 0.0
      %3059 = vmatprep.subr.mxu0 0.0
      %3060 = vmatpush1.msra.mxu0 0.0
      %3061 = vmatprep.subr.mxu0 0.0
      %3062 = vmatpush1.msra.mxu0 0.0
      %3063 = vmatprep.subr.mxu0 0.0
      %3064 = vmatpush1.msra.mxu0 0.0
      %3065 = vmatprep.subr.mxu0 0.0
      %3066 = vmatpush1.msra.mxu0 0.0
      %3067 = vmatprep.subr.mxu0 0.0
      %3068 = vmatpush1.msra.mxu0 0.0
      %3069 = vmatprep.subr.mxu0 0.0
      %3070 = vmatpush1.msra.mxu0 0.0
      %3071 = vmatprep.subr.mxu0 0.0
      %3072 = vmatpush1.msra.mxu0 0.0
      %3073 = vmatprep.mubr.f32.mxu0 0.0
      %3074 = vmatmul.mubr.f32.gmra.mrb[0].mxu0 %v3004
      %v3075 = vpop.f32.mrb[0].mxu0
      %v3076 = vadd.f32 0.0, %v3075
      %v3077 = vpop.f32.mrb[0].mxu0
      %3078 = vmatprep.mubr.f32.mxu0 0.0
      %3079 = vmatmul.mubr.f32.gmra.mrb[0].mxu0 %v3007
      %v3080 = vpop.f32.mrb[0].mxu0
      %v3081 = vadd.f32 0.0, %v3080
      %v3082 = vpop.f32.mrb[0].mxu0
      %3083 = vdwg.mxu0
      %3084 = vrot.lane.b32.xlu0 %v737, 112
      %v3085 = vpop.permute.xlu0 %3084
      %3086 = vrot.lane.b32.xlu0 %v742, 112
      %v3087 = vpop.permute.xlu0 %3086
      %v3091 = vsel %vm1118, %v2821, 0
      %v3094 = vsel %vm1118, %v2822, 0
      %3096 = vmatprep.subr.mxu0 0.0
      %3097 = vmatpush1.msra.mxu0 %v3085
      %3098 = vmatprep.subr.mxu0 0.0
      %3099 = vmatpush1.msra.mxu0 %v3087
      %3100 = vmatprep.subr.mxu0 0.0
      %3101 = vmatpush1.msra.mxu0 0.0
      %3102 = vmatprep.subr.mxu0 0.0
      %3103 = vmatpush1.msra.mxu0 0.0
      %3104 = vmatprep.subr.mxu0 0.0
      %3105 = vmatpush1.msra.mxu0 0.0
      %3106 = vmatprep.subr.mxu0 0.0
      %3107 = vmatpush1.msra.mxu0 0.0
      %3108 = vmatprep.subr.mxu0 0.0
      %3109 = vmatpush1.msra.mxu0 0.0
      %3110 = vmatprep.subr.mxu0 0.0
      %3111 = vmatpush1.msra.mxu0 0.0
      %3112 = vmatprep.subr.mxu0 0.0
      %3113 = vmatpush1.msra.mxu0 0.0
      %3114 = vmatprep.subr.mxu0 0.0
      %3115 = vmatpush1.msra.mxu0 0.0
      %3116 = vmatprep.subr.mxu0 0.0
      %3117 = vmatpush1.msra.mxu0 0.0
      %3118 = vmatprep.subr.mxu0 0.0
      %3119 = vmatpush1.msra.mxu0 0.0
      %3120 = vmatprep.subr.mxu0 0.0
      %3121 = vmatpush1.msra.mxu0 0.0
      %3122 = vmatprep.subr.mxu0 0.0
      %3123 = vmatpush1.msra.mxu0 0.0
      %3124 = vmatprep.subr.mxu0 0.0
      %3125 = vmatpush1.msra.mxu0 0.0
      %3126 = vmatprep.subr.mxu0 0.0
      %3127 = vmatpush1.msra.mxu0 0.0
      %3128 = vmatprep.subr.mxu0 0.0
      %3129 = vmatpush1.msra.mxu0 0.0
      %3130 = vmatprep.subr.mxu0 0.0
      %3131 = vmatpush1.msra.mxu0 0.0
      %3132 = vmatprep.subr.mxu0 0.0
      %3133 = vmatpush1.msra.mxu0 0.0
      %3134 = vmatprep.subr.mxu0 0.0
      %3135 = vmatpush1.msra.mxu0 0.0
      %3136 = vmatprep.subr.mxu0 0.0
      %3137 = vmatpush1.msra.mxu0 0.0
      %3138 = vmatprep.subr.mxu0 0.0
      %3139 = vmatpush1.msra.mxu0 0.0
      %3140 = vmatprep.subr.mxu0 0.0
      %3141 = vmatpush1.msra.mxu0 0.0
      %3142 = vmatprep.subr.mxu0 0.0
      %3143 = vmatpush1.msra.mxu0 0.0
      %3144 = vmatprep.subr.mxu0 0.0
      %3145 = vmatpush1.msra.mxu0 0.0
      %3146 = vmatprep.subr.mxu0 0.0
      %3147 = vmatpush1.msra.mxu0 0.0
      %3148 = vmatprep.subr.mxu0 0.0
      %3149 = vmatpush1.msra.mxu0 0.0
      %3150 = vmatprep.subr.mxu0 0.0
      %3151 = vmatpush1.msra.mxu0 0.0
      %3152 = vmatprep.subr.mxu0 0.0
      %3153 = vmatpush1.msra.mxu0 0.0
      %3154 = vmatprep.subr.mxu0 0.0
      %3155 = vmatpush1.msra.mxu0 0.0
      %3156 = vmatprep.subr.mxu0 0.0
      %3157 = vmatpush1.msra.mxu0 0.0
      %3158 = vmatprep.subr.mxu0 0.0
      %3159 = vmatpush1.msra.mxu0 0.0
      %3160 = vmatprep.mubr.f32.mxu0 0.0
      %3161 = vmatmul.mubr.f32.gmra.mrb[0].mxu0 %v3091
      %v3162 = vpop.f32.mrb[0].mxu0
      %v3163 = vadd.f32 0.0, %v3162
      %v3164 = vpop.f32.mrb[0].mxu0
      %3165 = vmatprep.mubr.f32.mxu0 0.0
      %3166 = vmatmul.mubr.f32.gmra.mrb[0].mxu0 %v3094
      %v3167 = vpop.f32.mrb[0].mxu0
      %v3168 = vadd.f32 0.0, %v3167
      %v3169 = vpop.f32.mrb[0].mxu0
      %3170 = vdwg.mxu0
      %3171 = vrot.lane.b32.xlu0 %v471, 104
      %v3172 = vpop.permute.xlu0 %3171
      %3173 = vrot.lane.b32.xlu0 %v476, 104
      %v3174 = vpop.permute.xlu0 %3173
      %3175 = vrot.lane.b32.xlu0 %v589, 104
      %v3176 = vpop.permute.xlu0 %3175
      %3177 = vrot.lane.b32.xlu0 %v594, 104
      %v3178 = vpop.permute.xlu0 %3177
      %v3179 = vsel %vm753, %v3172, 0
      %v3181 = vsel %vm753, %v3174, 0
      %v3183 = vsel %vm753, %v3176, 0
      %v3185 = vsel %vm753, %v3178, 0
      %3187 = vmatprep.subr.mxu0 0.0
      %3188 = vmatpush1.xpose.msra.mxu0 %v3183
      %3189 = vmatprep.subr.mxu0 0.0
      %3190 = vmatpush1.xpose.msra.mxu0 %v3185
      %3191 = vmatprep.subr.mxu0 0.0
      %3192 = vmatpush1.xpose.msra.mxu0 0.0
      %3193 = vmatprep.subr.mxu0 0.0
      %3194 = vmatpush1.xpose.msra.mxu0 0.0
      %3195 = vmatprep.subr.mxu0 0.0
      %3196 = vmatpush1.xpose.msra.mxu0 0.0
      %3197 = vmatprep.subr.mxu0 0.0
      %3198 = vmatpush1.xpose.msra.mxu0 0.0
      %3199 = vmatprep.subr.mxu0 0.0
      %3200 = vmatpush1.xpose.msra.mxu0 0.0
      %3201 = vmatprep.subr.mxu0 0.0
      %3202 = vmatpush1.xpose.msra.mxu0 0.0
      %3203 = vmatprep.subr.mxu0 0.0
      %3204 = vmatpush1.xpose.msra.mxu0 0.0
      %3205 = vmatprep.subr.mxu0 0.0
      %3206 = vmatpush1.xpose.msra.mxu0 0.0
      %3207 = vmatprep.subr.mxu0 0.0
      %3208 = vmatpush1.xpose.msra.mxu0 0.0
      %3209 = vmatprep.subr.mxu0 0.0
      %3210 = vmatpush1.xpose.msra.mxu0 0.0
      %3211 = vmatprep.subr.mxu0 0.0
      %3212 = vmatpush1.xpose.msra.mxu0 0.0
      %3213 = vmatprep.subr.mxu0 0.0
      %3214 = vmatpush1.xpose.msra.mxu0 0.0
      %3215 = vmatprep.subr.mxu0 0.0
      %3216 = vmatpush1.xpose.msra.mxu0 0.0
      %3217 = vmatprep.subr.mxu0 0.0
      %3218 = vmatpush1.xpose.msra.mxu0 0.0
      %3219 = vmatprep.subr.mxu0 0.0
      %3220 = vmatpush1.xpose.msra.mxu0 0.0
      %3221 = vmatprep.subr.mxu0 0.0
      %3222 = vmatpush1.xpose.msra.mxu0 0.0
      %3223 = vmatprep.subr.mxu0 0.0
      %3224 = vmatpush1.xpose.msra.mxu0 0.0
      %3225 = vmatprep.subr.mxu0 0.0
      %3226 = vmatpush1.xpose.msra.mxu0 0.0
      %3227 = vmatprep.subr.mxu0 0.0
      %3228 = vmatpush1.xpose.msra.mxu0 0.0
      %3229 = vmatprep.subr.mxu0 0.0
      %3230 = vmatpush1.xpose.msra.mxu0 0.0
      %3231 = vmatprep.subr.mxu0 0.0
      %3232 = vmatpush1.xpose.msra.mxu0 0.0
      %3233 = vmatprep.subr.mxu0 0.0
      %3234 = vmatpush1.xpose.msra.mxu0 0.0
      %3235 = vmatprep.subr.mxu0 0.0
      %3236 = vmatpush1.xpose.msra.mxu0 0.0
      %3237 = vmatprep.subr.mxu0 0.0
      %3238 = vmatpush1.xpose.msra.mxu0 0.0
      %3239 = vmatprep.subr.mxu0 0.0
      %3240 = vmatpush1.xpose.msra.mxu0 0.0
      %3241 = vmatprep.subr.mxu0 0.0
      %3242 = vmatpush1.xpose.msra.mxu0 0.0
      %3243 = vmatprep.subr.mxu0 0.0
      %3244 = vmatpush1.xpose.msra.mxu0 0.0
      %3245 = vmatprep.subr.mxu0 0.0
      %3246 = vmatpush1.xpose.msra.mxu0 0.0
      %3247 = vmatprep.subr.mxu0 0.0
      %3248 = vmatpush1.xpose.msra.mxu0 0.0
      %3249 = vmatprep.subr.mxu0 0.0
      %3250 = vmatpush1.xpose.msra.mxu0 0.0
      %3251 = vmatprep.mubr.f32.mxu0 0.0
      %3252 = vmatmul.mubr.f32.gmra.mrb[0].mxu0 %v3179
      %v3253 = vpop.f32.mrb[0].mxu0
      %v3254 = vadd.f32 0.0, %v3253
      %v3255 = vpop.f32.mrb[0].mxu0
      %3256 = vmatprep.mubr.f32.mxu0 0.0
      %3257 = vmatmul.mubr.f32.gmra.mrb[0].mxu0 %v3181
      %v3258 = vpop.f32.mrb[0].mxu0
      %v3259 = vadd.f32 0.0, %v3258
      %v3260 = vpop.f32.mrb[0].mxu0
      %3261 = vdwg.mxu0
      %3262 = vrot.lane.b32.xlu0 %v481, 104
      %v3263 = vpop.permute.xlu0 %3262
      %3264 = vrot.lane.b32.xlu0 %v486, 104
      %v3265 = vpop.permute.xlu0 %3264
      %3266 = vrot.lane.b32.xlu0 %v599, 104
      %v3267 = vpop.permute.xlu0 %3266
      %3268 = vrot.lane.b32.xlu0 %v604, 104
      %v3269 = vpop.permute.xlu0 %3268
      %v3270 = vsel %vm753, %v3263, 0
      %v3272 = vsel %vm753, %v3265, 0
      %v3274 = vsel %vm753, %v3267, 0
      %v3276 = vsel %vm753, %v3269, 0
      %3278 = vmatprep.subr.mxu0 0.0
      %3279 = vmatpush1.xpose.msra.mxu0 %v3274
      %3280 = vmatprep.subr.mxu0 0.0
      %3281 = vmatpush1.xpose.msra.mxu0 %v3276
      %3282 = vmatprep.subr.mxu0 0.0
      %3283 = vmatpush1.xpose.msra.mxu0 0.0
      %3284 = vmatprep.subr.mxu0 0.0
      %3285 = vmatpush1.xpose.msra.mxu0 0.0
      %3286 = vmatprep.subr.mxu0 0.0
      %3287 = vmatpush1.xpose.msra.mxu0 0.0
      %3288 = vmatprep.subr.mxu0 0.0
      %3289 = vmatpush1.xpose.msra.mxu0 0.0
      %3290 = vmatprep.subr.mxu0 0.0
      %3291 = vmatpush1.xpose.msra.mxu0 0.0
      %3292 = vmatprep.subr.mxu0 0.0
      %3293 = vmatpush1.xpose.msra.mxu0 0.0
      %3294 = vmatprep.subr.mxu0 0.0
      %3295 = vmatpush1.xpose.msra.mxu0 0.0
      %3296 = vmatprep.subr.mxu0 0.0
      %3297 = vmatpush1.xpose.msra.mxu0 0.0
      %3298 = vmatprep.subr.mxu0 0.0
      %3299 = vmatpush1.xpose.msra.mxu0 0.0
      %3300 = vmatprep.subr.mxu0 0.0
      %3301 = vmatpush1.xpose.msra.mxu0 0.0
      %3302 = vmatprep.subr.mxu0 0.0
      %3303 = vmatpush1.xpose.msra.mxu0 0.0
      %3304 = vmatprep.subr.mxu0 0.0
      %3305 = vmatpush1.xpose.msra.mxu0 0.0
      %3306 = vmatprep.subr.mxu0 0.0
      %3307 = vmatpush1.xpose.msra.mxu0 0.0
      %3308 = vmatprep.subr.mxu0 0.0
      %3309 = vmatpush1.xpose.msra.mxu0 0.0
      %3310 = vmatprep.subr.mxu0 0.0
      %3311 = vmatpush1.xpose.msra.mxu0 0.0
      %3312 = vmatprep.subr.mxu0 0.0
      %3313 = vmatpush1.xpose.msra.mxu0 0.0
      %3314 = vmatprep.subr.mxu0 0.0
      %3315 = vmatpush1.xpose.msra.mxu0 0.0
      %3316 = vmatprep.subr.mxu0 0.0
      %3317 = vmatpush1.xpose.msra.mxu0 0.0
      %3318 = vmatprep.subr.mxu0 0.0
      %3319 = vmatpush1.xpose.msra.mxu0 0.0
      %3320 = vmatprep.subr.mxu0 0.0
      %3321 = vmatpush1.xpose.msra.mxu0 0.0
      %3322 = vmatprep.subr.mxu0 0.0
      %3323 = vmatpush1.xpose.msra.mxu0 0.0
      %3324 = vmatprep.subr.mxu0 0.0
      %3325 = vmatpush1.xpose.msra.mxu0 0.0
      %3326 = vmatprep.subr.mxu0 0.0
      %3327 = vmatpush1.xpose.msra.mxu0 0.0
      %3328 = vmatprep.subr.mxu0 0.0
      %3329 = vmatpush1.xpose.msra.mxu0 0.0
      %3330 = vmatprep.subr.mxu0 0.0
      %3331 = vmatpush1.xpose.msra.mxu0 0.0
      %3332 = vmatprep.subr.mxu0 0.0
      %3333 = vmatpush1.xpose.msra.mxu0 0.0
      %3334 = vmatprep.subr.mxu0 0.0
      %3335 = vmatpush1.xpose.msra.mxu0 0.0
      %3336 = vmatprep.subr.mxu0 0.0
      %3337 = vmatpush1.xpose.msra.mxu0 0.0
      %3338 = vmatprep.subr.mxu0 0.0
      %3339 = vmatpush1.xpose.msra.mxu0 0.0
      %3340 = vmatprep.subr.mxu0 0.0
      %3341 = vmatpush1.xpose.msra.mxu0 0.0
      %3342 = vmatprep.mubr.f32.mxu0 0.0
      %3343 = vmatmul.mubr.f32.gmra.mrb[0].mxu0 %v3270
      %v3344 = vpop.f32.mrb[0].mxu0
      %v3345 = vadd.f32 0.0, %v3344
      %v3346 = vpop.f32.mrb[0].mxu0
      %3347 = vmatprep.mubr.f32.mxu0 0.0
      %3348 = vmatmul.mubr.f32.gmra.mrb[0].mxu0 %v3272
      %v3349 = vpop.f32.mrb[0].mxu0
      %v3350 = vadd.f32 0.0, %v3349
      %v3351 = vpop.f32.mrb[0].mxu0
      %3352 = vdwg.mxu0
      %3353 = vrot.lane.b32.xlu0 %v491, 104
      %v3354 = vpop.permute.xlu0 %3353
      %3355 = vrot.lane.b32.xlu0 %v496, 104
      %v3356 = vpop.permute.xlu0 %3355
      %3357 = vrot.lane.b32.xlu0 %v609, 104
      %v3358 = vpop.permute.xlu0 %3357
      %3359 = vrot.lane.b32.xlu0 %v614, 104
      %v3360 = vpop.permute.xlu0 %3359
      %v3361 = vsel %vm753, %v3354, 0
      %v3363 = vsel %vm753, %v3356, 0
      %v3365 = vsel %vm753, %v3358, 0
      %v3367 = vsel %vm753, %v3360, 0
      %3369 = vmatprep.subr.mxu0 0.0
      %3370 = vmatpush1.xpose.msra.mxu0 %v3365
      %3371 = vmatprep.subr.mxu0 0.0
      %3372 = vmatpush1.xpose.msra.mxu0 %v3367
      %3373 = vmatprep.subr.mxu0 0.0
      %3374 = vmatpush1.xpose.msra.mxu0 0.0
      %3375 = vmatprep.subr.mxu0 0.0
      %3376 = vmatpush1.xpose.msra.mxu0 0.0
      %3377 = vmatprep.subr.mxu0 0.0
      %3378 = vmatpush1.xpose.msra.mxu0 0.0
      %3379 = vmatprep.subr.mxu0 0.0
      %3380 = vmatpush1.xpose.msra.mxu0 0.0
      %3381 = vmatprep.subr.mxu0 0.0
      %3382 = vmatpush1.xpose.msra.mxu0 0.0
      %3383 = vmatprep.subr.mxu0 0.0
      %3384 = vmatpush1.xpose.msra.mxu0 0.0
      %3385 = vmatprep.subr.mxu0 0.0
      %3386 = vmatpush1.xpose.msra.mxu0 0.0
      %3387 = vmatprep.subr.mxu0 0.0
      %3388 = vmatpush1.xpose.msra.mxu0 0.0
      %3389 = vmatprep.subr.mxu0 0.0
      %3390 = vmatpush1.xpose.msra.mxu0 0.0
      %3391 = vmatprep.subr.mxu0 0.0
      %3392 = vmatpush1.xpose.msra.mxu0 0.0
      %3393 = vmatprep.subr.mxu0 0.0
      %3394 = vmatpush1.xpose.msra.mxu0 0.0
      %3395 = vmatprep.subr.mxu0 0.0
      %3396 = vmatpush1.xpose.msra.mxu0 0.0
      %3397 = vmatprep.subr.mxu0 0.0
      %3398 = vmatpush1.xpose.msra.mxu0 0.0
      %3399 = vmatprep.subr.mxu0 0.0
      %3400 = vmatpush1.xpose.msra.mxu0 0.0
      %3401 = vmatprep.subr.mxu0 0.0
      %3402 = vmatpush1.xpose.msra.mxu0 0.0
      %3403 = vmatprep.subr.mxu0 0.0
      %3404 = vmatpush1.xpose.msra.mxu0 0.0
      %3405 = vmatprep.subr.mxu0 0.0
      %3406 = vmatpush1.xpose.msra.mxu0 0.0
      %3407 = vmatprep.subr.mxu0 0.0
      %3408 = vmatpush1.xpose.msra.mxu0 0.0
      %3409 = vmatprep.subr.mxu0 0.0
      %3410 = vmatpush1.xpose.msra.mxu0 0.0
      %3411 = vmatprep.subr.mxu0 0.0
      %3412 = vmatpush1.xpose.msra.mxu0 0.0
      %3413 = vmatprep.subr.mxu0 0.0
      %3414 = vmatpush1.xpose.msra.mxu0 0.0
      %3415 = vmatprep.subr.mxu0 0.0
      %3416 = vmatpush1.xpose.msra.mxu0 0.0
      %3417 = vmatprep.subr.mxu0 0.0
      %3418 = vmatpush1.xpose.msra.mxu0 0.0
      %3419 = vmatprep.subr.mxu0 0.0
      %3420 = vmatpush1.xpose.msra.mxu0 0.0
      %3421 = vmatprep.subr.mxu0 0.0
      %3422 = vmatpush1.xpose.msra.mxu0 0.0
      %3423 = vmatprep.subr.mxu0 0.0
      %3424 = vmatpush1.xpose.msra.mxu0 0.0
      %3425 = vmatprep.subr.mxu0 0.0
      %3426 = vmatpush1.xpose.msra.mxu0 0.0
      %3427 = vmatprep.subr.mxu0 0.0
      %3428 = vmatpush1.xpose.msra.mxu0 0.0
      %3429 = vmatprep.subr.mxu0 0.0
      %3430 = vmatpush1.xpose.msra.mxu0 0.0
      %3431 = vmatprep.subr.mxu0 0.0
      %3432 = vmatpush1.xpose.msra.mxu0 0.0
      %3433 = vmatprep.mubr.f32.mxu0 0.0
      %3434 = vmatmul.mubr.f32.gmra.mrb[0].mxu0 %v3361
      %v3435 = vpop.f32.mrb[0].mxu0
      %v3436 = vadd.f32 0.0, %v3435
      %v3437 = vpop.f32.mrb[0].mxu0
      %3438 = vmatprep.mubr.f32.mxu0 0.0
      %3439 = vmatmul.mubr.f32.gmra.mrb[0].mxu0 %v3363
      %v3440 = vpop.f32.mrb[0].mxu0
      %v3441 = vadd.f32 0.0, %v3440
      %v3442 = vpop.f32.mrb[0].mxu0
      %3443 = vdwg.mxu0
      %3444 = vrot.lane.b32.xlu0 %v501, 104
      %v3445 = vpop.permute.xlu0 %3444
      %3446 = vrot.lane.b32.xlu0 %v506, 104
      %v3447 = vpop.permute.xlu0 %3446
      %3448 = vrot.lane.b32.xlu0 %v619, 104
      %v3449 = vpop.permute.xlu0 %3448
      %3450 = vrot.lane.b32.xlu0 %v624, 104
      %v3451 = vpop.permute.xlu0 %3450
      %v3452 = vsel %vm753, %v3445, 0
      %v3454 = vsel %vm753, %v3447, 0
      %v3456 = vsel %vm753, %v3449, 0
      %v3458 = vsel %vm753, %v3451, 0
      %3460 = vmatprep.subr.mxu0 0.0
      %3461 = vmatpush1.xpose.msra.mxu0 %v3456
      %3462 = vmatprep.subr.mxu0 0.0
      %3463 = vmatpush1.xpose.msra.mxu0 %v3458
      %3464 = vmatprep.subr.mxu0 0.0
      %3465 = vmatpush1.xpose.msra.mxu0 0.0
      %3466 = vmatprep.subr.mxu0 0.0
      %3467 = vmatpush1.xpose.msra.mxu0 0.0
      %3468 = vmatprep.subr.mxu0 0.0
      %3469 = vmatpush1.xpose.msra.mxu0 0.0
      %3470 = vmatprep.subr.mxu0 0.0
      %3471 = vmatpush1.xpose.msra.mxu0 0.0
      %3472 = vmatprep.subr.mxu0 0.0
      %3473 = vmatpush1.xpose.msra.mxu0 0.0
      %3474 = vmatprep.subr.mxu0 0.0
      %3475 = vmatpush1.xpose.msra.mxu0 0.0
      %3476 = vmatprep.subr.mxu0 0.0
      %3477 = vmatpush1.xpose.msra.mxu0 0.0
      %3478 = vmatprep.subr.mxu0 0.0
      %3479 = vmatpush1.xpose.msra.mxu0 0.0
      %3480 = vmatprep.subr.mxu0 0.0
      %3481 = vmatpush1.xpose.msra.mxu0 0.0
      %3482 = vmatprep.subr.mxu0 0.0
      %3483 = vmatpush1.xpose.msra.mxu0 0.0
      %3484 = vmatprep.subr.mxu0 0.0
      %3485 = vmatpush1.xpose.msra.mxu0 0.0
      %3486 = vmatprep.subr.mxu0 0.0
      %3487 = vmatpush1.xpose.msra.mxu0 0.0
      %3488 = vmatprep.subr.mxu0 0.0
      %3489 = vmatpush1.xpose.msra.mxu0 0.0
      %3490 = vmatprep.subr.mxu0 0.0
      %3491 = vmatpush1.xpose.msra.mxu0 0.0
      %3492 = vmatprep.subr.mxu0 0.0
      %3493 = vmatpush1.xpose.msra.mxu0 0.0
      %3494 = vmatprep.subr.mxu0 0.0
      %3495 = vmatpush1.xpose.msra.mxu0 0.0
      %3496 = vmatprep.subr.mxu0 0.0
      %3497 = vmatpush1.xpose.msra.mxu0 0.0
      %3498 = vmatprep.subr.mxu0 0.0
      %3499 = vmatpush1.xpose.msra.mxu0 0.0
      %3500 = vmatprep.subr.mxu0 0.0
      %3501 = vmatpush1.xpose.msra.mxu0 0.0
      %3502 = vmatprep.subr.mxu0 0.0
      %3503 = vmatpush1.xpose.msra.mxu0 0.0
      %3504 = vmatprep.subr.mxu0 0.0
      %3505 = vmatpush1.xpose.msra.mxu0 0.0
      %3506 = vmatprep.subr.mxu0 0.0
      %3507 = vmatpush1.xpose.msra.mxu0 0.0
      %3508 = vmatprep.subr.mxu0 0.0
      %3509 = vmatpush1.xpose.msra.mxu0 0.0
      %3510 = vmatprep.subr.mxu0 0.0
      %3511 = vmatpush1.xpose.msra.mxu0 0.0
      %3512 = vmatprep.subr.mxu0 0.0
      %3513 = vmatpush1.xpose.msra.mxu0 0.0
      %3514 = vmatprep.subr.mxu0 0.0
      %3515 = vmatpush1.xpose.msra.mxu0 0.0
      %3516 = vmatprep.subr.mxu0 0.0
      %3517 = vmatpush1.xpose.msra.mxu0 0.0
      %3518 = vmatprep.subr.mxu0 0.0
      %3519 = vmatpush1.xpose.msra.mxu0 0.0
      %3520 = vmatprep.subr.mxu0 0.0
      %3521 = vmatpush1.xpose.msra.mxu0 0.0
      %3522 = vmatprep.subr.mxu0 0.0
      %3523 = vmatpush1.xpose.msra.mxu0 0.0
      %3524 = vmatprep.mubr.f32.mxu0 0.0
      %3525 = vmatmul.mubr.f32.gmra.mrb[0].mxu0 %v3452
      %v3526 = vpop.f32.mrb[0].mxu0
      %v3527 = vadd.f32 0.0, %v3526
      %v3528 = vpop.f32.mrb[0].mxu0
      %3529 = vmatprep.mubr.f32.mxu0 0.0
      %3530 = vmatmul.mubr.f32.gmra.mrb[0].mxu0 %v3454
      %v3531 = vpop.f32.mrb[0].mxu0
      %v3532 = vadd.f32 0.0, %v3531
      %v3533 = vpop.f32.mrb[0].mxu0
      %3534 = vdwg.mxu0
      %v3535 = vmul.f32 %v3254, 0.35355338
      %v3536 = vmul.f32 %v3259, 0.35355338
      %v3537 = vmul.f32 %v3345, 0.35355338
      %v3538 = vmul.f32 %v3350, 0.35355338
      %v3539 = vmul.f32 %v3436, 0.35355338
      %v3540 = vmul.f32 %v3441, 0.35355338
      %v3541 = vmul.f32 %v3527, 0.35355338
      %v3542 = vmul.f32 %v3532, 0.35355338
      %v3543 = vadd.f32 %v3535, %v745
      %v3544 = vadd.f32 %v3536, %v746
      %v3545 = vadd.f32 %v3537, %v747
      %v3546 = vadd.f32 %v3538, %v748
      %v3547 = vadd.f32 %v3539, %v749
      %v3548 = vadd.f32 %v3540, %v750
      %v3549 = vadd.f32 %v3541, %v751
      %v3550 = vadd.f32 %v3542, %v752
      %v3551 = vsel %vm1118, %v3543, -inf
      %3552 = vmax.xlane.f32.xlu0 %v3551
      %v3553 = vpop.xlane.xlu0 %3552
      %v3554 = vsel %vm1118, %v3544, -inf
      %3555 = vmax.xlane.f32.xlu0 %v3554
      %v3556 = vpop.xlane.xlu0 %3555
      %v3557 = vsel %vm1118, %v3545, -inf
      %3558 = vmax.xlane.f32.xlu0 %v3557
      %v3559 = vpop.xlane.xlu0 %3558
      %v3560 = vsel %vm1118, %v3546, -inf
      %3561 = vmax.xlane.f32.xlu0 %v3560
      %v3562 = vpop.xlane.xlu0 %3561
      %v3563 = vsel %vm1118, %v3547, -inf
      %3564 = vmax.xlane.f32.xlu0 %v3563
      %v3565 = vpop.xlane.xlu0 %3564
      %v3566 = vsel %vm1118, %v3548, -inf
      %3567 = vmax.xlane.f32.xlu0 %v3566
      %v3568 = vpop.xlane.xlu0 %3567
      %v3569 = vsel %vm1118, %v3549, -inf
      %3570 = vmax.xlane.f32.xlu0 %v3569
      %v3571 = vpop.xlane.xlu0 %3570
      %v3572 = vsel %vm1118, %v3550, -inf
      %3573 = vmax.xlane.f32.xlu0 %v3572
      %v3574 = vpop.xlane.xlu0 %3573
      %v3575 = vsub.f32 %v3543, %v3553
      %v3576 = vsub.f32 %v3544, %v3556
      %v3577 = vsub.f32 %v3545, %v3559
      %v3578 = vsub.f32 %v3546, %v3562
      %v3579 = vsub.f32 %v3547, %v3565
      %v3580 = vsub.f32 %v3548, %v3568
      %v3581 = vsub.f32 %v3549, %v3571
      %v3582 = vsub.f32 %v3550, %v3574
      %v3583 = vmul.f32 %v3575, 1.442695
      %v3584 = vpow.pop %v3583
      %v3585 = vmul.f32 %v3576, 1.442695
      %v3586 = vpow.pop %v3585
      %v3587 = vmul.f32 %v3577, 1.442695
      %v3588 = vpow.pop %v3587
      %v3589 = vmul.f32 %v3578, 1.442695
      %v3590 = vpow.pop %v3589
      %v3591 = vmul.f32 %v3579, 1.442695
      %v3592 = vpow.pop %v3591
      %v3593 = vmul.f32 %v3580, 1.442695
      %v3594 = vpow.pop %v3593
      %v3595 = vmul.f32 %v3581, 1.442695
      %v3596 = vpow.pop %v3595
      %v3597 = vmul.f32 %v3582, 1.442695
      %v3598 = vpow.pop %v3597
      %v3599 = vsel %vm1118, %v3584, 0.0
      %3600 = vadd.xlane.f32.xlu0 %v3599
      %v3601 = vpop.xlane.xlu0 %3600
      %v3602 = vsel %vm1118, %v3586, 0.0
      %3603 = vadd.xlane.f32.xlu0 %v3602
      %v3604 = vpop.xlane.xlu0 %3603
      %v3605 = vsel %vm1118, %v3588, 0.0
      %3606 = vadd.xlane.f32.xlu0 %v3605
      %v3607 = vpop.xlane.xlu0 %3606
      %v3608 = vsel %vm1118, %v3590, 0.0
      %3609 = vadd.xlane.f32.xlu0 %v3608
      %v3610 = vpop.xlane.xlu0 %3609
      %v3611 = vsel %vm1118, %v3592, 0.0
      %3612 = vadd.xlane.f32.xlu0 %v3611
      %v3613 = vpop.xlane.xlu0 %3612
      %v3614 = vsel %vm1118, %v3594, 0.0
      %3615 = vadd.xlane.f32.xlu0 %v3614
      %v3616 = vpop.xlane.xlu0 %3615
      %v3617 = vsel %vm1118, %v3596, 0.0
      %3618 = vadd.xlane.f32.xlu0 %v3617
      %v3619 = vpop.xlane.xlu0 %3618
      %v3620 = vsel %vm1118, %v3598, 0.0
      %3621 = vadd.xlane.f32.xlu0 %v3620
      %v3622 = vpop.xlane.xlu0 %3621
      %v3623 = vrcp.pop %v3601
      %v3624 = vrcp.pop %v3604
      %v3625 = vrcp.pop %v3607
      %v3626 = vrcp.pop %v3610
      %v3627 = vrcp.pop %v3613
      %v3628 = vrcp.pop %v3616
      %v3629 = vrcp.pop %v3619
      %v3630 = vrcp.pop %v3622
      %v3631 = vmul.f32 %v3584, %v3623
      %v3632 = vmul.f32 %v3586, %v3624
      %v3633 = vmul.f32 %v3588, %v3625
      %v3634 = vmul.f32 %v3590, %v3626
      %v3635 = vmul.f32 %v3592, %v3627
      %v3636 = vmul.f32 %v3594, %v3628
      %v3637 = vmul.f32 %v3596, %v3629
      %v3638 = vmul.f32 %v3598, %v3630
      %3639 = vrot.lane.b32.xlu0 %v707, 104
      %v3640 = vpop.permute.xlu0 %3639
      %3641 = vrot.lane.b32.xlu0 %v712, 104
      %v3642 = vpop.permute.xlu0 %3641
      %v3646 = vsel %vm1118, %v3631, 0
      %v3649 = vsel %vm1118, %v3632, 0
      %3651 = vmatprep.subr.mxu0 0.0
      %3652 = vmatpush1.msra.mxu0 %v3640
      %3653 = vmatprep.subr.mxu0 0.0
      %3654 = vmatpush1.msra.mxu0 %v3642
      %3655 = vmatprep.subr.mxu0 0.0
      %3656 = vmatpush1.msra.mxu0 0.0
      %3657 = vmatprep.subr.mxu0 0.0
      %3658 = vmatpush1.msra.mxu0 0.0
      %3659 = vmatprep.subr.mxu0 0.0
      %3660 = vmatpush1.msra.mxu0 0.0
      %3661 = vmatprep.subr.mxu0 0.0
      %3662 = vmatpush1.msra.mxu0 0.0
      %3663 = vmatprep.subr.mxu0 0.0
      %3664 = vmatpush1.msra.mxu0 0.0
      %3665 = vmatprep.subr.mxu0 0.0
      %3666 = vmatpush1.msra.mxu0 0.0
      %3667 = vmatprep.subr.mxu0 0.0
      %3668 = vmatpush1.msra.mxu0 0.0
      %3669 = vmatprep.subr.mxu0 0.0
      %3670 = vmatpush1.msra.mxu0 0.0
      %3671 = vmatprep.subr.mxu0 0.0
      %3672 = vmatpush1.msra.mxu0 0.0
      %3673 = vmatprep.subr.mxu0 0.0
      %3674 = vmatpush1.msra.mxu0 0.0
      %3675 = vmatprep.subr.mxu0 0.0
      %3676 = vmatpush1.msra.mxu0 0.0
      %3677 = vmatprep.subr.mxu0 0.0
      %3678 = vmatpush1.msra.mxu0 0.0
      %3679 = vmatprep.subr.mxu0 0.0
      %3680 = vmatpush1.msra.mxu0 0.0
      %3681 = vmatprep.subr.mxu0 0.0
      %3682 = vmatpush1.msra.mxu0 0.0
      %3683 = vmatprep.subr.mxu0 0.0
      %3684 = vmatpush1.msra.mxu0 0.0
      %3685 = vmatprep.subr.mxu0 0.0
      %3686 = vmatpush1.msra.mxu0 0.0
      %3687 = vmatprep.subr.mxu0 0.0
      %3688 = vmatpush1.msra.mxu0 0.0
      %3689 = vmatprep.subr.mxu0 0.0
      %3690 = vmatpush1.msra.mxu0 0.0
      %3691 = vmatprep.subr.mxu0 0.0
      %3692 = vmatpush1.msra.mxu0 0.0
      %3693 = vmatprep.subr.mxu0 0.0
      %3694 = vmatpush1.msra.mxu0 0.0
      %3695 = vmatprep.subr.mxu0 0.0
      %3696 = vmatpush1.msra.mxu0 0.0
      %3697 = vmatprep.subr.mxu0 0.0
      %3698 = vmatpush1.msra.mxu0 0.0
      %3699 = vmatprep.subr.mxu0 0.0
      %3700 = vmatpush1.msra.mxu0 0.0
      %3701 = vmatprep.subr.mxu0 0.0
      %3702 = vmatpush1.msra.mxu0 0.0
      %3703 = vmatprep.subr.mxu0 0.0
      %3704 = vmatpush1.msra.mxu0 0.0
      %3705 = vmatprep.subr.mxu0 0.0
      %3706 = vmatpush1.msra.mxu0 0.0
      %3707 = vmatprep.subr.mxu0 0.0
      %3708 = vmatpush1.msra.mxu0 0.0
      %3709 = vmatprep.subr.mxu0 0.0
      %3710 = vmatpush1.msra.mxu0 0.0
      %3711 = vmatprep.subr.mxu0 0.0
      %3712 = vmatpush1.msra.mxu0 0.0
      %3713 = vmatprep.subr.mxu0 0.0
      %3714 = vmatpush1.msra.mxu0 0.0
      %3715 = vmatprep.mubr.f32.mxu0 0.0
      %3716 = vmatmul.mubr.f32.gmra.mrb[0].mxu0 %v3646
      %v3717 = vpop.f32.mrb[0].mxu0
      %v3718 = vadd.f32 0.0, %v3717
      %v3719 = vpop.f32.mrb[0].mxu0
      %3720 = vmatprep.mubr.f32.mxu0 0.0
      %3721 = vmatmul.mubr.f32.gmra.mrb[0].mxu0 %v3649
      %v3722 = vpop.f32.mrb[0].mxu0
      %v3723 = vadd.f32 0.0, %v3722
      %v3724 = vpop.f32.mrb[0].mxu0
      %3725 = vdwg.mxu0
      %3726 = vrot.lane.b32.xlu0 %v717, 104
      %v3727 = vpop.permute.xlu0 %3726
      %3728 = vrot.lane.b32.xlu0 %v722, 104
      %v3729 = vpop.permute.xlu0 %3728
      %v3733 = vsel %vm1118, %v3633, 0
      %v3736 = vsel %vm1118, %v3634, 0
      %3738 = vmatprep.subr.mxu0 0.0
      %3739 = vmatpush1.msra.mxu0 %v3727
      %3740 = vmatprep.subr.mxu0 0.0
      %3741 = vmatpush1.msra.mxu0 %v3729
      %3742 = vmatprep.subr.mxu0 0.0
      %3743 = vmatpush1.msra.mxu0 0.0
      %3744 = vmatprep.subr.mxu0 0.0
      %3745 = vmatpush1.msra.mxu0 0.0
      %3746 = vmatprep.subr.mxu0 0.0
      %3747 = vmatpush1.msra.mxu0 0.0
      %3748 = vmatprep.subr.mxu0 0.0
      %3749 = vmatpush1.msra.mxu0 0.0
      %3750 = vmatprep.subr.mxu0 0.0
      %3751 = vmatpush1.msra.mxu0 0.0
      %3752 = vmatprep.subr.mxu0 0.0
      %3753 = vmatpush1.msra.mxu0 0.0
      %3754 = vmatprep.subr.mxu0 0.0
      %3755 = vmatpush1.msra.mxu0 0.0
      %3756 = vmatprep.subr.mxu0 0.0
      %3757 = vmatpush1.msra.mxu0 0.0
      %3758 = vmatprep.subr.mxu0 0.0
      %3759 = vmatpush1.msra.mxu0 0.0
      %3760 = vmatprep.subr.mxu0 0.0
      %3761 = vmatpush1.msra.mxu0 0.0
      %3762 = vmatprep.subr.mxu0 0.0
      %3763 = vmatpush1.msra.mxu0 0.0
      %3764 = vmatprep.subr.mxu0 0.0
      %3765 = vmatpush1.msra.mxu0 0.0
      %3766 = vmatprep.subr.mxu0 0.0
      %3767 = vmatpush1.msra.mxu0 0.0
      %3768 = vmatprep.subr.mxu0 0.0
      %3769 = vmatpush1.msra.mxu0 0.0
      %3770 = vmatprep.subr.mxu0 0.0
      %3771 = vmatpush1.msra.mxu0 0.0
      %3772 = vmatprep.subr.mxu0 0.0
      %3773 = vmatpush1.msra.mxu0 0.0
      %3774 = vmatprep.subr.mxu0 0.0
      %3775 = vmatpush1.msra.mxu0 0.0
      %3776 = vmatprep.subr.mxu0 0.0
      %3777 = vmatpush1.msra.mxu0 0.0
      %3778 = vmatprep.subr.mxu0 0.0
      %3779 = vmatpush1.msra.mxu0 0.0
      %3780 = vmatprep.subr.mxu0 0.0
      %3781 = vmatpush1.msra.mxu0 0.0
      %3782 = vmatprep.subr.mxu0 0.0
      %3783 = vmatpush1.msra.mxu0 0.0
      %3784 = vmatprep.subr.mxu0 0.0
      %3785 = vmatpush1.msra.mxu0 0.0
      %3786 = vmatprep.subr.mxu0 0.0
      %3787 = vmatpush1.msra.mxu0 0.0
      %3788 = vmatprep.subr.mxu0 0.0
      %3789 = vmatpush1.msra.mxu0 0.0
      %3790 = vmatprep.subr.mxu0 0.0
      %3791 = vmatpush1.msra.mxu0 0.0
      %3792 = vmatprep.subr.mxu0 0.0
      %3793 = vmatpush1.msra.mxu0 0.0
      %3794 = vmatprep.subr.mxu0 0.0
      %3795 = vmatpush1.msra.mxu0 0.0
      %3796 = vmatprep.subr.mxu0 0.0
      %3797 = vmatpush1.msra.mxu0 0.0
      %3798 = vmatprep.subr.mxu0 0.0
      %3799 = vmatpush1.msra.mxu0 0.0
      %3800 = vmatprep.subr.mxu0 0.0
      %3801 = vmatpush1.msra.mxu0 0.0
      %3802 = vmatprep.mubr.f32.mxu0 0.0
      %3803 = vmatmul.mubr.f32.gmra.mrb[0].mxu0 %v3733
      %v3804 = vpop.f32.mrb[0].mxu0
      %v3805 = vadd.f32 0.0, %v3804
      %v3806 = vpop.f32.mrb[0].mxu0
      %3807 = vmatprep.mubr.f32.mxu0 0.0
      %3808 = vmatmul.mubr.f32.gmra.mrb[0].mxu0 %v3736
      %v3809 = vpop.f32.mrb[0].mxu0
      %v3810 = vadd.f32 0.0, %v3809
      %v3811 = vpop.f32.mrb[0].mxu0
      %3812 = vdwg.mxu0
      %3813 = vrot.lane.b32.xlu0 %v727, 104
      %v3814 = vpop.permute.xlu0 %3813
      %3815 = vrot.lane.b32.xlu0 %v732, 104
      %v3816 = vpop.permute.xlu0 %3815
      %v3820 = vsel %vm1118, %v3635, 0
      %v3823 = vsel %vm1118, %v3636, 0
      %3825 = vmatprep.subr.mxu0 0.0
      %3826 = vmatpush1.msra.mxu0 %v3814
      %3827 = vmatprep.subr.mxu0 0.0
      %3828 = vmatpush1.msra.mxu0 %v3816
      %3829 = vmatprep.subr.mxu0 0.0
      %3830 = vmatpush1.msra.mxu0 0.0
      %3831 = vmatprep.subr.mxu0 0.0
      %3832 = vmatpush1.msra.mxu0 0.0
      %3833 = vmatprep.subr.mxu0 0.0
      %3834 = vmatpush1.msra.mxu0 0.0
      %3835 = vmatprep.subr.mxu0 0.0
      %3836 = vmatpush1.msra.mxu0 0.0
      %3837 = vmatprep.subr.mxu0 0.0
      %3838 = vmatpush1.msra.mxu0 0.0
      %3839 = vmatprep.subr.mxu0 0.0
      %3840 = vmatpush1.msra.mxu0 0.0
      %3841 = vmatprep.subr.mxu0 0.0
      %3842 = vmatpush1.msra.mxu0 0.0
      %3843 = vmatprep.subr.mxu0 0.0
      %3844 = vmatpush1.msra.mxu0 0.0
      %3845 = vmatprep.subr.mxu0 0.0
      %3846 = vmatpush1.msra.mxu0 0.0
      %3847 = vmatprep.subr.mxu0 0.0
      %3848 = vmatpush1.msra.mxu0 0.0
      %3849 = vmatprep.subr.mxu0 0.0
      %3850 = vmatpush1.msra.mxu0 0.0
      %3851 = vmatprep.subr.mxu0 0.0
      %3852 = vmatpush1.msra.mxu0 0.0
      %3853 = vmatprep.subr.mxu0 0.0
      %3854 = vmatpush1.msra.mxu0 0.0
      %3855 = vmatprep.subr.mxu0 0.0
      %3856 = vmatpush1.msra.mxu0 0.0
      %3857 = vmatprep.subr.mxu0 0.0
      %3858 = vmatpush1.msra.mxu0 0.0
      %3859 = vmatprep.subr.mxu0 0.0
      %3860 = vmatpush1.msra.mxu0 0.0
      %3861 = vmatprep.subr.mxu0 0.0
      %3862 = vmatpush1.msra.mxu0 0.0
      %3863 = vmatprep.subr.mxu0 0.0
      %3864 = vmatpush1.msra.mxu0 0.0
      %3865 = vmatprep.subr.mxu0 0.0
      %3866 = vmatpush1.msra.mxu0 0.0
      %3867 = vmatprep.subr.mxu0 0.0
      %3868 = vmatpush1.msra.mxu0 0.0
      %3869 = vmatprep.subr.mxu0 0.0
      %3870 = vmatpush1.msra.mxu0 0.0
      %3871 = vmatprep.subr.mxu0 0.0
      %3872 = vmatpush1.msra.mxu0 0.0
      %3873 = vmatprep.subr.mxu0 0.0
      %3874 = vmatpush1.msra.mxu0 0.0
      %3875 = vmatprep.subr.mxu0 0.0
      %3876 = vmatpush1.msra.mxu0 0.0
      %3877 = vmatprep.subr.mxu0 0.0
      %3878 = vmatpush1.msra.mxu0 0.0
      %3879 = vmatprep.subr.mxu0 0.0
      %3880 = vmatpush1.msra.mxu0 0.0
      %3881 = vmatprep.subr.mxu0 0.0
      %3882 = vmatpush1.msra.mxu0 0.0
      %3883 = vmatprep.subr.mxu0 0.0
      %3884 = vmatpush1.msra.mxu0 0.0
      %3885 = vmatprep.subr.mxu0 0.0
      %3886 = vmatpush1.msra.mxu0 0.0
      %3887 = vmatprep.subr.mxu0 0.0
      %3888 = vmatpush1.msra.mxu0 0.0
      %3889 = vmatprep.mubr.f32.mxu0 0.0
      %3890 = vmatmul.mubr.f32.gmra.mrb[0].mxu0 %v3820
      %v3891 = vpop.f32.mrb[0].mxu0
      %v3892 = vadd.f32 0.0, %v3891
      %v3893 = vpop.f32.mrb[0].mxu0
      %3894 = vmatprep.mubr.f32.mxu0 0.0
      %3895 = vmatmul.mubr.f32.gmra.mrb[0].mxu0 %v3823
      %v3896 = vpop.f32.mrb[0].mxu0
      %v3897 = vadd.f32 0.0, %v3896
      %v3898 = vpop.f32.mrb[0].mxu0
      %3899 = vdwg.mxu0
      %3900 = vrot.lane.b32.xlu0 %v737, 104
      %v3901 = vpop.permute.xlu0 %3900
      %3902 = vrot.lane.b32.xlu0 %v742, 104
      %v3903 = vpop.permute.xlu0 %3902
      %v3907 = vsel %vm1118, %v3637, 0
      %v3910 = vsel %vm1118, %v3638, 0
      %3912 = vmatprep.subr.mxu0 0.0
      %3913 = vmatpush1.msra.mxu0 %v3901
      %3914 = vmatprep.subr.mxu0 0.0
      %3915 = vmatpush1.msra.mxu0 %v3903
      %3916 = vmatprep.subr.mxu0 0.0
      %3917 = vmatpush1.msra.mxu0 0.0
      %3918 = vmatprep.subr.mxu0 0.0
      %3919 = vmatpush1.msra.mxu0 0.0
      %3920 = vmatprep.subr.mxu0 0.0
      %3921 = vmatpush1.msra.mxu0 0.0
      %3922 = vmatprep.subr.mxu0 0.0
      %3923 = vmatpush1.msra.mxu0 0.0
      %3924 = vmatprep.subr.mxu0 0.0
      %3925 = vmatpush1.msra.mxu0 0.0
      %3926 = vmatprep.subr.mxu0 0.0
      %3927 = vmatpush1.msra.mxu0 0.0
      %3928 = vmatprep.subr.mxu0 0.0
      %3929 = vmatpush1.msra.mxu0 0.0
      %3930 = vmatprep.subr.mxu0 0.0
      %3931 = vmatpush1.msra.mxu0 0.0
      %3932 = vmatprep.subr.mxu0 0.0
      %3933 = vmatpush1.msra.mxu0 0.0
      %3934 = vmatprep.subr.mxu0 0.0
      %3935 = vmatpush1.msra.mxu0 0.0
      %3936 = vmatprep.subr.mxu0 0.0
      %3937 = vmatpush1.msra.mxu0 0.0
      %3938 = vmatprep.subr.mxu0 0.0
      %3939 = vmatpush1.msra.mxu0 0.0
      %3940 = vmatprep.subr.mxu0 0.0
      %3941 = vmatpush1.msra.mxu0 0.0
      %3942 = vmatprep.subr.mxu0 0.0
      %3943 = vmatpush1.msra.mxu0 0.0
      %3944 = vmatprep.subr.mxu0 0.0
      %3945 = vmatpush1.msra.mxu0 0.0
      %3946 = vmatprep.subr.mxu0 0.0
      %3947 = vmatpush1.msra.mxu0 0.0
      %3948 = vmatprep.subr.mxu0 0.0
      %3949 = vmatpush1.msra.mxu0 0.0
      %3950 = vmatprep.subr.mxu0 0.0
      %3951 = vmatpush1.msra.mxu0 0.0
      %3952 = vmatprep.subr.mxu0 0.0
      %3953 = vmatpush1.msra.mxu0 0.0
      %3954 = vmatprep.subr.mxu0 0.0
      %3955 = vmatpush1.msra.mxu0 0.0
      %3956 = vmatprep.subr.mxu0 0.0
      %3957 = vmatpush1.msra.mxu0 0.0
      %3958 = vmatprep.subr.mxu0 0.0
      %3959 = vmatpush1.msra.mxu0 0.0
      %3960 = vmatprep.subr.mxu0 0.0
      %3961 = vmatpush1.msra.mxu0 0.0
      %3962 = vmatprep.subr.mxu0 0.0
      %3963 = vmatpush1.msra.mxu0 0.0
      %3964 = vmatprep.subr.mxu0 0.0
      %3965 = vmatpush1.msra.mxu0 0.0
      %3966 = vmatprep.subr.mxu0 0.0
      %3967 = vmatpush1.msra.mxu0 0.0
      %3968 = vmatprep.subr.mxu0 0.0
      %3969 = vmatpush1.msra.mxu0 0.0
      %3970 = vmatprep.subr.mxu0 0.0
      %3971 = vmatpush1.msra.mxu0 0.0
      %3972 = vmatprep.subr.mxu0 0.0
      %3973 = vmatpush1.msra.mxu0 0.0
      %3974 = vmatprep.subr.mxu0 0.0
      %3975 = vmatpush1.msra.mxu0 0.0
      %3976 = vmatprep.mubr.f32.mxu0 0.0
      %3977 = vmatmul.mubr.f32.gmra.mrb[0].mxu0 %v3907
      %v3978 = vpop.f32.mrb[0].mxu0
      %v3979 = vadd.f32 0.0, %v3978
      %v3980 = vpop.f32.mrb[0].mxu0
      %3981 = vmatprep.mubr.f32.mxu0 0.0
      %3982 = vmatmul.mubr.f32.gmra.mrb[0].mxu0 %v3910
      %v3983 = vpop.f32.mrb[0].mxu0
      %v3984 = vadd.f32 0.0, %v3983
      %v3985 = vpop.f32.mrb[0].mxu0
      %3986 = vdwg.mxu0
      %3995 = vrot.lane.b32.xlu0 %v2080, 8
      %v3996 = vpop.permute.xlu0 %3995
      %3997 = vrot.lane.b32.xlu0 %v2085, 8
      %v3998 = vpop.permute.xlu0 %3997
      %3999 = vrot.lane.b32.xlu0 %v2169, 8
      %v4000 = vpop.permute.xlu0 %3999
      %4001 = vrot.lane.b32.xlu0 %v2174, 8
      %v4002 = vpop.permute.xlu0 %4001
      %4003 = vrot.lane.b32.xlu0 %v2258, 8
      %v4004 = vpop.permute.xlu0 %4003
      %4005 = vrot.lane.b32.xlu0 %v2263, 8
      %v4006 = vpop.permute.xlu0 %4005
      %4007 = vrot.lane.b32.xlu0 %v2347, 8
      %v4008 = vpop.permute.xlu0 %4007
      %4009 = vrot.lane.b32.xlu0 %v2352, 8
      %v4010 = vpop.permute.xlu0 %4009
      %4027 = vrot.lane.b32.xlu0 %v2902, 16
      %v4028 = vpop.permute.xlu0 %4027
      %4029 = vrot.lane.b32.xlu0 %v2907, 16
      %v4030 = vpop.permute.xlu0 %4029
      %4031 = vrot.lane.b32.xlu0 %v2989, 16
      %v4032 = vpop.permute.xlu0 %4031
      %4033 = vrot.lane.b32.xlu0 %v2994, 16
      %v4034 = vpop.permute.xlu0 %4033
      %4035 = vrot.lane.b32.xlu0 %v3076, 16
      %v4036 = vpop.permute.xlu0 %4035
      %4037 = vrot.lane.b32.xlu0 %v3081, 16
      %v4038 = vpop.permute.xlu0 %4037
      %4039 = vrot.lane.b32.xlu0 %v3163, 16
      %v4040 = vpop.permute.xlu0 %4039
      %4041 = vrot.lane.b32.xlu0 %v3168, 16
      %v4042 = vpop.permute.xlu0 %4041
      %4059 = vrot.lane.b32.xlu0 %v3718, 24
      %v4060 = vpop.permute.xlu0 %4059
      %4061 = vrot.lane.b32.xlu0 %v3723, 24
      %v4062 = vpop.permute.xlu0 %4061
      %4063 = vrot.lane.b32.xlu0 %v3805, 24
      %v4064 = vpop.permute.xlu0 %4063
      %4065 = vrot.lane.b32.xlu0 %v3810, 24
      %v4066 = vpop.permute.xlu0 %4065
      %4067 = vrot.lane.b32.xlu0 %v3892, 24
      %v4068 = vpop.permute.xlu0 %4067
      %4069 = vrot.lane.b32.xlu0 %v3897, 24
      %v4070 = vpop.permute.xlu0 %4069
      %4071 = vrot.lane.b32.xlu0 %v3979, 24
      %v4072 = vpop.permute.xlu0 %4071
      %4073 = vrot.lane.b32.xlu0 %v3984, 24
      %v4074 = vpop.permute.xlu0 %4073
      %v4083 = vsel %vm753, %v1280, %v3996
      %v4084 = vsel %vm753, %v1285, %v3998
      %v4085 = vsel %vm753, %v1361, %v4000
      %v4086 = vsel %vm753, %v1366, %v4002
      %v4087 = vsel %vm753, %v1442, %v4004
      %v4088 = vsel %vm753, %v1447, %v4006
      %v4089 = vsel %vm753, %v1523, %v4008
      %v4090 = vsel %vm753, %v1528, %v4010
      %v4091 = vsel %vm1118, %v4083, %v4028
      %v4092 = vsel %vm1118, %v4084, %v4030
      %v4093 = vsel %vm1118, %v4085, %v4032
      %v4094 = vsel %vm1118, %v4086, %v4034
      %v4095 = vsel %vm1118, %v4087, %v4036
      %v4096 = vsel %vm1118, %v4088, %v4038
      %v4097 = vsel %vm1118, %v4089, %v4040
      %v4098 = vsel %vm1118, %v4090, %v4042
      %vm4099 = vcmask 195584
      %v4100 = vsel %vm4099, %v4091, %v4060
      %v4101 = vsel %vm4099, %v4092, %v4062
      %v4102 = vsel %vm4099, %v4093, %v4064
      %v4103 = vsel %vm4099, %v4094, %v4066
      %v4104 = vsel %vm4099, %v4095, %v4068
      %v4105 = vsel %vm4099, %v4096, %v4070
      %v4106 = vsel %vm4099, %v4097, %v4072
      %v4107 = vsel %vm4099, %v4098, %v4074
      %v4108 = vld [vmem:[%s4] sm:$0x1]
      %v4109 = vld [vmem:[%s5] sm:$0x1]
      %v4110 = vsel %vm379, %v4100, 0.0
      %4111 = vadd.xlane.f32.xlu0 %v4110
      %v4112 = vpop.xlane.xlu0 %4111
      %v4113 = vsel %vm379, %v4101, 0.0
      %4114 = vadd.xlane.f32.xlu0 %v4113
      %v4115 = vpop.xlane.xlu0 %4114
      %v4116 = vsel %vm379, %v4102, 0.0
      %4117 = vadd.xlane.f32.xlu0 %v4116
      %v4118 = vpop.xlane.xlu0 %4117
      %v4119 = vsel %vm379, %v4103, 0.0
      %4120 = vadd.xlane.f32.xlu0 %v4119
      %v4121 = vpop.xlane.xlu0 %4120
      %v4122 = vsel %vm379, %v4104, 0.0
      %4123 = vadd.xlane.f32.xlu0 %v4122
      %v4124 = vpop.xlane.xlu0 %4123
      %v4125 = vsel %vm379, %v4105, 0.0
      %4126 = vadd.xlane.f32.xlu0 %v4125
      %v4127 = vpop.xlane.xlu0 %4126
      %v4128 = vsel %vm379, %v4106, 0.0
      %4129 = vadd.xlane.f32.xlu0 %v4128
      %v4130 = vpop.xlane.xlu0 %4129
      %v4131 = vsel %vm379, %v4107, 0.0
      %4132 = vadd.xlane.f32.xlu0 %v4131
      %v4133 = vpop.xlane.xlu0 %4132
      %v4134 = vrcp.pop 32.0
      %v4135 = vmul.f32 %v4112, %v4134
      %v4136 = vmul.f32 %v4115, %v4134
      %v4137 = vmul.f32 %v4118, %v4134
      %v4138 = vmul.f32 %v4121, %v4134
      %v4139 = vmul.f32 %v4124, %v4134
      %v4140 = vmul.f32 %v4127, %v4134
      %v4141 = vmul.f32 %v4130, %v4134
      %v4142 = vmul.f32 %v4133, %v4134
      %v4143 = vsub.f32 %v4100, %v4135
      %v4144 = vsub.f32 %v4101, %v4136
      %v4145 = vsub.f32 %v4102, %v4137
      %v4146 = vsub.f32 %v4103, %v4138
      %v4147 = vsub.f32 %v4104, %v4139
      %v4148 = vsub.f32 %v4105, %v4140
      %v4149 = vsub.f32 %v4106, %v4141
      %v4150 = vsub.f32 %v4107, %v4142
      %v4151 = vmul.f32 %v4143, %v4143
      %v4152 = vmul.f32 %v4144, %v4144
      %v4153 = vmul.f32 %v4145, %v4145
      %v4154 = vmul.f32 %v4146, %v4146
      %v4155 = vmul.f32 %v4147, %v4147
      %v4156 = vmul.f32 %v4148, %v4148
      %v4157 = vmul.f32 %v4149, %v4149
      %v4158 = vmul.f32 %v4150, %v4150
      %v4159 = vsel %vm379, %v4151, 0.0
      %4160 = vadd.xlane.f32.xlu0 %v4159
      %v4161 = vpop.xlane.xlu0 %4160
      %v4162 = vsel %vm379, %v4152, 0.0
      %4163 = vadd.xlane.f32.xlu0 %v4162
      %v4164 = vpop.xlane.xlu0 %4163
      %v4165 = vsel %vm379, %v4153, 0.0
      %4166 = vadd.xlane.f32.xlu0 %v4165
      %v4167 = vpop.xlane.xlu0 %4166
      %v4168 = vsel %vm379, %v4154, 0.0
      %4169 = vadd.xlane.f32.xlu0 %v4168
      %v4170 = vpop.xlane.xlu0 %4169
      %v4171 = vsel %vm379, %v4155, 0.0
      %4172 = vadd.xlane.f32.xlu0 %v4171
      %v4173 = vpop.xlane.xlu0 %4172
      %v4174 = vsel %vm379, %v4156, 0.0
      %4175 = vadd.xlane.f32.xlu0 %v4174
      %v4176 = vpop.xlane.xlu0 %4175
      %v4177 = vsel %vm379, %v4157, 0.0
      %4178 = vadd.xlane.f32.xlu0 %v4177
      %v4179 = vpop.xlane.xlu0 %4178
      %v4180 = vsel %vm379, %v4158, 0.0
      %4181 = vadd.xlane.f32.xlu0 %v4180
      %v4182 = vpop.xlane.xlu0 %4181
      %v4183 = vmul.f32 %v4161, %v4134
      %v4184 = vmul.f32 %v4164, %v4134
      %v4185 = vmul.f32 %v4167, %v4134
      %v4186 = vmul.f32 %v4170, %v4134
      %v4187 = vmul.f32 %v4173, %v4134
      %v4188 = vmul.f32 %v4176, %v4134
      %v4189 = vmul.f32 %v4179, %v4134
      %v4190 = vmul.f32 %v4182, %v4134
      %v4191 = vadd.f32 %v4183, 1e-06
      %v4192 = vadd.f32 %v4184, 1e-06
      %v4193 = vadd.f32 %v4185, 1e-06
      %v4194 = vadd.f32 %v4186, 1e-06
      %v4195 = vadd.f32 %v4187, 1e-06
      %v4196 = vadd.f32 %v4188, 1e-06
      %v4197 = vadd.f32 %v4189, 1e-06
      %v4198 = vadd.f32 %v4190, 1e-06
      %v4199 = vrsqrt.pop %v4191
      %v4200 = vrsqrt.pop %v4192
      %v4201 = vrsqrt.pop %v4193
      %v4202 = vrsqrt.pop %v4194
      %v4203 = vrsqrt.pop %v4195
      %v4204 = vrsqrt.pop %v4196
      %v4205 = vrsqrt.pop %v4197
      %v4206 = vrsqrt.pop %v4198
      %v4207 = vmul.f32 %v4143, %v4199
      %v4208 = vmul.f32 %v4144, %v4200
      %v4209 = vmul.f32 %v4145, %v4201
      %v4210 = vmul.f32 %v4146, %v4202
      %v4211 = vmul.f32 %v4147, %v4203
      %v4212 = vmul.f32 %v4148, %v4204
      %v4213 = vmul.f32 %v4149, %v4205
      %v4214 = vmul.f32 %v4150, %v4206
      %v4216 = vlaneseq
      %v4217 = vshrl.u32 %v4216, 7
      %v4218 = vsub.s32 0, %v4217
      %v4219 = vrot.slane %v4108, %v4218
      %v4221 = vmul.f32 %v4207, %v4219
      %v4222 = vmul.f32 %v4208, %v4219
      %v4223 = vmul.f32 %v4209, %v4219
      %v4224 = vmul.f32 %v4210, %v4219
      %v4225 = vmul.f32 %v4211, %v4219
      %v4226 = vmul.f32 %v4212, %v4219
      %v4227 = vmul.f32 %v4213, %v4219
      %v4228 = vmul.f32 %v4214, %v4219
      %v4230 = vlaneseq
      %v4231 = vshrl.u32 %v4230, 7
      %v4232 = vsub.s32 0, %v4231
      %v4233 = vrot.slane %v4109, %v4232
      %v4235 = vadd.f32 %v4221, %v4233
      %v4236 = vadd.f32 %v4222, %v4233
      %v4237 = vadd.f32 %v4223, %v4233
      %v4238 = vadd.f32 %v4224, %v4233
      %v4239 = vadd.f32 %v4225, %v4233
      %v4240 = vadd.f32 %v4226, %v4233
      %v4241 = vadd.f32 %v4227, %v4233
      %v4242 = vadd.f32 %v4228, %v4233
      %v4243 = vadd.f32 %v360, %v4235
      %v4244 = vadd.f32 %v361, %v4236
      %v4245 = vadd.f32 %v362, %v4237
      %v4246 = vadd.f32 %v363, %v4238
      %v4247 = vadd.f32 %v364, %v4239
      %v4248 = vadd.f32 %v365, %v4240
      %v4249 = vadd.f32 %v366, %v4241
      %v4250 = vadd.f32 %v367, %v4242
      %v4251 = vld [vmem:[%s6] sm:$0xff]
      %v4252 = vld [vmem:[%s6 + $0x8] sm:$0xff]
      %v4253 = vld [vmem:[%s6 + $0x10] sm:$0xff]
      %v4254 = vld [vmem:[%s6 + $0x18] sm:$0xff]
      %v4255 = vld [vmem:[%s7] sm:$0x1]
      %v4257 = vlaneseq
      %v4258 = vshrl.u32 %v4257, 7
      %v4259 = vsub.s32 0, %v4258
      %v4260 = vrot.slane %v4255, %v4259
      %v4263 = vsel %vm379, %v4243, 0
      %v4266 = vsel %vm379, %v4244, 0
      %v4269 = vsel %vm379, %v4245, 0
      %v4272 = vsel %vm379, %v4246, 0
      %v4275 = vsel %vm379, %v4247, 0
      %v4278 = vsel %vm379, %v4248, 0
      %v4281 = vsel %vm379, %v4249, 0
      %v4284 = vsel %vm379, %v4250, 0
      %4286 = vmatprep.subr.mxu0 0.0
      %4287 = vmatpush1.msra.mxu0 %v4251
      %4288 = vmatprep.subr.mxu0 0.0
      %4289 = vmatpush1.msra.mxu0 %v4252
      %4290 = vmatprep.subr.mxu0 0.0
      %4291 = vmatpush1.msra.mxu0 %v4253
      %4292 = vmatprep.subr.mxu0 0.0
      %4293 = vmatpush1.msra.mxu0 %v4254
      %4294 = vmatprep.subr.mxu0 0.0
      %4295 = vmatpush1.msra.mxu0 0.0
      %4296 = vmatprep.subr.mxu0 0.0
      %4297 = vmatpush1.msra.mxu0 0.0
      %4298 = vmatprep.subr.mxu0 0.0
      %4299 = vmatpush1.msra.mxu0 0.0
      %4300 = vmatprep.subr.mxu0 0.0
      %4301 = vmatpush1.msra.mxu0 0.0
      %4302 = vmatprep.subr.mxu0 0.0
      %4303 = vmatpush1.msra.mxu0 0.0
      %4304 = vmatprep.subr.mxu0 0.0
      %4305 = vmatpush1.msra.mxu0 0.0
      %4306 = vmatprep.subr.mxu0 0.0
      %4307 = vmatpush1.msra.mxu0 0.0
      %4308 = vmatprep.subr.mxu0 0.0
      %4309 = vmatpush1.msra.mxu0 0.0
      %4310 = vmatprep.subr.mxu0 0.0
      %4311 = vmatpush1.msra.mxu0 0.0
      %4312 = vmatprep.subr.mxu0 0.0
      %4313 = vmatpush1.msra.mxu0 0.0
      %4314 = vmatprep.subr.mxu0 0.0
      %4315 = vmatpush1.msra.mxu0 0.0
      %4316 = vmatprep.subr.mxu0 0.0
      %4317 = vmatpush1.msra.mxu0 0.0
      %4318 = vmatprep.subr.mxu0 0.0
      %4319 = vmatpush1.msra.mxu0 0.0
      %4320 = vmatprep.subr.mxu0 0.0
      %4321 = vmatpush1.msra.mxu0 0.0
      %4322 = vmatprep.subr.mxu0 0.0
      %4323 = vmatpush1.msra.mxu0 0.0
      %4324 = vmatprep.subr.mxu0 0.0
      %4325 = vmatpush1.msra.mxu0 0.0
      %4326 = vmatprep.subr.mxu0 0.0
      %4327 = vmatpush1.msra.mxu0 0.0
      %4328 = vmatprep.subr.mxu0 0.0
      %4329 = vmatpush1.msra.mxu0 0.0
      %4330 = vmatprep.subr.mxu0 0.0
      %4331 = vmatpush1.msra.mxu0 0.0
      %4332 = vmatprep.subr.mxu0 0.0
      %4333 = vmatpush1.msra.mxu0 0.0
      %4334 = vmatprep.subr.mxu0 0.0
      %4335 = vmatpush1.msra.mxu0 0.0
      %4336 = vmatprep.subr.mxu0 0.0
      %4337 = vmatpush1.msra.mxu0 0.0
      %4338 = vmatprep.subr.mxu0 0.0
      %4339 = vmatpush1.msra.mxu0 0.0
      %4340 = vmatprep.subr.mxu0 0.0
      %4341 = vmatpush1.msra.mxu0 0.0
      %4342 = vmatprep.subr.mxu0 0.0
      %4343 = vmatpush1.msra.mxu0 0.0
      %4344 = vmatprep.subr.mxu0 0.0
      %4345 = vmatpush1.msra.mxu0 0.0
      %4346 = vmatprep.subr.mxu0 0.0
      %4347 = vmatpush1.msra.mxu0 0.0
      %4348 = vmatprep.subr.mxu0 0.0
      %4349 = vmatpush1.msra.mxu0 0.0
      %4350 = vmatprep.mubr.f32.mxu0 0.0
      %4351 = vmatmul.mubr.f32.gmra.mrb[0].mxu0 %v4263
      %v4352 = vpop.f32.mrb[0].mxu0
      %v4353 = vadd.f32 %v4260, %v4352
      %v4354 = vpop.f32.mrb[0].mxu0
      %4355 = vmatprep.mubr.f32.mxu0 0.0
      %4356 = vmatmul.mubr.f32.gmra.mrb[0].mxu0 %v4266
      %v4357 = vpop.f32.mrb[0].mxu0
      %v4358 = vadd.f32 %v4260, %v4357
      %v4359 = vpop.f32.mrb[0].mxu0
      %4360 = vmatprep.mubr.f32.mxu0 0.0
      %4361 = vmatmul.mubr.f32.gmra.mrb[0].mxu0 %v4269
      %v4362 = vpop.f32.mrb[0].mxu0
      %v4363 = vadd.f32 %v4260, %v4362
      %v4364 = vpop.f32.mrb[0].mxu0
      %4365 = vmatprep.mubr.f32.mxu0 0.0
      %4366 = vmatmul.mubr.f32.gmra.mrb[0].mxu0 %v4272
      %v4367 = vpop.f32.mrb[0].mxu0
      %v4368 = vadd.f32 %v4260, %v4367
      %v4369 = vpop.f32.mrb[0].mxu0
      %4370 = vmatprep.mubr.f32.mxu0 0.0
      %4371 = vmatmul.mubr.f32.gmra.mrb[0].mxu0 %v4275
      %v4372 = vpop.f32.mrb[0].mxu0
      %v4373 = vadd.f32 %v4260, %v4372
      %v4374 = vpop.f32.mrb[0].mxu0
      %4375 = vmatprep.mubr.f32.mxu0 0.0
      %4376 = vmatmul.mubr.f32.gmra.mrb[0].mxu0 %v4278
      %v4377 = vpop.f32.mrb[0].mxu0
      %v4378 = vadd.f32 %v4260, %v4377
      %v4379 = vpop.f32.mrb[0].mxu0
      %4380 = vmatprep.mubr.f32.mxu0 0.0
      %4381 = vmatmul.mubr.f32.gmra.mrb[0].mxu0 %v4281
      %v4382 = vpop.f32.mrb[0].mxu0
      %v4383 = vadd.f32 %v4260, %v4382
      %v4384 = vpop.f32.mrb[0].mxu0
      %4385 = vmatprep.mubr.f32.mxu0 0.0
      %4386 = vmatmul.mubr.f32.gmra.mrb[0].mxu0 %v4284
      %v4387 = vpop.f32.mrb[0].mxu0
      %v4388 = vadd.f32 %v4260, %v4387
      %v4389 = vpop.f32.mrb[0].mxu0
      %4390 = vdwg.mxu0
      %v4391 = vmul.f32 %v4353, 0.5
      %v4392 = vmul.f32 %v4358, 0.5
      %v4393 = vmul.f32 %v4363, 0.5
      %v4394 = vmul.f32 %v4368, 0.5
      %v4395 = vmul.f32 %v4373, 0.5
      %v4396 = vmul.f32 %v4378, 0.5
      %v4397 = vmul.f32 %v4383, 0.5
      %v4398 = vmul.f32 %v4388, 0.5
      %v4399 = vmul.f32 %v4353, 0.70710677
      %v4400 = vmul.f32 %v4358, 0.70710677
      %v4401 = vmul.f32 %v4363, 0.70710677
      %v4402 = vmul.f32 %v4368, 0.70710677
      %v4403 = vmul.f32 %v4373, 0.70710677
      %v4404 = vmul.f32 %v4378, 0.70710677
      %v4405 = vmul.f32 %v4383, 0.70710677
      %v4406 = vmul.f32 %v4388, 0.70710677
      %v4407 = vand.u32 2147483647, %v4399
      %v4408 = vand.u32 2147483647, %v4400
      %v4409 = vand.u32 2147483647, %v4401
      %v4410 = vand.u32 2147483647, %v4402
      %v4411 = vand.u32 2147483647, %v4403
      %v4412 = vand.u32 2147483647, %v4404
      %v4413 = vand.u32 2147483647, %v4405
      %v4414 = vand.u32 2147483647, %v4406
      %v4415 = vmul.f32 %v4407, 0.3275911
      %v4416 = vmul.f32 %v4408, 0.3275911
      %v4417 = vmul.f32 %v4409, 0.3275911
      %v4418 = vmul.f32 %v4410, 0.3275911
      %v4419 = vmul.f32 %v4411, 0.3275911
      %v4420 = vmul.f32 %v4412, 0.3275911
      %v4421 = vmul.f32 %v4413, 0.3275911
      %v4422 = vmul.f32 %v4414, 0.3275911
      %v4423 = vadd.f32 %v4415, 1.0
      %v4424 = vadd.f32 %v4416, 1.0
      %v4425 = vadd.f32 %v4417, 1.0
      %v4426 = vadd.f32 %v4418, 1.0
      %v4427 = vadd.f32 %v4419, 1.0
      %v4428 = vadd.f32 %v4420, 1.0
      %v4429 = vadd.f32 %v4421, 1.0
      %v4430 = vadd.f32 %v4422, 1.0
      %v4431 = vrcp.pop %v4423
      %v4432 = vmul.f32 1.0, %v4431
      %v4433 = vrcp.pop %v4424
      %v4434 = vmul.f32 1.0, %v4433
      %v4435 = vrcp.pop %v4425
      %v4436 = vmul.f32 1.0, %v4435
      %v4437 = vrcp.pop %v4426
      %v4438 = vmul.f32 1.0, %v4437
      %v4439 = vrcp.pop %v4427
      %v4440 = vmul.f32 1.0, %v4439
      %v4441 = vrcp.pop %v4428
      %v4442 = vmul.f32 1.0, %v4441
      %v4443 = vrcp.pop %v4429
      %v4444 = vmul.f32 1.0, %v4443
      %v4445 = vrcp.pop %v4430
      %v4446 = vmul.f32 1.0, %v4445
      %v4447 = vmul.f32 %v4432, 1.0614054
      %v4448 = vmul.f32 %v4434, 1.0614054
      %v4449 = vmul.f32 %v4436, 1.0614054
      %v4450 = vmul.f32 %v4438, 1.0614054
      %v4451 = vmul.f32 %v4440, 1.0614054
      %v4452 = vmul.f32 %v4442, 1.0614054
      %v4453 = vmul.f32 %v4444, 1.0614054
      %v4454 = vmul.f32 %v4446, 1.0614054
      %v4455 = vadd.f32 %v4447, -1.4531521
      %v4456 = vadd.f32 %v4448, -1.4531521
      %v4457 = vadd.f32 %v4449, -1.4531521
      %v4458 = vadd.f32 %v4450, -1.4531521
      %v4459 = vadd.f32 %v4451, -1.4531521
      %v4460 = vadd.f32 %v4452, -1.4531521
      %v4461 = vadd.f32 %v4453, -1.4531521
      %v4462 = vadd.f32 %v4454, -1.4531521
      %v4463 = vmul.f32 %v4455, %v4432
      %v4464 = vmul.f32 %v4456, %v4434
      %v4465 = vmul.f32 %v4457, %v4436
      %v4466 = vmul.f32 %v4458, %v4438
      %v4467 = vmul.f32 %v4459, %v4440
      %v4468 = vmul.f32 %v4460, %v4442
      %v4469 = vmul.f32 %v4461, %v4444
      %v4470 = vmul.f32 %v4462, %v4446
      %v4471 = vadd.f32 %v4463, 1.4214138
      %v4472 = vadd.f32 %v4464, 1.4214138
      %v4473 = vadd.f32 %v4465, 1.4214138
      %v4474 = vadd.f32 %v4466, 1.4214138
      %v4475 = vadd.f32 %v4467, 1.4214138
      %v4476 = vadd.f32 %v4468, 1.4214138
      %v4477 = vadd.f32 %v4469, 1.4214138
      %v4478 = vadd.f32 %v4470, 1.4214138
      %v4479 = vmul.f32 %v4471, %v4432
      %v4480 = vmul.f32 %v4472, %v4434
      %v4481 = vmul.f32 %v4473, %v4436
      %v4482 = vmul.f32 %v4474, %v4438
      %v4483 = vmul.f32 %v4475, %v4440
      %v4484 = vmul.f32 %v4476, %v4442
      %v4485 = vmul.f32 %v4477, %v4444
      %v4486 = vmul.f32 %v4478, %v4446
      %v4487 = vadd.f32 %v4479, -0.28449672
      %v4488 = vadd.f32 %v4480, -0.28449672
      %v4489 = vadd.f32 %v4481, -0.28449672
      %v4490 = vadd.f32 %v4482, -0.28449672
      %v4491 = vadd.f32 %v4483, -0.28449672
      %v4492 = vadd.f32 %v4484, -0.28449672
      %v4493 = vadd.f32 %v4485, -0.28449672
      %v4494 = vadd.f32 %v4486, -0.28449672
      %v4495 = vmul.f32 %v4487, %v4432
      %v4496 = vmul.f32 %v4488, %v4434
      %v4497 = vmul.f32 %v4489, %v4436
      %v4498 = vmul.f32 %v4490, %v4438
      %v4499 = vmul.f32 %v4491, %v4440
      %v4500 = vmul.f32 %v4492, %v4442
      %v4501 = vmul.f32 %v4493, %v4444
      %v4502 = vmul.f32 %v4494, %v4446
      %v4503 = vadd.f32 %v4495, 0.2548296
      %v4504 = vadd.f32 %v4496, 0.2548296
      %v4505 = vadd.f32 %v4497, 0.2548296
      %v4506 = vadd.f32 %v4498, 0.2548296
      %v4507 = vadd.f32 %v4499, 0.2548296
      %v4508 = vadd.f32 %v4500, 0.2548296
      %v4509 = vadd.f32 %v4501, 0.2548296
      %v4510 = vadd.f32 %v4502, 0.2548296
      %v4511 = vmul.f32 %v4503, %v4432
      %v4512 = vmul.f32 %v4504, %v4434
      %v4513 = vmul.f32 %v4505, %v4436
      %v4514 = vmul.f32 %v4506, %v4438
      %v4515 = vmul.f32 %v4507, %v4440
      %v4516 = vmul.f32 %v4508, %v4442
      %v4517 = vmul.f32 %v4509, %v4444
      %v4518 = vmul.f32 %v4510, %v4446
      %v4519 = vmul.f32 %v4407, %v4407
      %v4520 = vmul.f32 %v4408, %v4408
      %v4521 = vmul.f32 %v4409, %v4409
      %v4522 = vmul.f32 %v4410, %v4410
      %v4523 = vmul.f32 %v4411, %v4411
      %v4524 = vmul.f32 %v4412, %v4412
      %v4525 = vmul.f32 %v4413, %v4413
      %v4526 = vmul.f32 %v4414, %v4414
      %v4527 = vsub.f32 0.0, %v4519
      %v4528 = vsub.f32 0.0, %v4520
      %v4529 = vsub.f32 0.0, %v4521
      %v4530 = vsub.f32 0.0, %v4522
      %v4531 = vsub.f32 0.0, %v4523
      %v4532 = vsub.f32 0.0, %v4524
      %v4533 = vsub.f32 0.0, %v4525
      %v4534 = vsub.f32 0.0, %v4526
      %v4535 = vmul.f32 %v4527, 1.442695
      %v4536 = vpow.pop %v4535
      %v4537 = vmul.f32 %v4528, 1.442695
      %v4538 = vpow.pop %v4537
      %v4539 = vmul.f32 %v4529, 1.442695
      %v4540 = vpow.pop %v4539
      %v4541 = vmul.f32 %v4530, 1.442695
      %v4542 = vpow.pop %v4541
      %v4543 = vmul.f32 %v4531, 1.442695
      %v4544 = vpow.pop %v4543
      %v4545 = vmul.f32 %v4532, 1.442695
      %v4546 = vpow.pop %v4545
      %v4547 = vmul.f32 %v4533, 1.442695
      %v4548 = vpow.pop %v4547
      %v4549 = vmul.f32 %v4534, 1.442695
      %v4550 = vpow.pop %v4549
      %v4551 = vmul.f32 %v4511, %v4536
      %v4552 = vmul.f32 %v4512, %v4538
      %v4553 = vmul.f32 %v4513, %v4540
      %v4554 = vmul.f32 %v4514, %v4542
      %v4555 = vmul.f32 %v4515, %v4544
      %v4556 = vmul.f32 %v4516, %v4546
      %v4557 = vmul.f32 %v4517, %v4548
      %v4558 = vmul.f32 %v4518, %v4550
      %v4559 = vsub.f32 1.0, %v4551
      %v4560 = vsub.f32 1.0, %v4552
      %v4561 = vsub.f32 1.0, %v4553
      %v4562 = vsub.f32 1.0, %v4554
      %v4563 = vsub.f32 1.0, %v4555
      %v4564 = vsub.f32 1.0, %v4556
      %v4565 = vsub.f32 1.0, %v4557
      %v4566 = vsub.f32 1.0, %v4558
      %vm4567 = vcmp.ge.f32.partialorder %v4399, 0.0
      %vm4568 = vcmp.ge.f32.partialorder %v4400, 0.0
      %vm4569 = vcmp.ge.f32.partialorder %v4401, 0.0
      %vm4570 = vcmp.ge.f32.partialorder %v4402, 0.0
      %vm4571 = vcmp.ge.f32.partialorder %v4403, 0.0
      %vm4572 = vcmp.ge.f32.partialorder %v4404, 0.0
      %vm4573 = vcmp.ge.f32.partialorder %v4405, 0.0
      %vm4574 = vcmp.ge.f32.partialorder %v4406, 0.0
      %v4575 = vsub.f32 0.0, %v4559
      %v4576 = vsub.f32 0.0, %v4560
      %v4577 = vsub.f32 0.0, %v4561
      %v4578 = vsub.f32 0.0, %v4562
      %v4579 = vsub.f32 0.0, %v4563
      %v4580 = vsub.f32 0.0, %v4564
      %v4581 = vsub.f32 0.0, %v4565
      %v4582 = vsub.f32 0.0, %v4566
      %v4583 = vsel %vm4567, %v4559, %v4575
      %v4584 = vsel %vm4568, %v4560, %v4576
      %v4585 = vsel %vm4569, %v4561, %v4577
      %v4586 = vsel %vm4570, %v4562, %v4578
      %v4587 = vsel %vm4571, %v4563, %v4579
      %v4588 = vsel %vm4572, %v4564, %v4580
      %v4589 = vsel %vm4573, %v4565, %v4581
      %v4590 = vsel %vm4574, %v4566, %v4582
      %v4591 = vadd.f32 %v4583, 1.0
      %v4592 = vadd.f32 %v4584, 1.0
      %v4593 = vadd.f32 %v4585, 1.0
      %v4594 = vadd.f32 %v4586, 1.0
      %v4595 = vadd.f32 %v4587, 1.0
      %v4596 = vadd.f32 %v4588, 1.0
      %v4597 = vadd.f32 %v4589, 1.0
      %v4598 = vadd.f32 %v4590, 1.0
      %v4599 = vmul.f32 %v4391, %v4591
      %v4600 = vmul.f32 %v4392, %v4592
      %v4601 = vmul.f32 %v4393, %v4593
      %v4602 = vmul.f32 %v4394, %v4594
      %v4603 = vmul.f32 %v4395, %v4595
      %v4604 = vmul.f32 %v4396, %v4596
      %v4605 = vmul.f32 %v4397, %v4597
      %v4606 = vmul.f32 %v4398, %v4598
      %v4607 = vld [vmem:[%s8] sm:$0xff]
      %v4608 = vld [vmem:[%s8 + $0x8] sm:$0xff]
      %v4609 = vld [vmem:[%s8 + $0x10] sm:$0xff]
      %v4610 = vld [vmem:[%s8 + $0x18] sm:$0xff]
      %v4611 = vld [vmem:[%s8 + $0x20] sm:$0xff]
      %v4612 = vld [vmem:[%s8 + $0x28] sm:$0xff]
      %v4613 = vld [vmem:[%s8 + $0x30] sm:$0xff]
      %v4614 = vld [vmem:[%s8 + $0x38] sm:$0xff]
      %v4615 = vld [vmem:[%s8 + $0x40] sm:$0xff]
      %v4616 = vld [vmem:[%s8 + $0x48] sm:$0xff]
      %v4617 = vld [vmem:[%s8 + $0x50] sm:$0xff]
      %v4618 = vld [vmem:[%s8 + $0x58] sm:$0xff]
      %v4619 = vld [vmem:[%s8 + $0x60] sm:$0xff]
      %v4620 = vld [vmem:[%s8 + $0x68] sm:$0xff]
      %v4621 = vld [vmem:[%s8 + $0x70] sm:$0xff]
      %v4622 = vld [vmem:[%s8 + $0x78] sm:$0xff]
      %v4623 = vld [vmem:[%s9] sm:$0x1]
      %v4625 = vlaneseq
      %v4626 = vshrl.u32 %v4625, 7
      %v4627 = vsub.s32 0, %v4626
      %v4628 = vrot.slane %v4623, %v4627
      %4630 = vmatprep.subr.mxu0 0.0
      %4631 = vmatpush1.msra.mxu0 %v4607
      %4632 = vmatprep.subr.mxu0 0.0
      %4633 = vmatpush1.msra.mxu0 %v4608
      %4634 = vmatprep.subr.mxu0 0.0
      %4635 = vmatpush1.msra.mxu0 %v4609
      %4636 = vmatprep.subr.mxu0 0.0
      %4637 = vmatpush1.msra.mxu0 %v4610
      %4638 = vmatprep.subr.mxu0 0.0
      %4639 = vmatpush1.msra.mxu0 %v4611
      %4640 = vmatprep.subr.mxu0 0.0
      %4641 = vmatpush1.msra.mxu0 %v4612
      %4642 = vmatprep.subr.mxu0 0.0
      %4643 = vmatpush1.msra.mxu0 %v4613
      %4644 = vmatprep.subr.mxu0 0.0
      %4645 = vmatpush1.msra.mxu0 %v4614
      %4646 = vmatprep.subr.mxu0 0.0
      %4647 = vmatpush1.msra.mxu0 %v4615
      %4648 = vmatprep.subr.mxu0 0.0
      %4649 = vmatpush1.msra.mxu0 %v4616
      %4650 = vmatprep.subr.mxu0 0.0
      %4651 = vmatpush1.msra.mxu0 %v4617
      %4652 = vmatprep.subr.mxu0 0.0
      %4653 = vmatpush1.msra.mxu0 %v4618
      %4654 = vmatprep.subr.mxu0 0.0
      %4655 = vmatpush1.msra.mxu0 %v4619
      %4656 = vmatprep.subr.mxu0 0.0
      %4657 = vmatpush1.msra.mxu0 %v4620
      %4658 = vmatprep.subr.mxu0 0.0
      %4659 = vmatpush1.msra.mxu0 %v4621
      %4660 = vmatprep.subr.mxu0 0.0
      %4661 = vmatpush1.msra.mxu0 %v4622
      %4662 = vmatprep.subr.mxu0 0.0
      %4663 = vmatpush1.msra.mxu0 0.0
      %4664 = vmatprep.subr.mxu0 0.0
      %4665 = vmatpush1.msra.mxu0 0.0
      %4666 = vmatprep.subr.mxu0 0.0
      %4667 = vmatpush1.msra.mxu0 0.0
      %4668 = vmatprep.subr.mxu0 0.0
      %4669 = vmatpush1.msra.mxu0 0.0
      %4670 = vmatprep.subr.mxu0 0.0
      %4671 = vmatpush1.msra.mxu0 0.0
      %4672 = vmatprep.subr.mxu0 0.0
      %4673 = vmatpush1.msra.mxu0 0.0
      %4674 = vmatprep.subr.mxu0 0.0
      %4675 = vmatpush1.msra.mxu0 0.0
      %4676 = vmatprep.subr.mxu0 0.0
      %4677 = vmatpush1.msra.mxu0 0.0
      %4678 = vmatprep.subr.mxu0 0.0
      %4679 = vmatpush1.msra.mxu0 0.0
      %4680 = vmatprep.subr.mxu0 0.0
      %4681 = vmatpush1.msra.mxu0 0.0
      %4682 = vmatprep.subr.mxu0 0.0
      %4683 = vmatpush1.msra.mxu0 0.0
      %4684 = vmatprep.subr.mxu0 0.0
      %4685 = vmatpush1.msra.mxu0 0.0
      %4686 = vmatprep.subr.mxu0 0.0
      %4687 = vmatpush1.msra.mxu0 0.0
      %4688 = vmatprep.subr.mxu0 0.0
      %4689 = vmatpush1.msra.mxu0 0.0
      %4690 = vmatprep.subr.mxu0 0.0
      %4691 = vmatpush1.msra.mxu0 0.0
      %4692 = vmatprep.subr.mxu0 0.0
      %4693 = vmatpush1.msra.mxu0 0.0
      %4694 = vmatprep.mubr.f32.mxu0 0.0
      %4695 = vmatmul.mubr.f32.gmra.mrb[0].mxu0 %v4599
      %v4696 = vpop.f32.mrb[0].mxu0
      %v4697 = vadd.f32 %v4628, %v4696
      %v4698 = vpop.f32.mrb[0].mxu0
      %4699 = vmatprep.mubr.f32.mxu0 0.0
      %4700 = vmatmul.mubr.f32.gmra.mrb[0].mxu0 %v4600
      %v4701 = vpop.f32.mrb[0].mxu0
      %v4702 = vadd.f32 %v4628, %v4701
      %v4703 = vpop.f32.mrb[0].mxu0
      %4704 = vmatprep.mubr.f32.mxu0 0.0
      %4705 = vmatmul.mubr.f32.gmra.mrb[0].mxu0 %v4601
      %v4706 = vpop.f32.mrb[0].mxu0
      %v4707 = vadd.f32 %v4628, %v4706
      %v4708 = vpop.f32.mrb[0].mxu0
      %4709 = vmatprep.mubr.f32.mxu0 0.0
      %4710 = vmatmul.mubr.f32.gmra.mrb[0].mxu0 %v4602
      %v4711 = vpop.f32.mrb[0].mxu0
      %v4712 = vadd.f32 %v4628, %v4711
      %v4713 = vpop.f32.mrb[0].mxu0
      %4714 = vmatprep.mubr.f32.mxu0 0.0
      %4715 = vmatmul.mubr.f32.gmra.mrb[0].mxu0 %v4603
      %v4716 = vpop.f32.mrb[0].mxu0
      %v4717 = vadd.f32 %v4628, %v4716
      %v4718 = vpop.f32.mrb[0].mxu0
      %4719 = vmatprep.mubr.f32.mxu0 0.0
      %4720 = vmatmul.mubr.f32.gmra.mrb[0].mxu0 %v4604
      %v4721 = vpop.f32.mrb[0].mxu0
      %v4722 = vadd.f32 %v4628, %v4721
      %v4723 = vpop.f32.mrb[0].mxu0
      %4724 = vmatprep.mubr.f32.mxu0 0.0
      %4725 = vmatmul.mubr.f32.gmra.mrb[0].mxu0 %v4605
      %v4726 = vpop.f32.mrb[0].mxu0
      %v4727 = vadd.f32 %v4628, %v4726
      %v4728 = vpop.f32.mrb[0].mxu0
      %4729 = vmatprep.mubr.f32.mxu0 0.0
      %4730 = vmatmul.mubr.f32.gmra.mrb[0].mxu0 %v4606
      %v4731 = vpop.f32.mrb[0].mxu0
      %v4732 = vadd.f32 %v4628, %v4731
      %v4733 = vpop.f32.mrb[0].mxu0
      %4734 = vdwg.mxu0
      %v4735 = vsel %vm379, %v4697, 0.0
      %4736 = vadd.xlane.f32.xlu0 %v4735
      %v4737 = vpop.xlane.xlu0 %4736
      %v4738 = vsel %vm379, %v4702, 0.0
      %4739 = vadd.xlane.f32.xlu0 %v4738
      %v4740 = vpop.xlane.xlu0 %4739
      %v4741 = vsel %vm379, %v4707, 0.0
      %4742 = vadd.xlane.f32.xlu0 %v4741
      %v4743 = vpop.xlane.xlu0 %4742
      %v4744 = vsel %vm379, %v4712, 0.0
      %4745 = vadd.xlane.f32.xlu0 %v4744
      %v4746 = vpop.xlane.xlu0 %4745
      %v4747 = vsel %vm379, %v4717, 0.0
      %4748 = vadd.xlane.f32.xlu0 %v4747
      %v4749 = vpop.xlane.xlu0 %4748
      %v4750 = vsel %vm379, %v4722, 0.0
      %4751 = vadd.xlane.f32.xlu0 %v4750
      %v4752 = vpop.xlane.xlu0 %4751
      %v4753 = vsel %vm379, %v4727, 0.0
      %4754 = vadd.xlane.f32.xlu0 %v4753
      %v4755 = vpop.xlane.xlu0 %4754
      %v4756 = vsel %vm379, %v4732, 0.0
      %4757 = vadd.xlane.f32.xlu0 %v4756
      %v4758 = vpop.xlane.xlu0 %4757
      %v4759 = vmul.f32 %v4737, %v4134
      %v4760 = vmul.f32 %v4740, %v4134
      %v4761 = vmul.f32 %v4743, %v4134
      %v4762 = vmul.f32 %v4746, %v4134
      %v4763 = vmul.f32 %v4749, %v4134
      %v4764 = vmul.f32 %v4752, %v4134
      %v4765 = vmul.f32 %v4755, %v4134
      %v4766 = vmul.f32 %v4758, %v4134
      %v4767 = vsub.f32 %v4697, %v4759
      %v4768 = vsub.f32 %v4702, %v4760
      %v4769 = vsub.f32 %v4707, %v4761
      %v4770 = vsub.f32 %v4712, %v4762
      %v4771 = vsub.f32 %v4717, %v4763
      %v4772 = vsub.f32 %v4722, %v4764
      %v4773 = vsub.f32 %v4727, %v4765
      %v4774 = vsub.f32 %v4732, %v4766
      %v4775 = vmul.f32 %v4767, %v4767
      %v4776 = vmul.f32 %v4768, %v4768
      %v4777 = vmul.f32 %v4769, %v4769
      %v4778 = vmul.f32 %v4770, %v4770
      %v4779 = vmul.f32 %v4771, %v4771
      %v4780 = vmul.f32 %v4772, %v4772
      %v4781 = vmul.f32 %v4773, %v4773
      %v4782 = vmul.f32 %v4774, %v4774
      %v4783 = vsel %vm379, %v4775, 0.0
      %4784 = vadd.xlane.f32.xlu0 %v4783
      %v4785 = vpop.xlane.xlu0 %4784
      %v4786 = vsel %vm379, %v4776, 0.0
      %4787 = vadd.xlane.f32.xlu0 %v4786
      %v4788 = vpop.xlane.xlu0 %4787
      %v4789 = vsel %vm379, %v4777, 0.0
      %4790 = vadd.xlane.f32.xlu0 %v4789
      %v4791 = vpop.xlane.xlu0 %4790
      %v4792 = vsel %vm379, %v4778, 0.0
      %4793 = vadd.xlane.f32.xlu0 %v4792
      %v4794 = vpop.xlane.xlu0 %4793
      %v4795 = vsel %vm379, %v4779, 0.0
      %4796 = vadd.xlane.f32.xlu0 %v4795
      %v4797 = vpop.xlane.xlu0 %4796
      %v4798 = vsel %vm379, %v4780, 0.0
      %4799 = vadd.xlane.f32.xlu0 %v4798
      %v4800 = vpop.xlane.xlu0 %4799
      %v4801 = vsel %vm379, %v4781, 0.0
      %4802 = vadd.xlane.f32.xlu0 %v4801
      %v4803 = vpop.xlane.xlu0 %4802
      %v4804 = vsel %vm379, %v4782, 0.0
      %4805 = vadd.xlane.f32.xlu0 %v4804
      %v4806 = vpop.xlane.xlu0 %4805
      %v4807 = vmul.f32 %v4785, %v4134
      %v4808 = vmul.f32 %v4788, %v4134
      %v4809 = vmul.f32 %v4791, %v4134
      %v4810 = vmul.f32 %v4794, %v4134
      %v4811 = vmul.f32 %v4797, %v4134
      %v4812 = vmul.f32 %v4800, %v4134
      %v4813 = vmul.f32 %v4803, %v4134
      %v4814 = vmul.f32 %v4806, %v4134
      %v4815 = vadd.f32 %v4807, 1e-06
      %v4816 = vadd.f32 %v4808, 1e-06
      %v4817 = vadd.f32 %v4809, 1e-06
      %v4818 = vadd.f32 %v4810, 1e-06
      %v4819 = vadd.f32 %v4811, 1e-06
      %v4820 = vadd.f32 %v4812, 1e-06
      %v4821 = vadd.f32 %v4813, 1e-06
      %v4822 = vadd.f32 %v4814, 1e-06
      %v4823 = vrsqrt.pop %v4815
      %v4824 = vrsqrt.pop %v4816
      %v4825 = vrsqrt.pop %v4817
      %v4826 = vrsqrt.pop %v4818
      %v4827 = vrsqrt.pop %v4819
      %v4828 = vrsqrt.pop %v4820
      %v4829 = vrsqrt.pop %v4821
      %v4830 = vrsqrt.pop %v4822
      %v4831 = vmul.f32 %v4767, %v4823
      %v4832 = vmul.f32 %v4768, %v4824
      %v4833 = vmul.f32 %v4769, %v4825
      %v4834 = vmul.f32 %v4770, %v4826
      %v4835 = vmul.f32 %v4771, %v4827
      %v4836 = vmul.f32 %v4772, %v4828
      %v4837 = vmul.f32 %v4773, %v4829
      %v4838 = vmul.f32 %v4774, %v4830
      %v4839 = vmul.f32 %v4831, %v4219
      %v4840 = vmul.f32 %v4832, %v4219
      %v4841 = vmul.f32 %v4833, %v4219
      %v4842 = vmul.f32 %v4834, %v4219
      %v4843 = vmul.f32 %v4835, %v4219
      %v4844 = vmul.f32 %v4836, %v4219
      %v4845 = vmul.f32 %v4837, %v4219
      %v4846 = vmul.f32 %v4838, %v4219
      %v4847 = vadd.f32 %v4839, %v4233
      %v4848 = vadd.f32 %v4840, %v4233
      %v4849 = vadd.f32 %v4841, %v4233
      %v4850 = vadd.f32 %v4842, %v4233
      %v4851 = vadd.f32 %v4843, %v4233
      %v4852 = vadd.f32 %v4844, %v4233
      %v4853 = vadd.f32 %v4845, %v4233
      %v4854 = vadd.f32 %v4846, %v4233
      %v4855 = vadd.f32 %v4243, %v4847
      %v4856 = vadd.f32 %v4244, %v4848
      %v4857 = vadd.f32 %v4245, %v4849
      %v4858 = vadd.f32 %v4246, %v4850
      %v4859 = vadd.f32 %v4247, %v4851
      %v4860 = vadd.f32 %v4248, %v4852
      %v4861 = vadd.f32 %v4249, %v4853
      %v4862 = vadd.f32 %v4250, %v4854
      %4863 = vst.msk [vmem:[%s359] sm:$0xff] %vm379, %v4855
      %4864 = vst.msk [vmem:[%s359 + $0x8] sm:$0xff] %vm379, %v4856
      %4865 = vst.msk [vmem:[%s359 + $0x10] sm:$0xff] %vm379, %v4857
      %4866 = vst.msk [vmem:[%s359 + $0x18] sm:$0xff] %vm379, %v4858
      %4867 = vst.msk [vmem:[%s359 + $0x20] sm:$0xff] %vm379, %v4859
      %4868 = vst.msk [vmem:[%s359 + $0x28] sm:$0xff] %vm379, %v4860
      %4869 = vst.msk [vmem:[%s359 + $0x30] sm:$0xff] %vm379, %v4861
      %4870 = vst.msk [vmem:[%s359 + $0x38] sm:$0xff] %vm379, %v4862
      %p4871 = scmp.lt.s32.totalorder %s21, 1
      %s4872 = scalar_select %p4871, %s21, 1
      %s4873 = smul.addr %s4872, 8
      %s4874 = smul.addr %s4873, 8
      %s4875 = scalar_lea.vmem %s10, %s4874
      // Predicated region
      $region61: #{_lambda_.4} parent=59 // pred_check
        %p4876 = pneg %p254
      $region62: #{_lambda_.4} parent=59 // pred_check_branch
        %4878 = sbr.rel (%p4876) target = $region64
      $region63: #{_lambda_.4} parent=59 // pred_region
        _
      $region64: #{_lambda_.4} parent=59 // pred_fallthru
        _
    $region60: #{_lambda_.4} parent=5 // pred_fallthru
      _
    %p4879 = scmp.le.s32.totalorder 2, %s16
    // Predicated region
    $region65: #{_lambda_.4} parent=5 // pred_check
      %p4880 = pneg %p4879
    $region66: #{_lambda_.4} parent=5 // pred_check_branch
      %4882 = sbr.rel (%p4880) target = $region68
    $region67: #{_lambda_.4} parent=5 // pred_region
      %s4883 = ssub.s32 %s16, 2
      // Predicated region
      $region69: #{_lambda_.4} parent=67 // pred_check
        %p4884 = pneg %p260
      $region70: #{_lambda_.4} parent=67 // pred_check_branch
        %4886 = sbr.rel (%p4884) target = $region72
      $region71: #{_lambda_.4} parent=67 // pred_region
        %p4887 = scmp.lt.s32.totalorder %s22, 1
        %s4888 = scalar_select %p4887, %s22, 1
        %s4889 = smul.addr %s4888, 8
        %s4890 = smul.addr %s4889, 8
        %s4891 = scalar_lea.vmem %s10, %s4890
      $region72: #{_lambda_.4} parent=67 // pred_fallthru
        _
    $region68: #{_lambda_.4} parent=5 // pred_fallthru
      _
  $region6: #{_lambda_.4} parent=0 // loop_footer
    %s20 = sadd.s32 1, %s16
  $region7: #{_lambda_.4} parent=0 // loop_footer_branch
    %15 = sbr.rel target = $region3
  $region8: #{_lambda_.4} parent=0 // loop_exit
    _

</llo_original>
